<compile_context>
chip_gen: v7x
topology: tpu7x:2x2x1
jax: 0.10.0
libtpu: 0.0.40
codegen_flags: <defaults>
</compile_context>

<pallas_src>
import jax
import jax.numpy as jnp
from jax.experimental import pallas as pl
from jax.experimental.pallas import tpu as pltpu


# ---------------------------------------------------------------------------
# Tiling / budget constants
# ---------------------------------------------------------------------------

_LANE = 128                 # lane width; keeps MXU tiles aligned on v5e/v6e/v7x
_BN_EPS = 1e-5
_TM_MAX = 1024              # max rows per M-tile
_VMEM_CAP = 56 << 20        # stay well under v7x's 64 MiB physical VMEM
_PALLAS_MIN_M = 128         # below this, plain XLA is cheaper than a kernel launch


def _round_up(x, m):
    return (x + m - 1) // m * m


def _pick_tm(m, k, c_pad):
    """Largest tile (<= _TM_MAX) that divides M and fits the VMEM budget.
    Returns 0 if no suitable tile exists (caller falls back to plain XLA)."""
    tm = 0
    for cand in (16, 32, 64, 128, 256, 512, 1024):
        if cand <= _TM_MAX and m % cand == 0:
            # double-buffered bf16 X tile + bf16 weights + f32 Y tiles
            need = 2 * (cand * k * 2) + 2 * (k * c_pad * 2) + 4 * (cand * c_pad * 4)
            if need + (8 << 20) <= _VMEM_CAP:
                tm = cand
    return tm


def _vmem_limit(tm, k, c_pad):
    need = 2 * (tm * k * 2) + 2 * (k * c_pad * 2) + 4 * (tm * c_pad * 4) + (4 << 20)
    return int(min(max(_round_up(need, 1 << 20), 32 << 20), _VMEM_CAP))


def _pad_lanes(a, c_pad):
    c = a.shape[-1]
    if c == c_pad:
        return a
    pad = [(0, 0)] * (a.ndim - 1) + [(0, c_pad - c)]
    return jnp.pad(a, pad)


# ---------------------------------------------------------------------------
# Pallas kernels
# ---------------------------------------------------------------------------

def _matmul_stats_kernel(x_ref, w_ref, y_ref, stats_ref):
    # X-tile (TM, K) @ W (K, C_pad) on the MXU, f32 accumulation.
    y = jnp.dot(x_ref[...], w_ref[...], preferred_element_type=jnp.float32)
    y_ref[...] = y
    # Per-tile partial BatchNorm statistics; summed over the full output axis
    # outside the kernel so the BN math matches PyTorch training mode.
    s = jnp.sum(y, axis=0, keepdims=True)           # (1, C_pad)
    ss = jnp.sum(y * y, axis=0, keepdims=True)      # (1, C_pad)
    stats_ref[...] = jnp.concatenate([s, ss], axis=0)[None, :, :]


def _bn_relu_kernel(y_ref, scale_ref, shift_ref, o_ref):
    # y * (gamma * rsqrt(var+eps)) + (beta - mean * scale), then ReLU -> bf16.
    o_ref[...] = jnp.maximum(y_ref[...] * scale_ref[...] + shift_ref[...],
                             0.0).astype(o_ref.dtype)


def _bias_tanh_kernel(x_ref, w_ref, b_ref, o_ref):
    y = jnp.dot(x_ref[...], w_ref[...], preferred_element_type=jnp.float32)
    o_ref[...] = jnp.tanh(y + b_ref[...])


# ---------------------------------------------------------------------------
# Kernel wrappers (with plain-XLA fallbacks for tiny / misaligned shapes)
# ---------------------------------------------------------------------------

def matmul_stats(x_bf, w_bf):
    """(M,K)bf16 @ (K,C_pad)bf16 -> y (M,C_pad) f32 and (sum, sumsq) over M."""
    m, k = x_bf.shape
    c_pad = w_bf.shape[1]
    tm = _pick_tm(m, k, c_pad)
    if m < _PALLAS_MIN_M or tm == 0:
        y = jnp.dot(x_bf, w_bf, preferred_element_type=jnp.float32)
        return y, jnp.stack([y.sum(0), (y * y).sum(0)])
    n_tiles = m // tm
    y, stats = pl.pallas_call(
        _matmul_stats_kernel,
        out_shape=(jax.ShapeDtypeStruct((m, c_pad), jnp.float32),
                   jax.ShapeDtypeStruct((n_tiles, 2, c_pad), jnp.float32)),
        grid=(n_tiles,),
        in_specs=[pl.BlockSpec((tm, k), lambda i: (i, 0)),
                  pl.BlockSpec((k, c_pad), lambda i: (0, 0))],
        out_specs=(pl.BlockSpec((tm, c_pad), lambda i: (i, 0)),
                   pl.BlockSpec((1, 2, c_pad), lambda i: (i, 0, 0))),
        compiler_params=pltpu.CompilerParams(
            dimension_semantics=("parallel",),
            vmem_limit_bytes=_vmem_limit(tm, k, c_pad)),
    )(x_bf, w_bf)
    return y, stats.sum(axis=0)


def bn_relu_apply(y, scale, shift):
    """y (M,C_pad) f32 -> per-channel affine + ReLU, stored as bf16."""
    m, c_pad = y.shape
    tm = _pick_tm(m, c_pad, c_pad)
    if m < _PALLAS_MIN_M or tm == 0:
        return jnp.maximum(y * scale + shift, 0.0).astype(jnp.bfloat16)
    n_tiles = m // tm
    return pl.pallas_call(
        _bn_relu_kernel,
        out_shape=jax.ShapeDtypeStruct((m, c_pad), jnp.bfloat16),
        grid=(n_tiles,),
        in_specs=[pl.BlockSpec((tm, c_pad), lambda i: (i, 0)),
                  pl.BlockSpec((1, c_pad), lambda i: (0, 0)),
                  pl.BlockSpec((1, c_pad), lambda i: (0, 0))],
        out_specs=pl.BlockSpec((tm, c_pad), lambda i: (i, 0)),
        compiler_params=pltpu.CompilerParams(
            dimension_semantics=("parallel",),
            vmem_limit_bytes=_vmem_limit(tm, c_pad, c_pad)),
    )(y, scale, shift)


def matmul_bias_tanh(x_bf, w_bf, b_pad):
    """(M,K)bf16 @ (K,C_pad)bf16 + bias -> tanh (f32), fused in one kernel."""
    m, k = x_bf.shape
    c_pad = w_bf.shape[1]
    tm = _pick_tm(m, k, c_pad)
    if m < _PALLAS_MIN_M or tm == 0:
        y = jnp.dot(x_bf, w_bf, preferred_element_type=jnp.float32)
        return jnp.tanh(y + b_pad)
    n_tiles = m // tm
    return pl.pallas_call(
        _bias_tanh_kernel,
        out_shape=jax.ShapeDtypeStruct((m, c_pad), jnp.float32),
        grid=(n_tiles,),
        in_specs=[pl.BlockSpec((tm, k), lambda i: (i, 0)),
                  pl.BlockSpec((k, c_pad), lambda i: (0, 0)),
                  pl.BlockSpec((1, c_pad), lambda i: (0, 0))],
        out_specs=pl.BlockSpec((tm, c_pad), lambda i: (i, 0)),
        compiler_params=pltpu.CompilerParams(
            dimension_semantics=("parallel",),
            vmem_limit_bytes=_vmem_limit(tm, k, c_pad)),
    )(x_bf, w_bf, b_pad)


# ---------------------------------------------------------------------------
# ConvTranspose2d lowering glue (pure slicing / layout, no compute)
# ---------------------------------------------------------------------------

def _convt_im2col(x_nhwc, k, stride, padding):
    """Generic path: zero-insert upsample + pad + im2col for a stride-1 conv
    with the flipped kernel.  Used for the (4,1,0) first layer and as the
    independent plain-XLA reference."""
    n, h, w, c = x_nhwc.shape
    h_out = (h - 1) * stride - 2 * padding + k
    w_out = (w - 1) * stride - 2 * padding + k
    up_h = (h - 1) * stride + 1
    up_w = (w - 1) * stride + 1
    up = jnp.zeros((n, up_h, up_w, c), x_nhwc.dtype)
    up = up.at[:, ::stride, ::stride, :].set(x_nhwc)
    pad = k - 1 - padding
    up = jnp.pad(up, ((0, 0), (pad, pad), (pad, pad), (0, 0)))
    patches = [up[:, dy:dy + h_out, dx:dx + w_out, :]
               for dy in range(k) for dx in range(k)]
    X = jnp.stack(patches, axis=3)                       # (N, Ho, Wo, k*k, C)
    X = X.reshape(n * h_out * w_out, k * k * c)
    return X, (n, h_out, w_out)


def _convt_weight_to_matrix(w):
    """PyTorch ConvTranspose2d weight (C_in, C_out, kH, kW) -> (kH*kW*C_in,
    C_out) for the equivalent stride-1 conv with the flipped kernel."""
    c_in, c_out, kh, kw = w.shape
    w_flip = w[:, :, ::-1, ::-1]
    return jnp.transpose(w_flip, (2, 3, 0, 1)).reshape(kh * kw * c_in, c_out)


# Parity decomposition for k=4, stride=2, padding=1:
#   out[2m+a, 2n+b] = sum over 2x2 sub-kernel taps of x[m+dy, n+dx] @ W[ky,kx]
# parity -> ((input offset, kernel tap index), ...), derived from
#   out[ho] = sum_i x[i] * w[ho - 2*i + 1].
_TAPS = {0: ((0, 1), (-1, 3)), 1: ((1, 0), (0, 2))}


def _convt_s2_classes(x_nhwc, w):
    """Return the 4 parity-class (X_mat, W_mat) matmuls and (N, H, W)."""
    n, h, wd, c = x_nhwc.shape
    xp = jnp.pad(x_nhwc, ((0, 0), (1, 1), (1, 1), (0, 0)))
    classes = []
    for a in (0, 1):
        for b in (0, 1):
            xs, ws = [], []
            for dy, ky in _TAPS[a]:
                for dx, kx in _TAPS[b]:
                    xs.append(xp[:, 1 + dy:1 + dy + h, 1 + dx:1 + dx + wd, :])
                    ws.append(w[:, :, ky, kx])                  # (C_in, C_out)
            X = jnp.stack(xs, axis=3).reshape(n * h * wd, 4 * c)
            Wm = jnp.stack(ws, axis=0).reshape(4 * c, -1)
            classes.append((X, Wm))
    return classes, (n, h, wd)


def _assemble_s2(ys, n, h, w, c_out):
    """Interleave the 4 parity-class outputs ((a,b) order) -> (N, 2H, 2W, C)."""
    y = jnp.stack([cls.reshape(n, h, w, c_out) for cls in ys], axis=0)
    y = y.reshape(2, 2, n, h, w, c_out)
    y = jnp.transpose(y, (2, 3, 0, 4, 1, 5))                 # (N, H, 2, W, 2, C)
    return y.reshape(n, 2 * h, 2 * w, c_out)


# ---------------------------------------------------------------------------
# Layer functions (Pallas path)
# ---------------------------------------------------------------------------

def convt_bn_relu(x, w, gamma, beta, cfg):
    """ConvTranspose2d (bias=False) -> BatchNorm2d (training stats) -> ReLU."""
    k, s, p = cfg
    c_out = w.shape[1]
    c_pad = _round_up(c_out, _LANE)

    decomposed = (k, s, p) == (4, 2, 1)
    if decomposed:
        classes, (n, h, wd) = _convt_s2_classes(x, w)
        m_total = n * (2 * h) * (2 * wd)
    else:
        X, (n, ho, wo) = _convt_im2col(x, k, s, p)
        classes = [(X, _convt_weight_to_matrix(w))]
        m_total = n * ho * wo

    # Pass 1: matmul per class, plus partial (sum, sumsq) over its rows.
    ys, stats = [], []
    for X, Wm in classes:
        y, st = matmul_stats(X.astype(jnp.bfloat16),
                             _pad_lanes(Wm, c_pad).astype(jnp.bfloat16))
        ys.append(y)
        stats.append(st)

    # Combine partials into full-batch statistics (biased var over N*Ho*Wo,
    # eps=1e-5 -> identical to PyTorch BN training-mode forward).
    total = stats[0]
    for st in stats[1:]:
        total = total + st
    mean = total[0] / m_total
    var = jnp.maximum(total[1] / m_total - mean * mean, 0.0)
    inv_std = jax.lax.rsqrt(var + _BN_EPS)
    scale = (_pad_lanes(gamma.reshape(1, -1), c_pad) * inv_std[None, :]
             ).astype(jnp.float32)
    shift = (_pad_lanes(beta.reshape(1, -1), c_pad) - mean[None, :] * scale
             ).astype(jnp.float32)

    # Pass 2: normalize + ReLU, bf16 activations.
    acts = [bn_relu_apply(y, scale, shift)[:, :c_out] for y in ys]
    if decomposed:
        return _assemble_s2(acts, n, h, wd, c_out)
    return acts[0].reshape(n, ho, wo, c_out)


def convt_bias_tanh(x, w, bias, cfg):
    """ConvTranspose2d (with bias) -> Tanh."""
    k, s, p = cfg
    c_out = w.shape[1]
    c_pad = _round_up(c_out, _LANE)
    b_pad = _pad_lanes(bias.reshape(1, -1), c_pad).astype(jnp.float32)

    if (k, s, p) == (4, 2, 1):
        classes, (n, h, wd) = _convt_s2_classes(x, w)
        ys = [matmul_bias_tanh(X.astype(jnp.bfloat16),
                               _pad_lanes(Wm, c_pad).astype(jnp.bfloat16),
                               b_pad)[:, :c_out]
              for X, Wm in classes]
        return _assemble_s2(ys, n, h, wd, c_out)

    X, (n, ho, wo) = _convt_im2col(x, k, s, p)
    w_bf = _pad_lanes(_convt_weight_to_matrix(w), c_pad).astype(jnp.bfloat16)
    y = matmul_bias_tanh(X.astype(jnp.bfloat16), w_bf, b_pad)
    return y[:, :c_out].reshape(n, ho, wo, c_out)


# ---------------------------------------------------------------------------
# Plain-jnp reference (independent math: whole-layer im2col, f32 intermediates)
# ---------------------------------------------------------------------------

def _ref_bn_relu(x_mat, w_mat, gamma, beta):
    y = jnp.dot(x_mat.astype(jnp.bfloat16), w_mat.astype(jnp.bfloat16),
                preferred_element_type=jnp.float32)
    mean = y.mean(0, keepdims=True)
    var = jnp.maximum((y * y).mean(0, keepdims=True) - mean * mean, 0.0)
    return jnp.maximum((y - mean) * jax.lax.rsqrt(var + _BN_EPS)
                       * gamma.reshape(1, -1) + beta.reshape(1, -1), 0.0)


def _ref_bias_tanh(x_mat, w_mat, bias):
    y = jnp.dot(x_mat.astype(jnp.bfloat16), w_mat.astype(jnp.bfloat16),
                preferred_element_type=jnp.float32)
    return jnp.tanh(y + bias.reshape(1, -1))


# ---------------------------------------------------------------------------
# Generator
# ---------------------------------------------------------------------------

_BLOCK_CFGS = [(4, 1, 0), (4, 2, 1), (4, 2, 1), (4, 2, 1)]   # (k, stride, pad)
_FINAL_CFG = (4, 2, 1)


def init_generator_params(key, z_dim, channels_img, features_g):
    dims = [z_dim, features_g * 16, features_g * 8, features_g * 4, features_g * 2]
    keys = jax.random.split(key, 6)
    blocks = []
    for i in range(4):
        c_in, c_out = dims[i], dims[i + 1]
        w = 0.02 * jax.random.normal(keys[i], (c_in, c_out, 4, 4), jnp.float32)
        blocks.append({
            "w": w,
            "gamma": jnp.ones((1, c_out), jnp.float32),   # BN default init
            "beta": jnp.zeros((1, c_out), jnp.float32),
        })
    w_f = 0.02 * jax.random.normal(keys[4], (dims[4], channels_img, 4, 4), jnp.float32)
    b_f = 0.01 * jax.random.normal(keys[5], (1, channels_img), jnp.float32)
    return {"blocks": blocks, "final": {"w": w_f, "b": b_f}}


def generator_forward(x_nchw, params, *, use_pallas=True):
    """x_nchw: (N, z_dim, 1, 1) -> (N, channels_img, 64, 64)."""
    x = jnp.transpose(x_nchw, (0, 2, 3, 1)).astype(jnp.float32)   # NCHW -> NHWC

    if not use_pallas:
        # Independent plain-XLA reference of the same forward pass.
        for cfg, layer in zip(_BLOCK_CFGS, params["blocks"]):
            X, (n, ho, wo) = _convt_im2col(x, *cfg)
            y = _ref_bn_relu(X, _convt_weight_to_matrix(layer["w"]),
                             layer["gamma"], layer["beta"])
            x = y.reshape(n, ho, wo, -1)
        X, (n, ho, wo) = _convt_im2col(x, *_FINAL_CFG)
        y = _ref_bias_tanh(X, _convt_weight_to_matrix(params["final"]["w"]),
                           params["final"]["b"])
        x = y.reshape(n, ho, wo, -1)
        return jnp.transpose(x, (0, 3, 1, 2))

    # Pallas path: bf16 activations between layers (the matmuls consume bf16
    # anyway, so this is numerically identical downstream).
    x = x.astype(jnp.bfloat16)
    for cfg, layer in zip(_BLOCK_CFGS, params["blocks"]):
        x = convt_bn_relu(x, layer["w"], layer["gamma"], layer["beta"], cfg)
    x = convt_bias_tanh(x, params["final"]["w"], params["final"]["b"], _FINAL_CFG)
    return jnp.transpose(x, (0, 3, 1, 2)).astype(jnp.float32)     # NHWC -> NCHW


# ---------------------------------------------------------------------------

if __name__ == "__main__":
    Z_DIM, CHANNELS_IMG, FEATURES_G, BATCH = 8, 3, 8, 2

    key = jax.random.PRNGKey(0)
    k_param, k_x = jax.random.split(key)
    params = init_generator_params(k_param, Z_DIM, CHANNELS_IMG, FEATURES_G)
    x = jax.random.normal(k_x, (BATCH, Z_DIM, 1, 1), jnp.float32)

    fwd = jax.jit(lambda x, p: generator_forward(x, p, use_pallas=True))
    out = jax.block_until_ready(fwd(x, params))

    assert out.shape == (BATCH, CHANNELS_IMG, 64, 64), out.shape
    assert bool(jnp.all(jnp.isfinite(out)))

    # Cross-check the Pallas path (parity-decomposed convs, tiled kernels,
    # partial-sum BN stats) against an independent pure-jnp reference.
    ref = jax.block_until_ready(
        jax.jit(lambda x, p: generator_forward(x, p, use_pallas=False))(x, params))
    assert bool(jnp.allclose(out, ref, atol=1e-2, rtol=1e-2)), (
        float(jnp.max(jnp.abs(out - ref))))

    # TODO(synk): stream the 4 parity taps straight from the NHWC activation
    # via a reduction grid axis inside the matmul kernel instead of
    # materializing the per-class im2col matrices in HBM.
    print("KERNEL_OK")
</pallas_src>

<mosaic_0001>
module attributes {stable_mosaic.version = 11 : i64} {
  func.func @_matmul_stats_kernel(%arg0: i32, %arg1: memref<128x256xbf16, #tpu.memory_space<vmem>>, %arg2: memref<256x128xbf16, #tpu.memory_space<vmem>>, %arg3: memref<128x128xf32, #tpu.memory_space<vmem>>, %arg4: memref<1x2x128xf32, #tpu.memory_space<vmem>>) attributes {dimension_semantics = [#tpu.dimension_semantics<parallel>], iteration_bounds = array<i64: 1>, scalar_prefetch = 0 : i64, scratch_operands = 0 : i64, tpu.core_type = #tpu.core_type<tc>, window_params = [{transform_indices = @transform_0, window_bounds = array<i64: 128, 256>}, {pipeline_mode = #tpu.pipeline_mode<synchronous>, transform_indices = @transform_1, window_bounds = array<i64: 256, 128>}, {transform_indices = @transform_2, window_bounds = array<i64: 128, 128>}, {transform_indices = @transform_3, window_bounds = array<i64: 1, 2, 128>}]} {
    %c0 = arith.constant 0 : index
    %c0_0 = arith.constant 0 : index
    %0 = vector.load %arg1[%c0, %c0_0] : memref<128x256xbf16, #tpu.memory_space<vmem>>, vector<128x256xbf16>
    %c0_1 = arith.constant 0 : index
    %c0_2 = arith.constant 0 : index
    %1 = vector.load %arg2[%c0_1, %c0_2] : memref<256x128xbf16, #tpu.memory_space<vmem>>, vector<256x128xbf16>
    %cst = arith.constant dense<0.000000e+00> : vector<128x128xf32>
    %2 = tpu.matmul %0, %1, %cst {dimension_numbers = #tpu.dot_dimension_numbers<[1], [0], [0], [1], [0, 0, 1, 1], [], []>} : vector<128x256xbf16>, vector<256x128xbf16>, vector<128x128xf32> -> vector<128x128xf32>
    %c0_3 = arith.constant 0 : index
    %c0_4 = arith.constant 0 : index
    %3 = vector.load %arg3[%c0_3, %c0_4] : memref<128x128xf32, #tpu.memory_space<vmem>>, vector<128x128xf32>
    tpu.vector_store %arg3[%c0_3, %c0_4], %2 {strides = array<i32>} : memref<128x128xf32, #tpu.memory_space<vmem>>, vector<128x128xf32>,
    %cst_5 = arith.constant dense<0.000000e+00> : vector<128xf32>
    %4 = vector.multi_reduction <add>, %2, %cst_5 [0] : vector<128x128xf32> to vector<128xf32>
    %5 = vector.shape_cast %4 : vector<128xf32> to vector<1x128xf32>
    %6 = arith.mulf %2, %2 : vector<128x128xf32>
    %cst_6 = arith.constant dense<0.000000e+00> : vector<128xf32>
    %7 = vector.multi_reduction <add>, %6, %cst_6 [0] : vector<128x128xf32> to vector<128xf32>
    %8 = vector.shape_cast %7 : vector<128xf32> to vector<1x128xf32>
    %9 = tpu.concatenate %5, %8 in 0 : vector<1x128xf32>, vector<1x128xf32> -> vector<2x128xf32>
    %10 = vector.shape_cast %9 : vector<2x128xf32> to vector<1x2x128xf32>
    %c0_7 = arith.constant 0 : index
    %c0_8 = arith.constant 0 : index
    %c0_9 = arith.constant 0 : index
    %11 = vector.load %arg4[%c0_7, %c0_8, %c0_9] : memref<1x2x128xf32, #tpu.memory_space<vmem>>, vector<1x2x128xf32>
    tpu.vector_store %arg4[%c0_7, %c0_8, %c0_9], %10 {strides = array<i32>} : memref<1x2x128xf32, #tpu.memory_space<vmem>>, vector<1x2x128xf32>,
    return
  }
  func.func @transform_0(%arg0: i32) -> (i32, i32) {
    %c0_i32 = arith.constant 0 : i32
    %c0_i32_0 = arith.constant 0 : i32
    return %arg0, %c0_i32 : i32, i32
  }
  func.func @transform_1(%arg0: i32) -> (i32, i32) {
    %c0_i32 = arith.constant 0 : i32
    %c0_i32_0 = arith.constant 0 : i32
    %c0_i32_1 = arith.constant 0 : i32
    return %c0_i32, %c0_i32_0 : i32, i32
  }
  func.func @transform_2(%arg0: i32) -> (i32, i32) {
    %c0_i32 = arith.constant 0 : i32
    %c0_i32_0 = arith.constant 0 : i32
    return %arg0, %c0_i32 : i32, i32
  }
  func.func @transform_3(%arg0: i32) -> (i32, i32, i32) {
    %c0_i32 = arith.constant 0 : i32
    %c0_i32_0 = arith.constant 0 : i32
    %c0_i32_1 = arith.constant 0 : i32
    return %arg0, %c0_i32, %c0_i32_0 : i32, i32, i32
  }
}

module attributes {stable_mosaic.version = 11 : i64} {
  func.func @_bn_relu_kernel(%arg0: i32, %arg1: memref<128x128xf32, #tpu.memory_space<vmem>>, %arg2: memref<1x128xf32, #tpu.memory_space<vmem>>, %arg3: memref<1x128xf32, #tpu.memory_space<vmem>>, %arg4: memref<128x128xbf16, #tpu.memory_space<vmem>>) attributes {dimension_semantics = [#tpu.dimension_semantics<parallel>], iteration_bounds = array<i64: 1>, scalar_prefetch = 0 : i64, scratch_operands = 0 : i64, tpu.core_type = #tpu.core_type<tc>, window_params = [{transform_indices = @transform_0, window_bounds = array<i64: 128, 128>}, {pipeline_mode = #tpu.pipeline_mode<synchronous>, transform_indices = @transform_1, window_bounds = array<i64: 1, 128>}, {pipeline_mode = #tpu.pipeline_mode<synchronous>, transform_indices = @transform_2, window_bounds = array<i64: 1, 128>}, {transform_indices = @transform_3, window_bounds = array<i64: 128, 128>}]} {
    %c0 = arith.constant 0 : index
    %c0_0 = arith.constant 0 : index
    %0 = vector.load %arg1[%c0, %c0_0] : memref<128x128xf32, #tpu.memory_space<vmem>>, vector<128x128xf32>
    %c0_1 = arith.constant 0 : index
    %c0_2 = arith.constant 0 : index
    %1 = vector.load %arg2[%c0_1, %c0_2] : memref<1x128xf32, #tpu.memory_space<vmem>>, vector<1x128xf32>
    %2 = vector.broadcast %1 : vector<1x128xf32> to vector<128x128xf32>
    %3 = arith.mulf %0, %2 : vector<128x128xf32>
    %c0_3 = arith.constant 0 : index
    %c0_4 = arith.constant 0 : index
    %4 = vector.load %arg3[%c0_3, %c0_4] : memref<1x128xf32, #tpu.memory_space<vmem>>, vector<1x128xf32>
    %5 = vector.broadcast %4 : vector<1x128xf32> to vector<128x128xf32>
    %6 = arith.addf %3, %5 : vector<128x128xf32>
    %cst = arith.constant 0.000000e+00 : f32
    %7 = vector.broadcast %cst : f32 to vector<128x128xf32>
    %8 = arith.maximumf %6, %7 : vector<128x128xf32>
    %9 = arith.truncf %8 : vector<128x128xf32> to vector<128x128xbf16>
    %c0_5 = arith.constant 0 : index
    %c0_6 = arith.constant 0 : index
    %10 = vector.load %arg4[%c0_5, %c0_6] : memref<128x128xbf16, #tpu.memory_space<vmem>>, vector<128x128xbf16>
    tpu.vector_store %arg4[%c0_5, %c0_6], %9 {strides = array<i32>} : memref<128x128xbf16, #tpu.memory_space<vmem>>, vector<128x128xbf16>,
    return
  }
  func.func @transform_0(%arg0: i32) -> (i32, i32) {
    %c0_i32 = arith.constant 0 : i32
    %c0_i32_0 = arith.constant 0 : i32
    return %arg0, %c0_i32 : i32, i32
  }
  func.func @transform_1(%arg0: i32) -> (i32, i32) {
    %c0_i32 = arith.constant 0 : i32
    %c0_i32_0 = arith.constant 0 : i32
    %c0_i32_1 = arith.constant 0 : i32
    return %c0_i32, %c0_i32_0 : i32, i32
  }
  func.func @transform_2(%arg0: i32) -> (i32, i32) {
    %c0_i32 = arith.constant 0 : i32
    %c0_i32_0 = arith.constant 0 : i32
    %c0_i32_1 = arith.constant 0 : i32
    return %c0_i32, %c0_i32_0 : i32, i32
  }
  func.func @transform_3(%arg0: i32) -> (i32, i32) {
    %c0_i32 = arith.constant 0 : i32
    %c0_i32_0 = arith.constant 0 : i32
    return %arg0, %c0_i32 : i32, i32
  }
}

module attributes {stable_mosaic.version = 11 : i64} {
  func.func @_matmul_stats_kernel(%arg0: i32, %arg1: memref<512x128xbf16, #tpu.memory_space<vmem>>, %arg2: memref<128x128xbf16, #tpu.memory_space<vmem>>, %arg3: memref<512x128xf32, #tpu.memory_space<vmem>>, %arg4: memref<1x2x128xf32, #tpu.memory_space<vmem>>) attributes {dimension_semantics = [#tpu.dimension_semantics<parallel>], iteration_bounds = array<i64: 1>, scalar_prefetch = 0 : i64, scratch_operands = 0 : i64, tpu.core_type = #tpu.core_type<tc>, window_params = [{transform_indices = @transform_0, window_bounds = array<i64: 512, 128>}, {pipeline_mode = #tpu.pipeline_mode<synchronous>, transform_indices = @transform_1, window_bounds = array<i64: 128, 128>}, {transform_indices = @transform_2, window_bounds = array<i64: 512, 128>}, {transform_indices = @transform_3, window_bounds = array<i64: 1, 2, 128>}]} {
    %c0 = arith.constant 0 : index
    %c0_0 = arith.constant 0 : index
    %0 = vector.load %arg1[%c0, %c0_0] : memref<512x128xbf16, #tpu.memory_space<vmem>>, vector<512x128xbf16>
    %c0_1 = arith.constant 0 : index
    %c0_2 = arith.constant 0 : index
    %1 = vector.load %arg2[%c0_1, %c0_2] : memref<128x128xbf16, #tpu.memory_space<vmem>>, vector<128x128xbf16>
    %cst = arith.constant dense<0.000000e+00> : vector<512x128xf32>
    %2 = tpu.matmul %0, %1, %cst {dimension_numbers = #tpu.dot_dimension_numbers<[1], [0], [0], [1], [0, 0, 1, 1], [], []>} : vector<512x128xbf16>, vector<128x128xbf16>, vector<512x128xf32> -> vector<512x128xf32>
    %c0_3 = arith.constant 0 : index
    %c0_4 = arith.constant 0 : index
    %3 = vector.load %arg3[%c0_3, %c0_4] : memref<512x128xf32, #tpu.memory_space<vmem>>, vector<512x128xf32>
    tpu.vector_store %arg3[%c0_3, %c0_4], %2 {strides = array<i32>} : memref<512x128xf32, #tpu.memory_space<vmem>>, vector<512x128xf32>,
    %cst_5 = arith.constant dense<0.000000e+00> : vector<128xf32>
    %4 = vector.multi_reduction <add>, %2, %cst_5 [0] : vector<512x128xf32> to vector<128xf32>
    %5 = vector.shape_cast %4 : vector<128xf32> to vector<1x128xf32>
    %6 = arith.mulf %2, %2 : vector<512x128xf32>
    %cst_6 = arith.constant dense<0.000000e+00> : vector<128xf32>
    %7 = vector.multi_reduction <add>, %6, %cst_6 [0] : vector<512x128xf32> to vector<128xf32>
    %8 = vector.shape_cast %7 : vector<128xf32> to vector<1x128xf32>
    %9 = tpu.concatenate %5, %8 in 0 : vector<1x128xf32>, vector<1x128xf32> -> vector<2x128xf32>
    %10 = vector.shape_cast %9 : vector<2x128xf32> to vector<1x2x128xf32>
    %c0_7 = arith.constant 0 : index
    %c0_8 = arith.constant 0 : index
    %c0_9 = arith.constant 0 : index
    %11 = vector.load %arg4[%c0_7, %c0_8, %c0_9] : memref<1x2x128xf32, #tpu.memory_space<vmem>>, vector<1x2x128xf32>
    tpu.vector_store %arg4[%c0_7, %c0_8, %c0_9], %10 {strides = array<i32>} : memref<1x2x128xf32, #tpu.memory_space<vmem>>, vector<1x2x128xf32>,
    return
  }
  func.func @transform_0(%arg0: i32) -> (i32, i32) {
    %c0_i32 = arith.constant 0 : i32
    %c0_i32_0 = arith.constant 0 : i32
    return %arg0, %c0_i32 : i32, i32
  }
  func.func @transform_1(%arg0: i32) -> (i32, i32) {
    %c0_i32 = arith.constant 0 : i32
    %c0_i32_0 = arith.constant 0 : i32
    %c0_i32_1 = arith.constant 0 : i32
    return %c0_i32, %c0_i32_0 : i32, i32
  }
  func.func @transform_2(%arg0: i32) -> (i32, i32) {
    %c0_i32 = arith.constant 0 : i32
    %c0_i32_0 = arith.constant 0 : i32
    return %arg0, %c0_i32 : i32, i32
  }
  func.func @transform_3(%arg0: i32) -> (i32, i32, i32) {
    %c0_i32 = arith.constant 0 : i32
    %c0_i32_0 = arith.constant 0 : i32
    %c0_i32_1 = arith.constant 0 : i32
    return %arg0, %c0_i32, %c0_i32_0 : i32, i32, i32
  }
}

module attributes {stable_mosaic.version = 11 : i64} {
  func.func @_bn_relu_kernel(%arg0: i32, %arg1: memref<512x128xf32, #tpu.memory_space<vmem>>, %arg2: memref<1x128xf32, #tpu.memory_space<vmem>>, %arg3: memref<1x128xf32, #tpu.memory_space<vmem>>, %arg4: memref<512x128xbf16, #tpu.memory_space<vmem>>) attributes {dimension_semantics = [#tpu.dimension_semantics<parallel>], iteration_bounds = array<i64: 1>, scalar_prefetch = 0 : i64, scratch_operands = 0 : i64, tpu.core_type = #tpu.core_type<tc>, window_params = [{transform_indices = @transform_0, window_bounds = array<i64: 512, 128>}, {pipeline_mode = #tpu.pipeline_mode<synchronous>, transform_indices = @transform_1, window_bounds = array<i64: 1, 128>}, {pipeline_mode = #tpu.pipeline_mode<synchronous>, transform_indices = @transform_2, window_bounds = array<i64: 1, 128>}, {transform_indices = @transform_3, window_bounds = array<i64: 512, 128>}]} {
    %c0 = arith.constant 0 : index
    %c0_0 = arith.constant 0 : index
    %0 = vector.load %arg1[%c0, %c0_0] : memref<512x128xf32, #tpu.memory_space<vmem>>, vector<512x128xf32>
    %c0_1 = arith.constant 0 : index
    %c0_2 = arith.constant 0 : index
    %1 = vector.load %arg2[%c0_1, %c0_2] : memref<1x128xf32, #tpu.memory_space<vmem>>, vector<1x128xf32>
    %2 = vector.broadcast %1 : vector<1x128xf32> to vector<512x128xf32>
    %3 = arith.mulf %0, %2 : vector<512x128xf32>
    %c0_3 = arith.constant 0 : index
    %c0_4 = arith.constant 0 : index
    %4 = vector.load %arg3[%c0_3, %c0_4] : memref<1x128xf32, #tpu.memory_space<vmem>>, vector<1x128xf32>
    %5 = vector.broadcast %4 : vector<1x128xf32> to vector<512x128xf32>
    %6 = arith.addf %3, %5 : vector<512x128xf32>
    %cst = arith.constant 0.000000e+00 : f32
    %7 = vector.broadcast %cst : f32 to vector<512x128xf32>
    %8 = arith.maximumf %6, %7 : vector<512x128xf32>
    %9 = arith.truncf %8 : vector<512x128xf32> to vector<512x128xbf16>
    %c0_5 = arith.constant 0 : index
    %c0_6 = arith.constant 0 : index
    %10 = vector.load %arg4[%c0_5, %c0_6] : memref<512x128xbf16, #tpu.memory_space<vmem>>, vector<512x128xbf16>
    tpu.vector_store %arg4[%c0_5, %c0_6], %9 {strides = array<i32>} : memref<512x128xbf16, #tpu.memory_space<vmem>>, vector<512x128xbf16>,
    return
  }
  func.func @transform_0(%arg0: i32) -> (i32, i32) {
    %c0_i32 = arith.constant 0 : i32
    %c0_i32_0 = arith.constant 0 : i32
    return %arg0, %c0_i32 : i32, i32
  }
  func.func @transform_1(%arg0: i32) -> (i32, i32) {
    %c0_i32 = arith.constant 0 : i32
    %c0_i32_0 = arith.constant 0 : i32
    %c0_i32_1 = arith.constant 0 : i32
    return %c0_i32, %c0_i32_0 : i32, i32
  }
  func.func @transform_2(%arg0: i32) -> (i32, i32) {
    %c0_i32 = arith.constant 0 : i32
    %c0_i32_0 = arith.constant 0 : i32
    %c0_i32_1 = arith.constant 0 : i32
    return %c0_i32, %c0_i32_0 : i32, i32
  }
  func.func @transform_3(%arg0: i32) -> (i32, i32) {
    %c0_i32 = arith.constant 0 : i32
    %c0_i32_0 = arith.constant 0 : i32
    return %arg0, %c0_i32 : i32, i32
  }
}

module attributes {stable_mosaic.version = 11 : i64} {
  func.func @_bias_tanh_kernel(%arg0: i32, %arg1: memref<1024x64xbf16, #tpu.memory_space<vmem>>, %arg2: memref<64x128xbf16, #tpu.memory_space<vmem>>, %arg3: memref<1x128xf32, #tpu.memory_space<vmem>>, %arg4: memref<1024x128xf32, #tpu.memory_space<vmem>>) attributes {dimension_semantics = [#tpu.dimension_semantics<parallel>], iteration_bounds = array<i64: 2>, scalar_prefetch = 0 : i64, scratch_operands = 0 : i64, tpu.core_type = #tpu.core_type<tc>, window_params = [{transform_indices = @transform_0, window_bounds = array<i64: 1024, 64>}, {pipeline_mode = #tpu.pipeline_mode<synchronous>, transform_indices = @transform_1, window_bounds = array<i64: 64, 128>}, {pipeline_mode = #tpu.pipeline_mode<synchronous>, transform_indices = @transform_2, window_bounds = array<i64: 1, 128>}, {transform_indices = @transform_3, window_bounds = array<i64: 1024, 128>}]} {
    %c0 = arith.constant 0 : index
    %c0_0 = arith.constant 0 : index
    %0 = vector.load %arg1[%c0, %c0_0] : memref<1024x64xbf16, #tpu.memory_space<vmem>>, vector<1024x64xbf16>
    %c0_1 = arith.constant 0 : index
    %c0_2 = arith.constant 0 : index
    %1 = vector.load %arg2[%c0_1, %c0_2] : memref<64x128xbf16, #tpu.memory_space<vmem>>, vector<64x128xbf16>
    %cst = arith.constant dense<0.000000e+00> : vector<1024x128xf32>
    %2 = tpu.matmul %0, %1, %cst {dimension_numbers = #tpu.dot_dimension_numbers<[1], [0], [0], [1], [0, 0, 1, 1], [], []>} : vector<1024x64xbf16>, vector<64x128xbf16>, vector<1024x128xf32> -> vector<1024x128xf32>
    %c0_3 = arith.constant 0 : index
    %c0_4 = arith.constant 0 : index
    %3 = vector.load %arg3[%c0_3, %c0_4] : memref<1x128xf32, #tpu.memory_space<vmem>>, vector<1x128xf32>
    %4 = vector.broadcast %3 : vector<1x128xf32> to vector<1024x128xf32>
    %5 = arith.addf %2, %4 : vector<1024x128xf32>
    %6 = math.tanh %5 : vector<1024x128xf32>
    %c0_5 = arith.constant 0 : index
    %c0_6 = arith.constant 0 : index
    %7 = vector.load %arg4[%c0_5, %c0_6] : memref<1024x128xf32, #tpu.memory_space<vmem>>, vector<1024x128xf32>
    tpu.vector_store %arg4[%c0_5, %c0_6], %6 {strides = array<i32>} : memref<1024x128xf32, #tpu.memory_space<vmem>>, vector<1024x128xf32>,
    return
  }
  func.func @transform_0(%arg0: i32) -> (i32, i32) {
    %c0_i32 = arith.constant 0 : i32
    %c0_i32_0 = arith.constant 0 : i32
    return %arg0, %c0_i32 : i32, i32
  }
  func.func @transform_1(%arg0: i32) -> (i32, i32) {
    %c0_i32 = arith.constant 0 : i32
    %c0_i32_0 = arith.constant 0 : i32
    %c0_i32_1 = arith.constant 0 : i32
    return %c0_i32, %c0_i32_0 : i32, i32
  }
  func.func @transform_2(%arg0: i32) -> (i32, i32) {
    %c0_i32 = arith.constant 0 : i32
    %c0_i32_0 = arith.constant 0 : i32
    %c0_i32_1 = arith.constant 0 : i32
    return %c0_i32, %c0_i32_0 : i32, i32
  }
  func.func @transform_3(%arg0: i32) -> (i32, i32) {
    %c0_i32 = arith.constant 0 : i32
    %c0_i32_0 = arith.constant 0 : i32
    return %arg0, %c0_i32 : i32, i32
  }
}

</mosaic_0001>

<llo_original>
// kernel: _lambda_.21
$region0: #{_lambda_.21}
  #allocation0 [shape = 'u32[]', space=smem, size = 0x4, offset = 0x4, fixed_abs, tag = 'smem constant byte address 0x4 - core index']
  #allocation1 [shape = 'u32[144,128]{1,0:T(1,128)}', space=vmem, size = 0x12000, scoped, tag = 'internal scratch']
  %s0 = inlined_call_operand.vmem [shape: bf16[128,256], index: 0, kind: input, shape index: {}]
  %s1 = inlined_call_operand.vmem [shape: bf16[256,128], index: 1, kind: input, shape index: {}]
  %s2 = inlined_call_operand.vmem [shape: f32[128,128], index: 2, kind: output, shape index: {0}]
  %s3 = inlined_call_operand.vmem [shape: f32[1,2,128], index: 3, kind: output, shape index: {1}]
  %4 = xla_tuple %s2, %s3
  %s5 = sld [smem:[#allocation0]]
  $region26: #{_lambda_.21} parent=0
    _
  %s7 = ssub.s32 1, %s5
  %s8 = scalar_select 0, %s7, %s5
  // Predicated region
  $region2: #{_lambda_.21} parent=0 // pred_check
    _
  $region3: #{_lambda_.21} parent=0 // pred_check_branch
    %10 = sbr.rel (0) target = $region5
  $region4: #{_lambda_.21} parent=0 // pred_region
    _
  $region5: #{_lambda_.21} parent=0 // pred_fallthru
    _
  // Predicated region
  $region6: #{_lambda_.21} parent=0 // pred_check
    _
  $region7: #{_lambda_.21} parent=0 // pred_check_branch
    %12 = sbr.rel (0) target = $region9
  $region8: #{_lambda_.21} parent=0 // pred_region
    _
  $region9: #{_lambda_.21} parent=0 // pred_fallthru
    _
  %v14 = vld [vmem:[%s0] sm:$0xff]
  %v15 = vld [vmem:[%s0 + $0x8] sm:$0xff]
  %v16 = vld [vmem:[%s0 + $0x10] sm:$0xff]
  %v17 = vld [vmem:[%s0 + $0x18] sm:$0xff]
  %v18 = vld [vmem:[%s0 + $0x20] sm:$0xff]
  %v19 = vld [vmem:[%s0 + $0x28] sm:$0xff]
  %v20 = vld [vmem:[%s0 + $0x30] sm:$0xff]
  %v21 = vld [vmem:[%s0 + $0x38] sm:$0xff]
  %v22 = vld [vmem:[%s0 + $0x40] sm:$0xff]
  %v23 = vld [vmem:[%s0 + $0x48] sm:$0xff]
  %v24 = vld [vmem:[%s0 + $0x50] sm:$0xff]
  %v25 = vld [vmem:[%s0 + $0x58] sm:$0xff]
  %v26 = vld [vmem:[%s0 + $0x60] sm:$0xff]
  %v27 = vld [vmem:[%s0 + $0x68] sm:$0xff]
  %v28 = vld [vmem:[%s0 + $0x70] sm:$0xff]
  %v29 = vld [vmem:[%s0 + $0x78] sm:$0xff]
  %v30 = vld [vmem:[%s1] sm:$0xf]
  %v31 = vld [vmem:[%s1 + $0x4] sm:$0xf]
  %v32 = vld [vmem:[%s1 + $0x8] sm:$0xf]
  %v33 = vld [vmem:[%s1 + $0xc] sm:$0xf]
  %v34 = vld [vmem:[%s1 + $0x10] sm:$0xf]
  %v35 = vld [vmem:[%s1 + $0x14] sm:$0xf]
  %v36 = vld [vmem:[%s1 + $0x18] sm:$0xf]
  %v37 = vld [vmem:[%s1 + $0x1c] sm:$0xf]
  %v38 = vld [vmem:[%s1 + $0x20] sm:$0xf]
  %v39 = vld [vmem:[%s1 + $0x24] sm:$0xf]
  %v40 = vld [vmem:[%s1 + $0x28] sm:$0xf]
  %v41 = vld [vmem:[%s1 + $0x2c] sm:$0xf]
  %v42 = vld [vmem:[%s1 + $0x30] sm:$0xf]
  %v43 = vld [vmem:[%s1 + $0x34] sm:$0xf]
  %v44 = vld [vmem:[%s1 + $0x38] sm:$0xf]
  %v45 = vld [vmem:[%s1 + $0x3c] sm:$0xf]
  %v46 = vld [vmem:[%s1 + $0x40] sm:$0xf]
  %v47 = vld [vmem:[%s1 + $0x44] sm:$0xf]
  %v48 = vld [vmem:[%s1 + $0x48] sm:$0xf]
  %v49 = vld [vmem:[%s1 + $0x4c] sm:$0xf]
  %v50 = vld [vmem:[%s1 + $0x50] sm:$0xf]
  %v51 = vld [vmem:[%s1 + $0x54] sm:$0xf]
  %v52 = vld [vmem:[%s1 + $0x58] sm:$0xf]
  %v53 = vld [vmem:[%s1 + $0x5c] sm:$0xf]
  %v54 = vld [vmem:[%s1 + $0x60] sm:$0xf]
  %v55 = vld [vmem:[%s1 + $0x64] sm:$0xf]
  %v56 = vld [vmem:[%s1 + $0x68] sm:$0xf]
  %v57 = vld [vmem:[%s1 + $0x6c] sm:$0xf]
  %v58 = vld [vmem:[%s1 + $0x70] sm:$0xf]
  %v59 = vld [vmem:[%s1 + $0x74] sm:$0xf]
  %v60 = vld [vmem:[%s1 + $0x78] sm:$0xf]
  %v61 = vld [vmem:[%s1 + $0x7c] sm:$0xf]
  %v78 = vunpack.c.l.b16 %v14
  %v79 = vunpack.c.h.b16 %v14
  %v80 = vunpack.c.l.b16 %v15
  %v81 = vunpack.c.h.b16 %v15
  %v82 = vunpack.c.l.b16 %v16
  %v83 = vunpack.c.h.b16 %v16
  %v84 = vunpack.c.l.b16 %v17
  %v85 = vunpack.c.h.b16 %v17
  %v86 = vunpack.c.l.b16 %v18
  %v87 = vunpack.c.h.b16 %v18
  %v88 = vunpack.c.l.b16 %v19
  %v89 = vunpack.c.h.b16 %v19
  %v90 = vunpack.c.l.b16 %v20
  %v91 = vunpack.c.h.b16 %v20
  %v92 = vunpack.c.l.b16 %v21
  %v93 = vunpack.c.h.b16 %v21
  %v94 = vunpack.c.l.b16 %v22
  %v95 = vunpack.c.h.b16 %v22
  %v96 = vunpack.c.l.b16 %v23
  %v97 = vunpack.c.h.b16 %v23
  %v98 = vunpack.c.l.b16 %v24
  %v99 = vunpack.c.h.b16 %v24
  %v100 = vunpack.c.l.b16 %v25
  %v101 = vunpack.c.h.b16 %v25
  %v102 = vunpack.c.l.b16 %v26
  %v103 = vunpack.c.h.b16 %v26
  %v104 = vunpack.c.l.b16 %v27
  %v105 = vunpack.c.h.b16 %v27
  %v106 = vunpack.c.l.b16 %v28
  %v107 = vunpack.c.h.b16 %v28
  %v108 = vunpack.c.l.b16 %v29
  %v109 = vunpack.c.h.b16 %v29
  %v110 = vpack.c.b16 %v80, %v78
  %v111 = vpack.c.b16 %v81, %v79
  %v112 = vpack.c.b16 %v84, %v82
  %v113 = vpack.c.b16 %v85, %v83
  %v114 = vpack.c.b16 %v88, %v86
  %v115 = vpack.c.b16 %v89, %v87
  %v116 = vpack.c.b16 %v92, %v90
  %v117 = vpack.c.b16 %v93, %v91
  %v118 = vpack.c.b16 %v96, %v94
  %v119 = vpack.c.b16 %v97, %v95
  %v120 = vpack.c.b16 %v100, %v98
  %v121 = vpack.c.b16 %v101, %v99
  %v122 = vpack.c.b16 %v104, %v102
  %v123 = vpack.c.b16 %v105, %v103
  %v124 = vpack.c.b16 %v108, %v106
  %v125 = vpack.c.b16 %v109, %v107
  %v174 = vunpack.c.l.b16 %v30
  %v175 = vunpack.c.l.b16 %v31
  %v176 = vunpack.c.l.b16 %v32
  %v177 = vunpack.c.l.b16 %v33
  %v178 = vunpack.c.l.b16 %v34
  %v179 = vunpack.c.l.b16 %v35
  %v180 = vunpack.c.l.b16 %v36
  %v181 = vunpack.c.l.b16 %v37
  %v182 = vunpack.c.l.b16 %v38
  %v183 = vunpack.c.l.b16 %v39
  %v184 = vunpack.c.l.b16 %v40
  %v185 = vunpack.c.l.b16 %v41
  %v186 = vunpack.c.l.b16 %v42
  %v187 = vunpack.c.l.b16 %v43
  %v188 = vunpack.c.l.b16 %v44
  %v189 = vunpack.c.l.b16 %v45
  %v190 = vunpack.c.l.b16 %v46
  %v191 = vunpack.c.l.b16 %v47
  %v192 = vunpack.c.l.b16 %v48
  %v193 = vunpack.c.l.b16 %v49
  %v194 = vunpack.c.l.b16 %v50
  %v195 = vunpack.c.l.b16 %v51
  %v196 = vunpack.c.l.b16 %v52
  %v197 = vunpack.c.l.b16 %v53
  %v198 = vunpack.c.l.b16 %v54
  %v199 = vunpack.c.l.b16 %v55
  %v200 = vunpack.c.l.b16 %v56
  %v201 = vunpack.c.l.b16 %v57
  %v202 = vunpack.c.l.b16 %v58
  %v203 = vunpack.c.l.b16 %v59
  %v204 = vunpack.c.l.b16 %v60
  %v205 = vunpack.c.l.b16 %v61
  %v206 = vpack.c.b16 %v175, %v174
  %v207 = vpack.c.b16 %v177, %v176
  %v208 = vpack.c.b16 %v179, %v178
  %v209 = vpack.c.b16 %v181, %v180
  %v210 = vpack.c.b16 %v183, %v182
  %v211 = vpack.c.b16 %v185, %v184
  %v212 = vpack.c.b16 %v187, %v186
  %v213 = vpack.c.b16 %v189, %v188
  %v214 = vpack.c.b16 %v191, %v190
  %v215 = vpack.c.b16 %v193, %v192
  %v216 = vpack.c.b16 %v195, %v194
  %v217 = vpack.c.b16 %v197, %v196
  %v218 = vpack.c.b16 %v199, %v198
  %v219 = vpack.c.b16 %v201, %v200
  %v220 = vpack.c.b16 %v203, %v202
  %v221 = vpack.c.b16 %v205, %v204
  %238 = vmatprep.subr.bf16.mxu0 0
  %239 = vmatpush1.bf16.msra.mxu0 %v206
  %240 = vmatprep.subr.bf16.mxu0 0
  %241 = vmatpush1.bf16.msra.mxu0 %v207
  %242 = vmatprep.subr.bf16.mxu0 0
  %243 = vmatpush1.bf16.msra.mxu0 %v208
  %244 = vmatprep.subr.bf16.mxu0 0
  %245 = vmatpush1.bf16.msra.mxu0 %v209
  %246 = vmatprep.subr.bf16.mxu0 0
  %247 = vmatpush1.bf16.msra.mxu0 %v210
  %248 = vmatprep.subr.bf16.mxu0 0
  %249 = vmatpush1.bf16.msra.mxu0 %v211
  %250 = vmatprep.subr.bf16.mxu0 0
  %251 = vmatpush1.bf16.msra.mxu0 %v212
  %252 = vmatprep.subr.bf16.mxu0 0
  %253 = vmatpush1.bf16.msra.mxu0 %v213
  %254 = vmatprep.subr.bf16.mxu0 0
  %255 = vmatpush1.bf16.msra.mxu0 %v214
  %256 = vmatprep.subr.bf16.mxu0 0
  %257 = vmatpush1.bf16.msra.mxu0 %v215
  %258 = vmatprep.subr.bf16.mxu0 0
  %259 = vmatpush1.bf16.msra.mxu0 %v216
  %260 = vmatprep.subr.bf16.mxu0 0
  %261 = vmatpush1.bf16.msra.mxu0 %v217
  %262 = vmatprep.subr.bf16.mxu0 0
  %263 = vmatpush1.bf16.msra.mxu0 %v218
  %264 = vmatprep.subr.bf16.mxu0 0
  %265 = vmatpush1.bf16.msra.mxu0 %v219
  %266 = vmatprep.subr.bf16.mxu0 0
  %267 = vmatpush1.bf16.msra.mxu0 %v220
  %268 = vmatprep.subr.bf16.mxu0 0
  %269 = vmatpush1.bf16.msra.mxu0 %v221
  %270 = vmatprep.mubr.bf16.mxu0 %v111
  %271 = vmatmul.mubr.bf16.gmra.mrb[0].mxu0 %v110
  %v272 = vpop.f32.mrb[0].mxu0
  %v273 = vadd.f32 0.0, %v272
  %v274 = vpop.f32.mrb[0].mxu0
  %v275 = vpop.f32.mrb[0].mxu0
  %v276 = vadd.f32 0.0, %v275
  %v277 = vpop.f32.mrb[0].mxu0
  %278 = vmatprep.mubr.bf16.mxu0 %v113
  %279 = vmatmul.mubr.bf16.gmra.mrb[0].mxu0 %v112
  %v280 = vpop.f32.mrb[0].mxu0
  %v281 = vadd.f32 0.0, %v280
  %v282 = vpop.f32.mrb[0].mxu0
  %v283 = vpop.f32.mrb[0].mxu0
  %v284 = vadd.f32 0.0, %v283
  %v285 = vpop.f32.mrb[0].mxu0
  %286 = vmatprep.mubr.bf16.mxu0 %v115
  %287 = vmatmul.mubr.bf16.gmra.mrb[0].mxu0 %v114
  %v288 = vpop.f32.mrb[0].mxu0
  %v289 = vadd.f32 0.0, %v288
  %v290 = vpop.f32.mrb[0].mxu0
  %v291 = vpop.f32.mrb[0].mxu0
  %v292 = vadd.f32 0.0, %v291
  %v293 = vpop.f32.mrb[0].mxu0
  %294 = vmatprep.mubr.bf16.mxu0 %v117
  %295 = vmatmul.mubr.bf16.gmra.mrb[0].mxu0 %v116
  %v296 = vpop.f32.mrb[0].mxu0
  %v297 = vadd.f32 0.0, %v296
  %v298 = vpop.f32.mrb[0].mxu0
  %v299 = vpop.f32.mrb[0].mxu0
  %v300 = vadd.f32 0.0, %v299
  %v301 = vpop.f32.mrb[0].mxu0
  %302 = vmatprep.mubr.bf16.mxu0 %v119
  %303 = vmatmul.mubr.bf16.gmra.mrb[0].mxu0 %v118
  %v304 = vpop.f32.mrb[0].mxu0
  %v305 = vadd.f32 0.0, %v304
  %v306 = vpop.f32.mrb[0].mxu0
  %v307 = vpop.f32.mrb[0].mxu0
  %v308 = vadd.f32 0.0, %v307
  %v309 = vpop.f32.mrb[0].mxu0
  %310 = vmatprep.mubr.bf16.mxu0 %v121
  %311 = vmatmul.mubr.bf16.gmra.mrb[0].mxu0 %v120
  %v312 = vpop.f32.mrb[0].mxu0
  %v313 = vadd.f32 0.0, %v312
  %v314 = vpop.f32.mrb[0].mxu0
  %v315 = vpop.f32.mrb[0].mxu0
  %v316 = vadd.f32 0.0, %v315
  %v317 = vpop.f32.mrb[0].mxu0
  %318 = vmatprep.mubr.bf16.mxu0 %v123
  %319 = vmatmul.mubr.bf16.gmra.mrb[0].mxu0 %v122
  %v320 = vpop.f32.mrb[0].mxu0
  %v321 = vadd.f32 0.0, %v320
  %v322 = vpop.f32.mrb[0].mxu0
  %v323 = vpop.f32.mrb[0].mxu0
  %v324 = vadd.f32 0.0, %v323
  %v325 = vpop.f32.mrb[0].mxu0
  %326 = vmatprep.mubr.bf16.mxu0 %v125
  %327 = vmatmul.mubr.bf16.gmra.mrb[0].mxu0 %v124
  %v328 = vpop.f32.mrb[0].mxu0
  %v329 = vadd.f32 0.0, %v328
  %v330 = vpop.f32.mrb[0].mxu0
  %v331 = vpop.f32.mrb[0].mxu0
  %v332 = vadd.f32 0.0, %v331
  %v333 = vpop.f32.mrb[0].mxu0
  %334 = vdwg.mxu0
  %335 = vst [vmem:[%s2] sm:$0xff] %v273
  %336 = vst [vmem:[%s2 + $0x8] sm:$0xff] %v276
  %337 = vst [vmem:[%s2 + $0x10] sm:$0xff] %v281
  %338 = vst [vmem:[%s2 + $0x18] sm:$0xff] %v284
  %339 = vst [vmem:[%s2 + $0x20] sm:$0xff] %v289
  %340 = vst [vmem:[%s2 + $0x28] sm:$0xff] %v292
  %341 = vst [vmem:[%s2 + $0x30] sm:$0xff] %v297
  %342 = vst [vmem:[%s2 + $0x38] sm:$0xff] %v300
  %343 = vst [vmem:[%s2 + $0x40] sm:$0xff] %v305
  %344 = vst [vmem:[%s2 + $0x48] sm:$0xff] %v308
  %345 = vst [vmem:[%s2 + $0x50] sm:$0xff] %v313
  %346 = vst [vmem:[%s2 + $0x58] sm:$0xff] %v316
  %347 = vst [vmem:[%s2 + $0x60] sm:$0xff] %v321
  %348 = vst [vmem:[%s2 + $0x68] sm:$0xff] %v324
  %349 = vst [vmem:[%s2 + $0x70] sm:$0xff] %v329
  %350 = vst [vmem:[%s2 + $0x78] sm:$0xff] %v332
  %v351 = vadd.f32 %v273, %v276
  %v352 = vadd.f32 %v351, %v281
  %v353 = vadd.f32 %v352, %v284
  %v354 = vadd.f32 %v353, %v289
  %v355 = vadd.f32 %v354, %v292
  %v356 = vadd.f32 %v355, %v297
  %v357 = vadd.f32 %v356, %v300
  %v358 = vadd.f32 %v357, %v305
  %v359 = vadd.f32 %v358, %v308
  %v360 = vadd.f32 %v359, %v313
  %v361 = vadd.f32 %v360, %v316
  %v362 = vadd.f32 %v361, %v321
  %v363 = vadd.f32 %v362, %v324
  %v364 = vadd.f32 %v363, %v329
  %v365 = vadd.f32 %v364, %v332
  %v366 = vrot.slane %v365, 4
  %v367 = vadd.f32 %v365, %v366
  %v368 = vrot.slane %v367, 2
  %v369 = vadd.f32 %v367, %v368
  %v370 = vrot.slane %v369, 1
  %v371 = vadd.f32 %v369, %v370
  %v372 = vmul.f32 %v273, %v273
  %v373 = vmul.f32 %v276, %v276
  %v374 = vmul.f32 %v281, %v281
  %v375 = vmul.f32 %v284, %v284
  %v376 = vmul.f32 %v289, %v289
  %v377 = vmul.f32 %v292, %v292
  %v378 = vmul.f32 %v297, %v297
  %v379 = vmul.f32 %v300, %v300
  %v380 = vmul.f32 %v305, %v305
  %v381 = vmul.f32 %v308, %v308
  %v382 = vmul.f32 %v313, %v313
  %v383 = vmul.f32 %v316, %v316
  %v384 = vmul.f32 %v321, %v321
  %v385 = vmul.f32 %v324, %v324
  %v386 = vmul.f32 %v329, %v329
  %v387 = vmul.f32 %v332, %v332
  %v388 = vadd.f32 %v372, %v373
  %v389 = vadd.f32 %v388, %v374
  %v390 = vadd.f32 %v389, %v375
  %v391 = vadd.f32 %v390, %v376
  %v392 = vadd.f32 %v391, %v377
  %v393 = vadd.f32 %v392, %v378
  %v394 = vadd.f32 %v393, %v379
  %v395 = vadd.f32 %v394, %v380
  %v396 = vadd.f32 %v395, %v381
  %v397 = vadd.f32 %v396, %v382
  %v398 = vadd.f32 %v397, %v383
  %v399 = vadd.f32 %v398, %v384
  %v400 = vadd.f32 %v399, %v385
  %v401 = vadd.f32 %v400, %v386
  %v402 = vadd.f32 %v401, %v387
  %v403 = vrot.slane %v402, 4
  %v404 = vadd.f32 %v402, %v403
  %v405 = vrot.slane %v404, 2
  %v406 = vadd.f32 %v404, %v405
  %v407 = vrot.slane %v406, 1
  %v408 = vadd.f32 %v406, %v407
  %vm409 = vcmask 1040384
  %v410 = vsel %vm409, %v371, %v408
  %411 = vst [vmem:[%s3] sm:$0x3] %v410
  // Predicated region
  $region10: #{_lambda_.21} parent=0 // pred_check
    _
  $region11: #{_lambda_.21} parent=0 // pred_check_branch
    %413 = sbr.rel (0) target = $region13
  $region12: #{_lambda_.21} parent=0 // pred_region
    _
  $region13: #{_lambda_.21} parent=0 // pred_fallthru
    _
  // Predicated region
  $region14: #{_lambda_.21} parent=0 // pred_check
    _
  $region15: #{_lambda_.21} parent=0 // pred_check_branch
    %415 = sbr.rel (0) target = $region17
  $region16: #{_lambda_.21} parent=0 // pred_region
    _
  $region17: #{_lambda_.21} parent=0 // pred_fallthru
    _
  // Predicated region
  $region18: #{_lambda_.21} parent=0 // pred_check
    _
  $region19: #{_lambda_.21} parent=0 // pred_check_branch
    %417 = sbr.rel (0) target = $region21
  $region20: #{_lambda_.21} parent=0 // pred_region
    _
  $region21: #{_lambda_.21} parent=0 // pred_fallthru
    _
  // Predicated region
  $region22: #{_lambda_.21} parent=0 // pred_check
    _
  $region23: #{_lambda_.21} parent=0 // pred_check_branch
    %419 = sbr.rel (0) target = $region25
  $region24: #{_lambda_.21} parent=0 // pred_region
    _
  $region25: #{_lambda_.21} parent=0 // pred_fallthru
    _

// kernel: _lambda_.24
$region0: #{_lambda_.24}
  #allocation0 [shape = 'u32[]', space=smem, size = 0x4, offset = 0x4, fixed_abs, tag = 'smem constant byte address 0x4 - core index']
  #allocation1 [shape = 'u32[144,128]{1,0:T(1,128)}', space=vmem, size = 0x12000, scoped, tag = 'internal scratch']
  %s0 = inlined_call_operand.vmem [shape: f32[128,128], index: 0, kind: input, shape index: {}]
  %s1 = inlined_call_operand.vmem [shape: f32[1,128], index: 1, kind: input, shape index: {}]
  %s2 = inlined_call_operand.vmem [shape: f32[1,128], index: 2, kind: input, shape index: {}]
  %s3 = inlined_call_operand.vmem [shape: bf16[128,128], index: 3, kind: output, shape index: {}]
  %s4 = sld [smem:[#allocation0]]
  $region22: #{_lambda_.24} parent=0
    _
  %s6 = ssub.s32 1, %s4
  %s7 = scalar_select 0, %s6, %s4
  // Predicated region
  $region2: #{_lambda_.24} parent=0 // pred_check
    _
  $region3: #{_lambda_.24} parent=0 // pred_check_branch
    %9 = sbr.rel (0) target = $region5
  $region4: #{_lambda_.24} parent=0 // pred_region
    _
  $region5: #{_lambda_.24} parent=0 // pred_fallthru
    _
  // Predicated region
  $region6: #{_lambda_.24} parent=0 // pred_check
    _
  $region7: #{_lambda_.24} parent=0 // pred_check_branch
    %11 = sbr.rel (0) target = $region9
  $region8: #{_lambda_.24} parent=0 // pred_region
    _
  $region9: #{_lambda_.24} parent=0 // pred_fallthru
    _
  // Predicated region
  $region10: #{_lambda_.24} parent=0 // pred_check
    _
  $region11: #{_lambda_.24} parent=0 // pred_check_branch
    %13 = sbr.rel (0) target = $region13
  $region12: #{_lambda_.24} parent=0 // pred_region
    _
  $region13: #{_lambda_.24} parent=0 // pred_fallthru
    _
  %v14 = vld [vmem:[%s0] sm:$0xff]
  %v15 = vld [vmem:[%s0 + $0x8] sm:$0xff]
  %v16 = vld [vmem:[%s0 + $0x10] sm:$0xff]
  %v17 = vld [vmem:[%s0 + $0x18] sm:$0xff]
  %v18 = vld [vmem:[%s0 + $0x20] sm:$0xff]
  %v19 = vld [vmem:[%s0 + $0x28] sm:$0xff]
  %v20 = vld [vmem:[%s0 + $0x30] sm:$0xff]
  %v21 = vld [vmem:[%s0 + $0x38] sm:$0xff]
  %v22 = vld [vmem:[%s0 + $0x40] sm:$0xff]
  %v23 = vld [vmem:[%s0 + $0x48] sm:$0xff]
  %v24 = vld [vmem:[%s0 + $0x50] sm:$0xff]
  %v25 = vld [vmem:[%s0 + $0x58] sm:$0xff]
  %v26 = vld [vmem:[%s0 + $0x60] sm:$0xff]
  %v27 = vld [vmem:[%s0 + $0x68] sm:$0xff]
  %v28 = vld [vmem:[%s0 + $0x70] sm:$0xff]
  %v29 = vld [vmem:[%s0 + $0x78] sm:$0xff]
  %v30 = vld [vmem:[%s1] sm:$0x1]
  %v32 = vlaneseq
  %v33 = vshrl.u32 %v32, 7
  %v34 = vsub.s32 0, %v33
  %v35 = vrot.slane %v30, %v34
  %v37 = vmul.f32 %v14, %v35
  %v38 = vmul.f32 %v15, %v35
  %v39 = vmul.f32 %v16, %v35
  %v40 = vmul.f32 %v17, %v35
  %v41 = vmul.f32 %v18, %v35
  %v42 = vmul.f32 %v19, %v35
  %v43 = vmul.f32 %v20, %v35
  %v44 = vmul.f32 %v21, %v35
  %v45 = vmul.f32 %v22, %v35
  %v46 = vmul.f32 %v23, %v35
  %v47 = vmul.f32 %v24, %v35
  %v48 = vmul.f32 %v25, %v35
  %v49 = vmul.f32 %v26, %v35
  %v50 = vmul.f32 %v27, %v35
  %v51 = vmul.f32 %v28, %v35
  %v52 = vmul.f32 %v29, %v35
  %v53 = vld [vmem:[%s2] sm:$0x1]
  %v55 = vlaneseq
  %v56 = vshrl.u32 %v55, 7
  %v57 = vsub.s32 0, %v56
  %v58 = vrot.slane %v53, %v57
  %v60 = vadd.f32 %v37, %v58
  %v61 = vadd.f32 %v38, %v58
  %v62 = vadd.f32 %v39, %v58
  %v63 = vadd.f32 %v40, %v58
  %v64 = vadd.f32 %v41, %v58
  %v65 = vadd.f32 %v42, %v58
  %v66 = vadd.f32 %v43, %v58
  %v67 = vadd.f32 %v44, %v58
  %v68 = vadd.f32 %v45, %v58
  %v69 = vadd.f32 %v46, %v58
  %v70 = vadd.f32 %v47, %v58
  %v71 = vadd.f32 %v48, %v58
  %v72 = vadd.f32 %v49, %v58
  %v73 = vadd.f32 %v50, %v58
  %v74 = vadd.f32 %v51, %v58
  %v75 = vadd.f32 %v52, %v58
  %v76 = vmax.f32 %v60, 0.0
  %v77 = vmax.f32 %v61, 0.0
  %v78 = vmax.f32 %v62, 0.0
  %v79 = vmax.f32 %v63, 0.0
  %v80 = vmax.f32 %v64, 0.0
  %v81 = vmax.f32 %v65, 0.0
  %v82 = vmax.f32 %v66, 0.0
  %v83 = vmax.f32 %v67, 0.0
  %v84 = vmax.f32 %v68, 0.0
  %v85 = vmax.f32 %v69, 0.0
  %v86 = vmax.f32 %v70, 0.0
  %v87 = vmax.f32 %v71, 0.0
  %v88 = vmax.f32 %v72, 0.0
  %v89 = vmax.f32 %v73, 0.0
  %v90 = vmax.f32 %v74, 0.0
  %v91 = vmax.f32 %v75, 0.0
  %v92 = vpack.c.bf16 %v77, %v76
  %v93 = vpack.c.bf16 %v79, %v78
  %v94 = vpack.c.bf16 %v81, %v80
  %v95 = vpack.c.bf16 %v83, %v82
  %v96 = vpack.c.bf16 %v85, %v84
  %v97 = vpack.c.bf16 %v87, %v86
  %v98 = vpack.c.bf16 %v89, %v88
  %v99 = vpack.c.bf16 %v91, %v90
  %v108 = vunpack.c.l.b16 %v92
  %v109 = vunpack.c.h.b16 %v92
  %v110 = vunpack.c.l.b16 %v93
  %v111 = vunpack.c.h.b16 %v93
  %v112 = vunpack.c.l.b16 %v94
  %v113 = vunpack.c.h.b16 %v94
  %v114 = vunpack.c.l.b16 %v95
  %v115 = vunpack.c.h.b16 %v95
  %v116 = vunpack.c.l.b16 %v96
  %v117 = vunpack.c.h.b16 %v96
  %v118 = vunpack.c.l.b16 %v97
  %v119 = vunpack.c.h.b16 %v97
  %v120 = vunpack.c.l.b16 %v98
  %v121 = vunpack.c.h.b16 %v98
  %v122 = vunpack.c.l.b16 %v99
  %v123 = vunpack.c.h.b16 %v99
  %v124 = vpack.c.b16 %v108, %v108
  %v125 = vpack.c.b16 %v109, %v109
  %v126 = vpack.c.b16 %v110, %v110
  %v127 = vpack.c.b16 %v111, %v111
  %v128 = vpack.c.b16 %v112, %v112
  %v129 = vpack.c.b16 %v113, %v113
  %v130 = vpack.c.b16 %v114, %v114
  %v131 = vpack.c.b16 %v115, %v115
  %v132 = vpack.c.b16 %v116, %v116
  %v133 = vpack.c.b16 %v117, %v117
  %v134 = vpack.c.b16 %v118, %v118
  %v135 = vpack.c.b16 %v119, %v119
  %v136 = vpack.c.b16 %v120, %v120
  %v137 = vpack.c.b16 %v121, %v121
  %v138 = vpack.c.b16 %v122, %v122
  %v139 = vpack.c.b16 %v123, %v123
  %156 = vst [vmem:[%s3] sm:$0xf] %v124
  %157 = vst [vmem:[%s3 + $0x4] sm:$0xf] %v125
  %158 = vst [vmem:[%s3 + $0x8] sm:$0xf] %v126
  %159 = vst [vmem:[%s3 + $0xc] sm:$0xf] %v127
  %160 = vst [vmem:[%s3 + $0x10] sm:$0xf] %v128
  %161 = vst [vmem:[%s3 + $0x14] sm:$0xf] %v129
  %162 = vst [vmem:[%s3 + $0x18] sm:$0xf] %v130
  %163 = vst [vmem:[%s3 + $0x1c] sm:$0xf] %v131
  %164 = vst [vmem:[%s3 + $0x20] sm:$0xf] %v132
  %165 = vst [vmem:[%s3 + $0x24] sm:$0xf] %v133
  %166 = vst [vmem:[%s3 + $0x28] sm:$0xf] %v134
  %167 = vst [vmem:[%s3 + $0x2c] sm:$0xf] %v135
  %168 = vst [vmem:[%s3 + $0x30] sm:$0xf] %v136
  %169 = vst [vmem:[%s3 + $0x34] sm:$0xf] %v137
  %170 = vst [vmem:[%s3 + $0x38] sm:$0xf] %v138
  %171 = vst [vmem:[%s3 + $0x3c] sm:$0xf] %v139
  // Predicated region
  $region14: #{_lambda_.24} parent=0 // pred_check
    _
  $region15: #{_lambda_.24} parent=0 // pred_check_branch
    %173 = sbr.rel (0) target = $region17
  $region16: #{_lambda_.24} parent=0 // pred_region
    _
  $region17: #{_lambda_.24} parent=0 // pred_fallthru
    _
  // Predicated region
  $region18: #{_lambda_.24} parent=0 // pred_check
    _
  $region19: #{_lambda_.24} parent=0 // pred_check_branch
    %175 = sbr.rel (0) target = $region21
  $region20: #{_lambda_.24} parent=0 // pred_region
    _
  $region21: #{_lambda_.24} parent=0 // pred_fallthru
    _

// kernel: _lambda_.28
$region0: #{_lambda_.28}
  #allocation0 [shape = 'u32[]', space=smem, size = 0x4, offset = 0x4, fixed_abs, tag = 'smem constant byte address 0x4 - core index']
  #allocation1 [shape = 'u32[144,128]{1,0:T(1,128)}', space=vmem, size = 0x12000, scoped, tag = 'internal scratch']
  %s0 = inlined_call_operand.vmem [shape: bf16[512,128], index: 0, kind: input, shape index: {}]
  %s1 = inlined_call_operand.vmem [shape: bf16[128,128], index: 1, kind: input, shape index: {}]
  %s2 = inlined_call_operand.vmem [shape: f32[512,128], index: 2, kind: output, shape index: {0}]
  %s3 = inlined_call_operand.vmem [shape: f32[1,2,128], index: 3, kind: output, shape index: {1}]
  %4 = xla_tuple %s2, %s3
  %s5 = sld [smem:[#allocation0]]
  $region26: #{_lambda_.28} parent=0
    _
  %s7 = ssub.s32 1, %s5
  %s8 = scalar_select 0, %s7, %s5
  // Predicated region
  $region2: #{_lambda_.28} parent=0 // pred_check
    _
  $region3: #{_lambda_.28} parent=0 // pred_check_branch
    %10 = sbr.rel (0) target = $region5
  $region4: #{_lambda_.28} parent=0 // pred_region
    _
  $region5: #{_lambda_.28} parent=0 // pred_fallthru
    _
  // Predicated region
  $region6: #{_lambda_.28} parent=0 // pred_check
    _
  $region7: #{_lambda_.28} parent=0 // pred_check_branch
    %12 = sbr.rel (0) target = $region9
  $region8: #{_lambda_.28} parent=0 // pred_region
    _
  $region9: #{_lambda_.28} parent=0 // pred_fallthru
    _
  %v14 = vld [vmem:[%s0] sm:$0xf]
  %v15 = vld [vmem:[%s0 + $0x4] sm:$0xf]
  %v16 = vld [vmem:[%s0 + $0x8] sm:$0xf]
  %v17 = vld [vmem:[%s0 + $0xc] sm:$0xf]
  %v18 = vld [vmem:[%s0 + $0x10] sm:$0xf]
  %v19 = vld [vmem:[%s0 + $0x14] sm:$0xf]
  %v20 = vld [vmem:[%s0 + $0x18] sm:$0xf]
  %v21 = vld [vmem:[%s0 + $0x1c] sm:$0xf]
  %v22 = vld [vmem:[%s0 + $0x20] sm:$0xf]
  %v23 = vld [vmem:[%s0 + $0x24] sm:$0xf]
  %v24 = vld [vmem:[%s0 + $0x28] sm:$0xf]
  %v25 = vld [vmem:[%s0 + $0x2c] sm:$0xf]
  %v26 = vld [vmem:[%s0 + $0x30] sm:$0xf]
  %v27 = vld [vmem:[%s0 + $0x34] sm:$0xf]
  %v28 = vld [vmem:[%s0 + $0x38] sm:$0xf]
  %v29 = vld [vmem:[%s0 + $0x3c] sm:$0xf]
  %v30 = vld [vmem:[%s0 + $0x40] sm:$0xf]
  %v31 = vld [vmem:[%s0 + $0x44] sm:$0xf]
  %v32 = vld [vmem:[%s0 + $0x48] sm:$0xf]
  %v33 = vld [vmem:[%s0 + $0x4c] sm:$0xf]
  %v34 = vld [vmem:[%s0 + $0x50] sm:$0xf]
  %v35 = vld [vmem:[%s0 + $0x54] sm:$0xf]
  %v36 = vld [vmem:[%s0 + $0x58] sm:$0xf]
  %v37 = vld [vmem:[%s0 + $0x5c] sm:$0xf]
  %v38 = vld [vmem:[%s0 + $0x60] sm:$0xf]
  %v39 = vld [vmem:[%s0 + $0x64] sm:$0xf]
  %v40 = vld [vmem:[%s0 + $0x68] sm:$0xf]
  %v41 = vld [vmem:[%s0 + $0x6c] sm:$0xf]
  %v42 = vld [vmem:[%s0 + $0x70] sm:$0xf]
  %v43 = vld [vmem:[%s0 + $0x74] sm:$0xf]
  %v44 = vld [vmem:[%s0 + $0x78] sm:$0xf]
  %v45 = vld [vmem:[%s0 + $0x7c] sm:$0xf]
  %v46 = vld [vmem:[%s0 + $0x80] sm:$0xf]
  %v47 = vld [vmem:[%s0 + $0x84] sm:$0xf]
  %v48 = vld [vmem:[%s0 + $0x88] sm:$0xf]
  %v49 = vld [vmem:[%s0 + $0x8c] sm:$0xf]
  %v50 = vld [vmem:[%s0 + $0x90] sm:$0xf]
  %v51 = vld [vmem:[%s0 + $0x94] sm:$0xf]
  %v52 = vld [vmem:[%s0 + $0x98] sm:$0xf]
  %v53 = vld [vmem:[%s0 + $0x9c] sm:$0xf]
  %v54 = vld [vmem:[%s0 + $0xa0] sm:$0xf]
  %v55 = vld [vmem:[%s0 + $0xa4] sm:$0xf]
  %v56 = vld [vmem:[%s0 + $0xa8] sm:$0xf]
  %v57 = vld [vmem:[%s0 + $0xac] sm:$0xf]
  %v58 = vld [vmem:[%s0 + $0xb0] sm:$0xf]
  %v59 = vld [vmem:[%s0 + $0xb4] sm:$0xf]
  %v60 = vld [vmem:[%s0 + $0xb8] sm:$0xf]
  %v61 = vld [vmem:[%s0 + $0xbc] sm:$0xf]
  %v62 = vld [vmem:[%s0 + $0xc0] sm:$0xf]
  %v63 = vld [vmem:[%s0 + $0xc4] sm:$0xf]
  %v64 = vld [vmem:[%s0 + $0xc8] sm:$0xf]
  %v65 = vld [vmem:[%s0 + $0xcc] sm:$0xf]
  %v66 = vld [vmem:[%s0 + $0xd0] sm:$0xf]
  %v67 = vld [vmem:[%s0 + $0xd4] sm:$0xf]
  %v68 = vld [vmem:[%s0 + $0xd8] sm:$0xf]
  %v69 = vld [vmem:[%s0 + $0xdc] sm:$0xf]
  %v70 = vld [vmem:[%s0 + $0xe0] sm:$0xf]
  %v71 = vld [vmem:[%s0 + $0xe4] sm:$0xf]
  %v72 = vld [vmem:[%s0 + $0xe8] sm:$0xf]
  %v73 = vld [vmem:[%s0 + $0xec] sm:$0xf]
  %v74 = vld [vmem:[%s0 + $0xf0] sm:$0xf]
  %v75 = vld [vmem:[%s0 + $0xf4] sm:$0xf]
  %v76 = vld [vmem:[%s0 + $0xf8] sm:$0xf]
  %v77 = vld [vmem:[%s0 + $0xfc] sm:$0xf]
  %v78 = vld [vmem:[%s1] sm:$0xf]
  %v79 = vld [vmem:[%s1 + $0x4] sm:$0xf]
  %v80 = vld [vmem:[%s1 + $0x8] sm:$0xf]
  %v81 = vld [vmem:[%s1 + $0xc] sm:$0xf]
  %v82 = vld [vmem:[%s1 + $0x10] sm:$0xf]
  %v83 = vld [vmem:[%s1 + $0x14] sm:$0xf]
  %v84 = vld [vmem:[%s1 + $0x18] sm:$0xf]
  %v85 = vld [vmem:[%s1 + $0x1c] sm:$0xf]
  %v86 = vld [vmem:[%s1 + $0x20] sm:$0xf]
  %v87 = vld [vmem:[%s1 + $0x24] sm:$0xf]
  %v88 = vld [vmem:[%s1 + $0x28] sm:$0xf]
  %v89 = vld [vmem:[%s1 + $0x2c] sm:$0xf]
  %v90 = vld [vmem:[%s1 + $0x30] sm:$0xf]
  %v91 = vld [vmem:[%s1 + $0x34] sm:$0xf]
  %v92 = vld [vmem:[%s1 + $0x38] sm:$0xf]
  %v93 = vld [vmem:[%s1 + $0x3c] sm:$0xf]
  %v158 = vunpack.c.l.b16 %v14
  %v159 = vunpack.c.l.b16 %v15
  %v160 = vunpack.c.l.b16 %v16
  %v161 = vunpack.c.l.b16 %v17
  %v162 = vunpack.c.l.b16 %v18
  %v163 = vunpack.c.l.b16 %v19
  %v164 = vunpack.c.l.b16 %v20
  %v165 = vunpack.c.l.b16 %v21
  %v166 = vunpack.c.l.b16 %v22
  %v167 = vunpack.c.l.b16 %v23
  %v168 = vunpack.c.l.b16 %v24
  %v169 = vunpack.c.l.b16 %v25
  %v170 = vunpack.c.l.b16 %v26
  %v171 = vunpack.c.l.b16 %v27
  %v172 = vunpack.c.l.b16 %v28
  %v173 = vunpack.c.l.b16 %v29
  %v174 = vunpack.c.l.b16 %v30
  %v175 = vunpack.c.l.b16 %v31
  %v176 = vunpack.c.l.b16 %v32
  %v177 = vunpack.c.l.b16 %v33
  %v178 = vunpack.c.l.b16 %v34
  %v179 = vunpack.c.l.b16 %v35
  %v180 = vunpack.c.l.b16 %v36
  %v181 = vunpack.c.l.b16 %v37
  %v182 = vunpack.c.l.b16 %v38
  %v183 = vunpack.c.l.b16 %v39
  %v184 = vunpack.c.l.b16 %v40
  %v185 = vunpack.c.l.b16 %v41
  %v186 = vunpack.c.l.b16 %v42
  %v187 = vunpack.c.l.b16 %v43
  %v188 = vunpack.c.l.b16 %v44
  %v189 = vunpack.c.l.b16 %v45
  %v190 = vunpack.c.l.b16 %v46
  %v191 = vunpack.c.l.b16 %v47
  %v192 = vunpack.c.l.b16 %v48
  %v193 = vunpack.c.l.b16 %v49
  %v194 = vunpack.c.l.b16 %v50
  %v195 = vunpack.c.l.b16 %v51
  %v196 = vunpack.c.l.b16 %v52
  %v197 = vunpack.c.l.b16 %v53
  %v198 = vunpack.c.l.b16 %v54
  %v199 = vunpack.c.l.b16 %v55
  %v200 = vunpack.c.l.b16 %v56
  %v201 = vunpack.c.l.b16 %v57
  %v202 = vunpack.c.l.b16 %v58
  %v203 = vunpack.c.l.b16 %v59
  %v204 = vunpack.c.l.b16 %v60
  %v205 = vunpack.c.l.b16 %v61
  %v206 = vunpack.c.l.b16 %v62
  %v207 = vunpack.c.l.b16 %v63
  %v208 = vunpack.c.l.b16 %v64
  %v209 = vunpack.c.l.b16 %v65
  %v210 = vunpack.c.l.b16 %v66
  %v211 = vunpack.c.l.b16 %v67
  %v212 = vunpack.c.l.b16 %v68
  %v213 = vunpack.c.l.b16 %v69
  %v214 = vunpack.c.l.b16 %v70
  %v215 = vunpack.c.l.b16 %v71
  %v216 = vunpack.c.l.b16 %v72
  %v217 = vunpack.c.l.b16 %v73
  %v218 = vunpack.c.l.b16 %v74
  %v219 = vunpack.c.l.b16 %v75
  %v220 = vunpack.c.l.b16 %v76
  %v221 = vunpack.c.l.b16 %v77
  %v222 = vpack.c.b16 %v159, %v158
  %v223 = vpack.c.b16 %v161, %v160
  %v224 = vpack.c.b16 %v163, %v162
  %v225 = vpack.c.b16 %v165, %v164
  %v226 = vpack.c.b16 %v167, %v166
  %v227 = vpack.c.b16 %v169, %v168
  %v228 = vpack.c.b16 %v171, %v170
  %v229 = vpack.c.b16 %v173, %v172
  %v230 = vpack.c.b16 %v175, %v174
  %v231 = vpack.c.b16 %v177, %v176
  %v232 = vpack.c.b16 %v179, %v178
  %v233 = vpack.c.b16 %v181, %v180
  %v234 = vpack.c.b16 %v183, %v182
  %v235 = vpack.c.b16 %v185, %v184
  %v236 = vpack.c.b16 %v187, %v186
  %v237 = vpack.c.b16 %v189, %v188
  %v238 = vpack.c.b16 %v191, %v190
  %v239 = vpack.c.b16 %v193, %v192
  %v240 = vpack.c.b16 %v195, %v194
  %v241 = vpack.c.b16 %v197, %v196
  %v242 = vpack.c.b16 %v199, %v198
  %v243 = vpack.c.b16 %v201, %v200
  %v244 = vpack.c.b16 %v203, %v202
  %v245 = vpack.c.b16 %v205, %v204
  %v246 = vpack.c.b16 %v207, %v206
  %v247 = vpack.c.b16 %v209, %v208
  %v248 = vpack.c.b16 %v211, %v210
  %v249 = vpack.c.b16 %v213, %v212
  %v250 = vpack.c.b16 %v215, %v214
  %v251 = vpack.c.b16 %v217, %v216
  %v252 = vpack.c.b16 %v219, %v218
  %v253 = vpack.c.b16 %v221, %v220
  %v302 = vunpack.c.l.b16 %v78
  %v303 = vunpack.c.l.b16 %v79
  %v304 = vunpack.c.l.b16 %v80
  %v305 = vunpack.c.l.b16 %v81
  %v306 = vunpack.c.l.b16 %v82
  %v307 = vunpack.c.l.b16 %v83
  %v308 = vunpack.c.l.b16 %v84
  %v309 = vunpack.c.l.b16 %v85
  %v310 = vunpack.c.l.b16 %v86
  %v311 = vunpack.c.l.b16 %v87
  %v312 = vunpack.c.l.b16 %v88
  %v313 = vunpack.c.l.b16 %v89
  %v314 = vunpack.c.l.b16 %v90
  %v315 = vunpack.c.l.b16 %v91
  %v316 = vunpack.c.l.b16 %v92
  %v317 = vunpack.c.l.b16 %v93
  %v318 = vpack.c.b16 %v303, %v302
  %v319 = vpack.c.b16 %v305, %v304
  %v320 = vpack.c.b16 %v307, %v306
  %v321 = vpack.c.b16 %v309, %v308
  %v322 = vpack.c.b16 %v311, %v310
  %v323 = vpack.c.b16 %v313, %v312
  %v324 = vpack.c.b16 %v315, %v314
  %v325 = vpack.c.b16 %v317, %v316
  %334 = vmatprep.subr.bf16.mxu0 0
  %335 = vmatpush1.bf16.msra.mxu0 %v318
  %336 = vmatprep.subr.bf16.mxu0 0
  %337 = vmatpush1.bf16.msra.mxu0 %v319
  %338 = vmatprep.subr.bf16.mxu0 0
  %339 = vmatpush1.bf16.msra.mxu0 %v320
  %340 = vmatprep.subr.bf16.mxu0 0
  %341 = vmatpush1.bf16.msra.mxu0 %v321
  %342 = vmatprep.subr.bf16.mxu0 0
  %343 = vmatpush1.bf16.msra.mxu0 %v322
  %344 = vmatprep.subr.bf16.mxu0 0
  %345 = vmatpush1.bf16.msra.mxu0 %v323
  %346 = vmatprep.subr.bf16.mxu0 0
  %347 = vmatpush1.bf16.msra.mxu0 %v324
  %348 = vmatprep.subr.bf16.mxu0 0
  %349 = vmatpush1.bf16.msra.mxu0 %v325
  %350 = vmatprep.subr.bf16.mxu0 0
  %351 = vmatpush1.bf16.msra.mxu0 0
  %352 = vmatprep.subr.bf16.mxu0 0
  %353 = vmatpush1.bf16.msra.mxu0 0
  %354 = vmatprep.subr.bf16.mxu0 0
  %355 = vmatpush1.bf16.msra.mxu0 0
  %356 = vmatprep.subr.bf16.mxu0 0
  %357 = vmatpush1.bf16.msra.mxu0 0
  %358 = vmatprep.subr.bf16.mxu0 0
  %359 = vmatpush1.bf16.msra.mxu0 0
  %360 = vmatprep.subr.bf16.mxu0 0
  %361 = vmatpush1.bf16.msra.mxu0 0
  %362 = vmatprep.subr.bf16.mxu0 0
  %363 = vmatpush1.bf16.msra.mxu0 0
  %364 = vmatprep.subr.bf16.mxu0 0
  %365 = vmatpush1.bf16.msra.mxu0 0
  %366 = vmatprep.mubr.bf16.mxu0 0
  %367 = vmatmul.mubr.bf16.gmra.mrb[0].mxu0 %v222
  %v368 = vpop.f32.mrb[0].mxu0
  %v369 = vadd.f32 0.0, %v368
  %v370 = vpop.f32.mrb[0].mxu0
  %v371 = vpop.f32.mrb[0].mxu0
  %v372 = vadd.f32 0.0, %v371
  %v373 = vpop.f32.mrb[0].mxu0
  %374 = vmatprep.mubr.bf16.mxu0 0
  %375 = vmatmul.mubr.bf16.gmra.mrb[0].mxu0 %v223
  %v376 = vpop.f32.mrb[0].mxu0
  %v377 = vadd.f32 0.0, %v376
  %v378 = vpop.f32.mrb[0].mxu0
  %v379 = vpop.f32.mrb[0].mxu0
  %v380 = vadd.f32 0.0, %v379
  %v381 = vpop.f32.mrb[0].mxu0
  %382 = vmatprep.mubr.bf16.mxu0 0
  %383 = vmatmul.mubr.bf16.gmra.mrb[0].mxu0 %v224
  %v384 = vpop.f32.mrb[0].mxu0
  %v385 = vadd.f32 0.0, %v384
  %v386 = vpop.f32.mrb[0].mxu0
  %v387 = vpop.f32.mrb[0].mxu0
  %v388 = vadd.f32 0.0, %v387
  %v389 = vpop.f32.mrb[0].mxu0
  %390 = vmatprep.mubr.bf16.mxu0 0
  %391 = vmatmul.mubr.bf16.gmra.mrb[0].mxu0 %v225
  %v392 = vpop.f32.mrb[0].mxu0
  %v393 = vadd.f32 0.0, %v392
  %v394 = vpop.f32.mrb[0].mxu0
  %v395 = vpop.f32.mrb[0].mxu0
  %v396 = vadd.f32 0.0, %v395
  %v397 = vpop.f32.mrb[0].mxu0
  %398 = vmatprep.mubr.bf16.mxu0 0
  %399 = vmatmul.mubr.bf16.gmra.mrb[0].mxu0 %v226
  %v400 = vpop.f32.mrb[0].mxu0
  %v401 = vadd.f32 0.0, %v400
  %v402 = vpop.f32.mrb[0].mxu0
  %v403 = vpop.f32.mrb[0].mxu0
  %v404 = vadd.f32 0.0, %v403
  %v405 = vpop.f32.mrb[0].mxu0
  %406 = vmatprep.mubr.bf16.mxu0 0
  %407 = vmatmul.mubr.bf16.gmra.mrb[0].mxu0 %v227
  %v408 = vpop.f32.mrb[0].mxu0
  %v409 = vadd.f32 0.0, %v408
  %v410 = vpop.f32.mrb[0].mxu0
  %v411 = vpop.f32.mrb[0].mxu0
  %v412 = vadd.f32 0.0, %v411
  %v413 = vpop.f32.mrb[0].mxu0
  %414 = vmatprep.mubr.bf16.mxu0 0
  %415 = vmatmul.mubr.bf16.gmra.mrb[0].mxu0 %v228
  %v416 = vpop.f32.mrb[0].mxu0
  %v417 = vadd.f32 0.0, %v416
  %v418 = vpop.f32.mrb[0].mxu0
  %v419 = vpop.f32.mrb[0].mxu0
  %v420 = vadd.f32 0.0, %v419
  %v421 = vpop.f32.mrb[0].mxu0
  %422 = vmatprep.mubr.bf16.mxu0 0
  %423 = vmatmul.mubr.bf16.gmra.mrb[0].mxu0 %v229
  %v424 = vpop.f32.mrb[0].mxu0
  %v425 = vadd.f32 0.0, %v424
  %v426 = vpop.f32.mrb[0].mxu0
  %v427 = vpop.f32.mrb[0].mxu0
  %v428 = vadd.f32 0.0, %v427
  %v429 = vpop.f32.mrb[0].mxu0
  %430 = vmatprep.mubr.bf16.mxu0 0
  %431 = vmatmul.mubr.bf16.gmra.mrb[0].mxu0 %v230
  %v432 = vpop.f32.mrb[0].mxu0
  %v433 = vadd.f32 0.0, %v432
  %v434 = vpop.f32.mrb[0].mxu0
  %v435 = vpop.f32.mrb[0].mxu0
  %v436 = vadd.f32 0.0, %v435
  %v437 = vpop.f32.mrb[0].mxu0
  %438 = vmatprep.mubr.bf16.mxu0 0
  %439 = vmatmul.mubr.bf16.gmra.mrb[0].mxu0 %v231
  %v440 = vpop.f32.mrb[0].mxu0
  %v441 = vadd.f32 0.0, %v440
  %v442 = vpop.f32.mrb[0].mxu0
  %v443 = vpop.f32.mrb[0].mxu0
  %v444 = vadd.f32 0.0, %v443
  %v445 = vpop.f32.mrb[0].mxu0
  %446 = vmatprep.mubr.bf16.mxu0 0
  %447 = vmatmul.mubr.bf16.gmra.mrb[0].mxu0 %v232
  %v448 = vpop.f32.mrb[0].mxu0
  %v449 = vadd.f32 0.0, %v448
  %v450 = vpop.f32.mrb[0].mxu0
  %v451 = vpop.f32.mrb[0].mxu0
  %v452 = vadd.f32 0.0, %v451
  %v453 = vpop.f32.mrb[0].mxu0
  %454 = vmatprep.mubr.bf16.mxu0 0
  %455 = vmatmul.mubr.bf16.gmra.mrb[0].mxu0 %v233
  %v456 = vpop.f32.mrb[0].mxu0
  %v457 = vadd.f32 0.0, %v456
  %v458 = vpop.f32.mrb[0].mxu0
  %v459 = vpop.f32.mrb[0].mxu0
  %v460 = vadd.f32 0.0, %v459
  %v461 = vpop.f32.mrb[0].mxu0
  %462 = vmatprep.mubr.bf16.mxu0 0
  %463 = vmatmul.mubr.bf16.gmra.mrb[0].mxu0 %v234
  %v464 = vpop.f32.mrb[0].mxu0
  %v465 = vadd.f32 0.0, %v464
  %v466 = vpop.f32.mrb[0].mxu0
  %v467 = vpop.f32.mrb[0].mxu0
  %v468 = vadd.f32 0.0, %v467
  %v469 = vpop.f32.mrb[0].mxu0
  %470 = vmatprep.mubr.bf16.mxu0 0
  %471 = vmatmul.mubr.bf16.gmra.mrb[0].mxu0 %v235
  %v472 = vpop.f32.mrb[0].mxu0
  %v473 = vadd.f32 0.0, %v472
  %v474 = vpop.f32.mrb[0].mxu0
  %v475 = vpop.f32.mrb[0].mxu0
  %v476 = vadd.f32 0.0, %v475
  %v477 = vpop.f32.mrb[0].mxu0
  %478 = vmatprep.mubr.bf16.mxu0 0
  %479 = vmatmul.mubr.bf16.gmra.mrb[0].mxu0 %v236
  %v480 = vpop.f32.mrb[0].mxu0
  %v481 = vadd.f32 0.0, %v480
  %v482 = vpop.f32.mrb[0].mxu0
  %v483 = vpop.f32.mrb[0].mxu0
  %v484 = vadd.f32 0.0, %v483
  %v485 = vpop.f32.mrb[0].mxu0
  %486 = vmatprep.mubr.bf16.mxu0 0
  %487 = vmatmul.mubr.bf16.gmra.mrb[0].mxu0 %v237
  %v488 = vpop.f32.mrb[0].mxu0
  %v489 = vadd.f32 0.0, %v488
  %v490 = vpop.f32.mrb[0].mxu0
  %v491 = vpop.f32.mrb[0].mxu0
  %v492 = vadd.f32 0.0, %v491
  %v493 = vpop.f32.mrb[0].mxu0
  %494 = vmatprep.mubr.bf16.mxu0 0
  %495 = vmatmul.mubr.bf16.gmra.mrb[0].mxu0 %v238
  %v496 = vpop.f32.mrb[0].mxu0
  %v497 = vadd.f32 0.0, %v496
  %v498 = vpop.f32.mrb[0].mxu0
  %v499 = vpop.f32.mrb[0].mxu0
  %v500 = vadd.f32 0.0, %v499
  %v501 = vpop.f32.mrb[0].mxu0
  %502 = vmatprep.mubr.bf16.mxu0 0
  %503 = vmatmul.mubr.bf16.gmra.mrb[0].mxu0 %v239
  %v504 = vpop.f32.mrb[0].mxu0
  %v505 = vadd.f32 0.0, %v504
  %v506 = vpop.f32.mrb[0].mxu0
  %v507 = vpop.f32.mrb[0].mxu0
  %v508 = vadd.f32 0.0, %v507
  %v509 = vpop.f32.mrb[0].mxu0
  %510 = vmatprep.mubr.bf16.mxu0 0
  %511 = vmatmul.mubr.bf16.gmra.mrb[0].mxu0 %v240
  %v512 = vpop.f32.mrb[0].mxu0
  %v513 = vadd.f32 0.0, %v512
  %v514 = vpop.f32.mrb[0].mxu0
  %v515 = vpop.f32.mrb[0].mxu0
  %v516 = vadd.f32 0.0, %v515
  %v517 = vpop.f32.mrb[0].mxu0
  %518 = vmatprep.mubr.bf16.mxu0 0
  %519 = vmatmul.mubr.bf16.gmra.mrb[0].mxu0 %v241
  %v520 = vpop.f32.mrb[0].mxu0
  %v521 = vadd.f32 0.0, %v520
  %v522 = vpop.f32.mrb[0].mxu0
  %v523 = vpop.f32.mrb[0].mxu0
  %v524 = vadd.f32 0.0, %v523
  %v525 = vpop.f32.mrb[0].mxu0
  %526 = vmatprep.mubr.bf16.mxu0 0
  %527 = vmatmul.mubr.bf16.gmra.mrb[0].mxu0 %v242
  %v528 = vpop.f32.mrb[0].mxu0
  %v529 = vadd.f32 0.0, %v528
  %v530 = vpop.f32.mrb[0].mxu0
  %v531 = vpop.f32.mrb[0].mxu0
  %v532 = vadd.f32 0.0, %v531
  %v533 = vpop.f32.mrb[0].mxu0
  %534 = vmatprep.mubr.bf16.mxu0 0
  %535 = vmatmul.mubr.bf16.gmra.mrb[0].mxu0 %v243
  %v536 = vpop.f32.mrb[0].mxu0
  %v537 = vadd.f32 0.0, %v536
  %v538 = vpop.f32.mrb[0].mxu0
  %v539 = vpop.f32.mrb[0].mxu0
  %v540 = vadd.f32 0.0, %v539
  %v541 = vpop.f32.mrb[0].mxu0
  %542 = vmatprep.mubr.bf16.mxu0 0
  %543 = vmatmul.mubr.bf16.gmra.mrb[0].mxu0 %v244
  %v544 = vpop.f32.mrb[0].mxu0
  %v545 = vadd.f32 0.0, %v544
  %v546 = vpop.f32.mrb[0].mxu0
  %v547 = vpop.f32.mrb[0].mxu0
  %v548 = vadd.f32 0.0, %v547
  %v549 = vpop.f32.mrb[0].mxu0
  %550 = vmatprep.mubr.bf16.mxu0 0
  %551 = vmatmul.mubr.bf16.gmra.mrb[0].mxu0 %v245
  %v552 = vpop.f32.mrb[0].mxu0
  %v553 = vadd.f32 0.0, %v552
  %v554 = vpop.f32.mrb[0].mxu0
  %v555 = vpop.f32.mrb[0].mxu0
  %v556 = vadd.f32 0.0, %v555
  %v557 = vpop.f32.mrb[0].mxu0
  %558 = vmatprep.mubr.bf16.mxu0 0
  %559 = vmatmul.mubr.bf16.gmra.mrb[0].mxu0 %v246
  %v560 = vpop.f32.mrb[0].mxu0
  %v561 = vadd.f32 0.0, %v560
  %v562 = vpop.f32.mrb[0].mxu0
  %v563 = vpop.f32.mrb[0].mxu0
  %v564 = vadd.f32 0.0, %v563
  %v565 = vpop.f32.mrb[0].mxu0
  %566 = vmatprep.mubr.bf16.mxu0 0
  %567 = vmatmul.mubr.bf16.gmra.mrb[0].mxu0 %v247
  %v568 = vpop.f32.mrb[0].mxu0
  %v569 = vadd.f32 0.0, %v568
  %v570 = vpop.f32.mrb[0].mxu0
  %v571 = vpop.f32.mrb[0].mxu0
  %v572 = vadd.f32 0.0, %v571
  %v573 = vpop.f32.mrb[0].mxu0
  %574 = vmatprep.mubr.bf16.mxu0 0
  %575 = vmatmul.mubr.bf16.gmra.mrb[0].mxu0 %v248
  %v576 = vpop.f32.mrb[0].mxu0
  %v577 = vadd.f32 0.0, %v576
  %v578 = vpop.f32.mrb[0].mxu0
  %v579 = vpop.f32.mrb[0].mxu0
  %v580 = vadd.f32 0.0, %v579
  %v581 = vpop.f32.mrb[0].mxu0
  %582 = vmatprep.mubr.bf16.mxu0 0
  %583 = vmatmul.mubr.bf16.gmra.mrb[0].mxu0 %v249
  %v584 = vpop.f32.mrb[0].mxu0
  %v585 = vadd.f32 0.0, %v584
  %v586 = vpop.f32.mrb[0].mxu0
  %v587 = vpop.f32.mrb[0].mxu0
  %v588 = vadd.f32 0.0, %v587
  %v589 = vpop.f32.mrb[0].mxu0
  %590 = vmatprep.mubr.bf16.mxu0 0
  %591 = vmatmul.mubr.bf16.gmra.mrb[0].mxu0 %v250
  %v592 = vpop.f32.mrb[0].mxu0
  %v593 = vadd.f32 0.0, %v592
  %v594 = vpop.f32.mrb[0].mxu0
  %v595 = vpop.f32.mrb[0].mxu0
  %v596 = vadd.f32 0.0, %v595
  %v597 = vpop.f32.mrb[0].mxu0
  %598 = vmatprep.mubr.bf16.mxu0 0
  %599 = vmatmul.mubr.bf16.gmra.mrb[0].mxu0 %v251
  %v600 = vpop.f32.mrb[0].mxu0
  %v601 = vadd.f32 0.0, %v600
  %v602 = vpop.f32.mrb[0].mxu0
  %v603 = vpop.f32.mrb[0].mxu0
  %v604 = vadd.f32 0.0, %v603
  %v605 = vpop.f32.mrb[0].mxu0
  %606 = vmatprep.mubr.bf16.mxu0 0
  %607 = vmatmul.mubr.bf16.gmra.mrb[0].mxu0 %v252
  %v608 = vpop.f32.mrb[0].mxu0
  %v609 = vadd.f32 0.0, %v608
  %v610 = vpop.f32.mrb[0].mxu0
  %v611 = vpop.f32.mrb[0].mxu0
  %v612 = vadd.f32 0.0, %v611
  %v613 = vpop.f32.mrb[0].mxu0
  %614 = vmatprep.mubr.bf16.mxu0 0
  %615 = vmatmul.mubr.bf16.gmra.mrb[0].mxu0 %v253
  %v616 = vpop.f32.mrb[0].mxu0
  %v617 = vadd.f32 0.0, %v616
  %v618 = vpop.f32.mrb[0].mxu0
  %v619 = vpop.f32.mrb[0].mxu0
  %v620 = vadd.f32 0.0, %v619
  %v621 = vpop.f32.mrb[0].mxu0
  %622 = vdwg.mxu0
  %623 = vst [vmem:[%s2] sm:$0xff] %v369
  %624 = vst [vmem:[%s2 + $0x8] sm:$0xff] %v372
  %625 = vst [vmem:[%s2 + $0x10] sm:$0xff] %v377
  %626 = vst [vmem:[%s2 + $0x18] sm:$0xff] %v380
  %627 = vst [vmem:[%s2 + $0x20] sm:$0xff] %v385
  %628 = vst [vmem:[%s2 + $0x28] sm:$0xff] %v388
  %629 = vst [vmem:[%s2 + $0x30] sm:$0xff] %v393
  %630 = vst [vmem:[%s2 + $0x38] sm:$0xff] %v396
  %631 = vst [vmem:[%s2 + $0x40] sm:$0xff] %v401
  %632 = vst [vmem:[%s2 + $0x48] sm:$0xff] %v404
  %633 = vst [vmem:[%s2 + $0x50] sm:$0xff] %v409
  %634 = vst [vmem:[%s2 + $0x58] sm:$0xff] %v412
  %635 = vst [vmem:[%s2 + $0x60] sm:$0xff] %v417
  %636 = vst [vmem:[%s2 + $0x68] sm:$0xff] %v420
  %637 = vst [vmem:[%s2 + $0x70] sm:$0xff] %v425
  %638 = vst [vmem:[%s2 + $0x78] sm:$0xff] %v428
  %639 = vst [vmem:[%s2 + $0x80] sm:$0xff] %v433
  %640 = vst [vmem:[%s2 + $0x88] sm:$0xff] %v436
  %641 = vst [vmem:[%s2 + $0x90] sm:$0xff] %v441
  %642 = vst [vmem:[%s2 + $0x98] sm:$0xff] %v444
  %643 = vst [vmem:[%s2 + $0xa0] sm:$0xff] %v449
  %644 = vst [vmem:[%s2 + $0xa8] sm:$0xff] %v452
  %645 = vst [vmem:[%s2 + $0xb0] sm:$0xff] %v457
  %646 = vst [vmem:[%s2 + $0xb8] sm:$0xff] %v460
  %647 = vst [vmem:[%s2 + $0xc0] sm:$0xff] %v465
  %648 = vst [vmem:[%s2 + $0xc8] sm:$0xff] %v468
  %649 = vst [vmem:[%s2 + $0xd0] sm:$0xff] %v473
  %650 = vst [vmem:[%s2 + $0xd8] sm:$0xff] %v476
  %651 = vst [vmem:[%s2 + $0xe0] sm:$0xff] %v481
  %652 = vst [vmem:[%s2 + $0xe8] sm:$0xff] %v484
  %653 = vst [vmem:[%s2 + $0xf0] sm:$0xff] %v489
  %654 = vst [vmem:[%s2 + $0xf8] sm:$0xff] %v492
  %655 = vst [vmem:[%s2 + $0x100] sm:$0xff] %v497
  %656 = vst [vmem:[%s2 + $0x108] sm:$0xff] %v500
  %657 = vst [vmem:[%s2 + $0x110] sm:$0xff] %v505
  %658 = vst [vmem:[%s2 + $0x118] sm:$0xff] %v508
  %659 = vst [vmem:[%s2 + $0x120] sm:$0xff] %v513
  %660 = vst [vmem:[%s2 + $0x128] sm:$0xff] %v516
  %661 = vst [vmem:[%s2 + $0x130] sm:$0xff] %v521
  %662 = vst [vmem:[%s2 + $0x138] sm:$0xff] %v524
  %663 = vst [vmem:[%s2 + $0x140] sm:$0xff] %v529
  %664 = vst [vmem:[%s2 + $0x148] sm:$0xff] %v532
  %665 = vst [vmem:[%s2 + $0x150] sm:$0xff] %v537
  %666 = vst [vmem:[%s2 + $0x158] sm:$0xff] %v540
  %667 = vst [vmem:[%s2 + $0x160] sm:$0xff] %v545
  %668 = vst [vmem:[%s2 + $0x168] sm:$0xff] %v548
  %669 = vst [vmem:[%s2 + $0x170] sm:$0xff] %v553
  %670 = vst [vmem:[%s2 + $0x178] sm:$0xff] %v556
  %671 = vst [vmem:[%s2 + $0x180] sm:$0xff] %v561
  %672 = vst [vmem:[%s2 + $0x188] sm:$0xff] %v564
  %673 = vst [vmem:[%s2 + $0x190] sm:$0xff] %v569
  %674 = vst [vmem:[%s2 + $0x198] sm:$0xff] %v572
  %675 = vst [vmem:[%s2 + $0x1a0] sm:$0xff] %v577
  %676 = vst [vmem:[%s2 + $0x1a8] sm:$0xff] %v580
  %677 = vst [vmem:[%s2 + $0x1b0] sm:$0xff] %v585
  %678 = vst [vmem:[%s2 + $0x1b8] sm:$0xff] %v588
  %679 = vst [vmem:[%s2 + $0x1c0] sm:$0xff] %v593
  %680 = vst [vmem:[%s2 + $0x1c8] sm:$0xff] %v596
  %681 = vst [vmem:[%s2 + $0x1d0] sm:$0xff] %v601
  %682 = vst [vmem:[%s2 + $0x1d8] sm:$0xff] %v604
  %683 = vst [vmem:[%s2 + $0x1e0] sm:$0xff] %v609
  %684 = vst [vmem:[%s2 + $0x1e8] sm:$0xff] %v612
  %685 = vst [vmem:[%s2 + $0x1f0] sm:$0xff] %v617
  %686 = vst [vmem:[%s2 + $0x1f8] sm:$0xff] %v620
  %v687 = vadd.f32 %v369, %v372
  %v688 = vadd.f32 %v687, %v377
  %v689 = vadd.f32 %v688, %v380
  %v690 = vadd.f32 %v689, %v385
  %v691 = vadd.f32 %v690, %v388
  %v692 = vadd.f32 %v691, %v393
  %v693 = vadd.f32 %v692, %v396
  %v694 = vadd.f32 %v693, %v401
  %v695 = vadd.f32 %v694, %v404
  %v696 = vadd.f32 %v695, %v409
  %v697 = vadd.f32 %v696, %v412
  %v698 = vadd.f32 %v697, %v417
  %v699 = vadd.f32 %v698, %v420
  %v700 = vadd.f32 %v699, %v425
  %v701 = vadd.f32 %v700, %v428
  %v702 = vadd.f32 %v701, %v433
  %v703 = vadd.f32 %v702, %v436
  %v704 = vadd.f32 %v703, %v441
  %v705 = vadd.f32 %v704, %v444
  %v706 = vadd.f32 %v705, %v449
  %v707 = vadd.f32 %v706, %v452
  %v708 = vadd.f32 %v707, %v457
  %v709 = vadd.f32 %v708, %v460
  %v710 = vadd.f32 %v709, %v465
  %v711 = vadd.f32 %v710, %v468
  %v712 = vadd.f32 %v711, %v473
  %v713 = vadd.f32 %v712, %v476
  %v714 = vadd.f32 %v713, %v481
  %v715 = vadd.f32 %v714, %v484
  %v716 = vadd.f32 %v715, %v489
  %v717 = vadd.f32 %v716, %v492
  %v718 = vadd.f32 %v717, %v497
  %v719 = vadd.f32 %v718, %v500
  %v720 = vadd.f32 %v719, %v505
  %v721 = vadd.f32 %v720, %v508
  %v722 = vadd.f32 %v721, %v513
  %v723 = vadd.f32 %v722, %v516
  %v724 = vadd.f32 %v723, %v521
  %v725 = vadd.f32 %v724, %v524
  %v726 = vadd.f32 %v725, %v529
  %v727 = vadd.f32 %v726, %v532
  %v728 = vadd.f32 %v727, %v537
  %v729 = vadd.f32 %v728, %v540
  %v730 = vadd.f32 %v729, %v545
  %v731 = vadd.f32 %v730, %v548
  %v732 = vadd.f32 %v731, %v553
  %v733 = vadd.f32 %v732, %v556
  %v734 = vadd.f32 %v733, %v561
  %v735 = vadd.f32 %v734, %v564
  %v736 = vadd.f32 %v735, %v569
  %v737 = vadd.f32 %v736, %v572
  %v738 = vadd.f32 %v737, %v577
  %v739 = vadd.f32 %v738, %v580
  %v740 = vadd.f32 %v739, %v585
  %v741 = vadd.f32 %v740, %v588
  %v742 = vadd.f32 %v741, %v593
  %v743 = vadd.f32 %v742, %v596
  %v744 = vadd.f32 %v743, %v601
  %v745 = vadd.f32 %v744, %v604
  %v746 = vadd.f32 %v745, %v609
  %v747 = vadd.f32 %v746, %v612
  %v748 = vadd.f32 %v747, %v617
  %v749 = vadd.f32 %v748, %v620
  %v750 = vrot.slane %v749, 4
  %v751 = vadd.f32 %v749, %v750
  %v752 = vrot.slane %v751, 2
  %v753 = vadd.f32 %v751, %v752
  %v754 = vrot.slane %v753, 1
  %v755 = vadd.f32 %v753, %v754
  %v756 = vmul.f32 %v369, %v369
  %v757 = vmul.f32 %v372, %v372
  %v758 = vmul.f32 %v377, %v377
  %v759 = vmul.f32 %v380, %v380
  %v760 = vmul.f32 %v385, %v385
  %v761 = vmul.f32 %v388, %v388
  %v762 = vmul.f32 %v393, %v393
  %v763 = vmul.f32 %v396, %v396
  %v764 = vmul.f32 %v401, %v401
  %v765 = vmul.f32 %v404, %v404
  %v766 = vmul.f32 %v409, %v409
  %v767 = vmul.f32 %v412, %v412
  %v768 = vmul.f32 %v417, %v417
  %v769 = vmul.f32 %v420, %v420
  %v770 = vmul.f32 %v425, %v425
  %v771 = vmul.f32 %v428, %v428
  %v772 = vmul.f32 %v433, %v433
  %v773 = vmul.f32 %v436, %v436
  %v774 = vmul.f32 %v441, %v441
  %v775 = vmul.f32 %v444, %v444
  %v776 = vmul.f32 %v449, %v449
  %v777 = vmul.f32 %v452, %v452
  %v778 = vmul.f32 %v457, %v457
  %v779 = vmul.f32 %v460, %v460
  %v780 = vmul.f32 %v465, %v465
  %v781 = vmul.f32 %v468, %v468
  %v782 = vmul.f32 %v473, %v473
  %v783 = vmul.f32 %v476, %v476
  %v784 = vmul.f32 %v481, %v481
  %v785 = vmul.f32 %v484, %v484
  %v786 = vmul.f32 %v489, %v489
  %v787 = vmul.f32 %v492, %v492
  %v788 = vmul.f32 %v497, %v497
  %v789 = vmul.f32 %v500, %v500
  %v790 = vmul.f32 %v505, %v505
  %v791 = vmul.f32 %v508, %v508
  %v792 = vmul.f32 %v513, %v513
  %v793 = vmul.f32 %v516, %v516
  %v794 = vmul.f32 %v521, %v521
  %v795 = vmul.f32 %v524, %v524
  %v796 = vmul.f32 %v529, %v529
  %v797 = vmul.f32 %v532, %v532
  %v798 = vmul.f32 %v537, %v537
  %v799 = vmul.f32 %v540, %v540
  %v800 = vmul.f32 %v545, %v545
  %v801 = vmul.f32 %v548, %v548
  %v802 = vmul.f32 %v553, %v553
  %v803 = vmul.f32 %v556, %v556
  %v804 = vmul.f32 %v561, %v561
  %v805 = vmul.f32 %v564, %v564
  %v806 = vmul.f32 %v569, %v569
  %v807 = vmul.f32 %v572, %v572
  %v808 = vmul.f32 %v577, %v577
  %v809 = vmul.f32 %v580, %v580
  %v810 = vmul.f32 %v585, %v585
  %v811 = vmul.f32 %v588, %v588
  %v812 = vmul.f32 %v593, %v593
  %v813 = vmul.f32 %v596, %v596
  %v814 = vmul.f32 %v601, %v601
  %v815 = vmul.f32 %v604, %v604
  %v816 = vmul.f32 %v609, %v609
  %v817 = vmul.f32 %v612, %v612
  %v818 = vmul.f32 %v617, %v617
  %v819 = vmul.f32 %v620, %v620
  %v820 = vadd.f32 %v756, %v757
  %v821 = vadd.f32 %v820, %v758
  %v822 = vadd.f32 %v821, %v759
  %v823 = vadd.f32 %v822, %v760
  %v824 = vadd.f32 %v823, %v761
  %v825 = vadd.f32 %v824, %v762
  %v826 = vadd.f32 %v825, %v763
  %v827 = vadd.f32 %v826, %v764
  %v828 = vadd.f32 %v827, %v765
  %v829 = vadd.f32 %v828, %v766
  %v830 = vadd.f32 %v829, %v767
  %v831 = vadd.f32 %v830, %v768
  %v832 = vadd.f32 %v831, %v769
  %v833 = vadd.f32 %v832, %v770
  %v834 = vadd.f32 %v833, %v771
  %v835 = vadd.f32 %v834, %v772
  %v836 = vadd.f32 %v835, %v773
  %v837 = vadd.f32 %v836, %v774
  %v838 = vadd.f32 %v837, %v775
  %v839 = vadd.f32 %v838, %v776
  %v840 = vadd.f32 %v839, %v777
  %v841 = vadd.f32 %v840, %v778
  %v842 = vadd.f32 %v841, %v779
  %v843 = vadd.f32 %v842, %v780
  %v844 = vadd.f32 %v843, %v781
  %v845 = vadd.f32 %v844, %v782
  %v846 = vadd.f32 %v845, %v783
  %v847 = vadd.f32 %v846, %v784
  %v848 = vadd.f32 %v847, %v785
  %v849 = vadd.f32 %v848, %v786
  %v850 = vadd.f32 %v849, %v787
  %v851 = vadd.f32 %v850, %v788
  %v852 = vadd.f32 %v851, %v789
  %v853 = vadd.f32 %v852, %v790
  %v854 = vadd.f32 %v853, %v791
  %v855 = vadd.f32 %v854, %v792
  %v856 = vadd.f32 %v855, %v793
  %v857 = vadd.f32 %v856, %v794
  %v858 = vadd.f32 %v857, %v795
  %v859 = vadd.f32 %v858, %v796
  %v860 = vadd.f32 %v859, %v797
  %v861 = vadd.f32 %v860, %v798
  %v862 = vadd.f32 %v861, %v799
  %v863 = vadd.f32 %v862, %v800
  %v864 = vadd.f32 %v863, %v801
  %v865 = vadd.f32 %v864, %v802
  %v866 = vadd.f32 %v865, %v803
  %v867 = vadd.f32 %v866, %v804
  %v868 = vadd.f32 %v867, %v805
  %v869 = vadd.f32 %v868, %v806
  %v870 = vadd.f32 %v869, %v807
  %v871 = vadd.f32 %v870, %v808
  %v872 = vadd.f32 %v871, %v809
  %v873 = vadd.f32 %v872, %v810
  %v874 = vadd.f32 %v873, %v811
  %v875 = vadd.f32 %v874, %v812
  %v876 = vadd.f32 %v875, %v813
  %v877 = vadd.f32 %v876, %v814
  %v878 = vadd.f32 %v877, %v815
  %v879 = vadd.f32 %v878, %v816
  %v880 = vadd.f32 %v879, %v817
  %v881 = vadd.f32 %v880, %v818
  %v882 = vadd.f32 %v881, %v819
  %v883 = vrot.slane %v882, 4
  %v884 = vadd.f32 %v882, %v883
  %v885 = vrot.slane %v884, 2
  %v886 = vadd.f32 %v884, %v885
  %v887 = vrot.slane %v886, 1
  %v888 = vadd.f32 %v886, %v887
  %vm889 = vcmask 1040384
  %v890 = vsel %vm889, %v755, %v888
  %891 = vst [vmem:[%s3] sm:$0x3] %v890
  // Predicated region
  $region10: #{_lambda_.28} parent=0 // pred_check
    _
  $region11: #{_lambda_.28} parent=0 // pred_check_branch
    %893 = sbr.rel (0) target = $region13
  $region12: #{_lambda_.28} parent=0 // pred_region
    _
  $region13: #{_lambda_.28} parent=0 // pred_fallthru
    _
  // Predicated region
  $region14: #{_lambda_.28} parent=0 // pred_check
    _
  $region15: #{_lambda_.28} parent=0 // pred_check_branch
    %895 = sbr.rel (0) target = $region17
  $region16: #{_lambda_.28} parent=0 // pred_region
    _
  $region17: #{_lambda_.28} parent=0 // pred_fallthru
    _
  // Predicated region
  $region18: #{_lambda_.28} parent=0 // pred_check
    _
  $region19: #{_lambda_.28} parent=0 // pred_check_branch
    %897 = sbr.rel (0) target = $region21
  $region20: #{_lambda_.28} parent=0 // pred_region
    _
  $region21: #{_lambda_.28} parent=0 // pred_fallthru
    _
  // Predicated region
  $region22: #{_lambda_.28} parent=0 // pred_check
    _
  $region23: #{_lambda_.28} parent=0 // pred_check_branch
    %899 = sbr.rel (0) target = $region25
  $region24: #{_lambda_.28} parent=0 // pred_region
    _
  $region25: #{_lambda_.28} parent=0 // pred_fallthru
    _

// kernel: _lambda_.32
$region0: #{_lambda_.32}
  #allocation0 [shape = 'u32[]', space=smem, size = 0x4, offset = 0x4, fixed_abs, tag = 'smem constant byte address 0x4 - core index']
  #allocation1 [shape = 'u32[144,128]{1,0:T(1,128)}', space=vmem, size = 0x12000, scoped, tag = 'internal scratch']
  %s0 = inlined_call_operand.vmem [shape: f32[512,128], index: 0, kind: input, shape index: {}]
  %s1 = inlined_call_operand.vmem [shape: f32[1,128], index: 1, kind: input, shape index: {}]
  %s2 = inlined_call_operand.vmem [shape: f32[1,128], index: 2, kind: input, shape index: {}]
  %s3 = inlined_call_operand.vmem [shape: bf16[512,128], index: 3, kind: output, shape index: {}]
  %s4 = sld [smem:[#allocation0]]
  $region22: #{_lambda_.32} parent=0
    _
  %s6 = ssub.s32 1, %s4
  %s7 = scalar_select 0, %s6, %s4
  // Predicated region
  $region2: #{_lambda_.32} parent=0 // pred_check
    _
  $region3: #{_lambda_.32} parent=0 // pred_check_branch
    %9 = sbr.rel (0) target = $region5
  $region4: #{_lambda_.32} parent=0 // pred_region
    _
  $region5: #{_lambda_.32} parent=0 // pred_fallthru
    _
  // Predicated region
  $region6: #{_lambda_.32} parent=0 // pred_check
    _
  $region7: #{_lambda_.32} parent=0 // pred_check_branch
    %11 = sbr.rel (0) target = $region9
  $region8: #{_lambda_.32} parent=0 // pred_region
    _
  $region9: #{_lambda_.32} parent=0 // pred_fallthru
    _
  // Predicated region
  $region10: #{_lambda_.32} parent=0 // pred_check
    _
  $region11: #{_lambda_.32} parent=0 // pred_check_branch
    %13 = sbr.rel (0) target = $region13
  $region12: #{_lambda_.32} parent=0 // pred_region
    _
  $region13: #{_lambda_.32} parent=0 // pred_fallthru
    _
  %v14 = vld [vmem:[%s0] sm:$0xff]
  %v15 = vld [vmem:[%s0 + $0x8] sm:$0xff]
  %v16 = vld [vmem:[%s0 + $0x10] sm:$0xff]
  %v17 = vld [vmem:[%s0 + $0x18] sm:$0xff]
  %v18 = vld [vmem:[%s0 + $0x20] sm:$0xff]
  %v19 = vld [vmem:[%s0 + $0x28] sm:$0xff]
  %v20 = vld [vmem:[%s0 + $0x30] sm:$0xff]
  %v21 = vld [vmem:[%s0 + $0x38] sm:$0xff]
  %v22 = vld [vmem:[%s0 + $0x40] sm:$0xff]
  %v23 = vld [vmem:[%s0 + $0x48] sm:$0xff]
  %v24 = vld [vmem:[%s0 + $0x50] sm:$0xff]
  %v25 = vld [vmem:[%s0 + $0x58] sm:$0xff]
  %v26 = vld [vmem:[%s0 + $0x60] sm:$0xff]
  %v27 = vld [vmem:[%s0 + $0x68] sm:$0xff]
  %v28 = vld [vmem:[%s0 + $0x70] sm:$0xff]
  %v29 = vld [vmem:[%s0 + $0x78] sm:$0xff]
  %v30 = vld [vmem:[%s0 + $0x80] sm:$0xff]
  %v31 = vld [vmem:[%s0 + $0x88] sm:$0xff]
  %v32 = vld [vmem:[%s0 + $0x90] sm:$0xff]
  %v33 = vld [vmem:[%s0 + $0x98] sm:$0xff]
  %v34 = vld [vmem:[%s0 + $0xa0] sm:$0xff]
  %v35 = vld [vmem:[%s0 + $0xa8] sm:$0xff]
  %v36 = vld [vmem:[%s0 + $0xb0] sm:$0xff]
  %v37 = vld [vmem:[%s0 + $0xb8] sm:$0xff]
  %v38 = vld [vmem:[%s0 + $0xc0] sm:$0xff]
  %v39 = vld [vmem:[%s0 + $0xc8] sm:$0xff]
  %v40 = vld [vmem:[%s0 + $0xd0] sm:$0xff]
  %v41 = vld [vmem:[%s0 + $0xd8] sm:$0xff]
  %v42 = vld [vmem:[%s0 + $0xe0] sm:$0xff]
  %v43 = vld [vmem:[%s0 + $0xe8] sm:$0xff]
  %v44 = vld [vmem:[%s0 + $0xf0] sm:$0xff]
  %v45 = vld [vmem:[%s0 + $0xf8] sm:$0xff]
  %v46 = vld [vmem:[%s0 + $0x100] sm:$0xff]
  %v47 = vld [vmem:[%s0 + $0x108] sm:$0xff]
  %v48 = vld [vmem:[%s0 + $0x110] sm:$0xff]
  %v49 = vld [vmem:[%s0 + $0x118] sm:$0xff]
  %v50 = vld [vmem:[%s0 + $0x120] sm:$0xff]
  %v51 = vld [vmem:[%s0 + $0x128] sm:$0xff]
  %v52 = vld [vmem:[%s0 + $0x130] sm:$0xff]
  %v53 = vld [vmem:[%s0 + $0x138] sm:$0xff]
  %v54 = vld [vmem:[%s0 + $0x140] sm:$0xff]
  %v55 = vld [vmem:[%s0 + $0x148] sm:$0xff]
  %v56 = vld [vmem:[%s0 + $0x150] sm:$0xff]
  %v57 = vld [vmem:[%s0 + $0x158] sm:$0xff]
  %v58 = vld [vmem:[%s0 + $0x160] sm:$0xff]
  %v59 = vld [vmem:[%s0 + $0x168] sm:$0xff]
  %v60 = vld [vmem:[%s0 + $0x170] sm:$0xff]
  %v61 = vld [vmem:[%s0 + $0x178] sm:$0xff]
  %v62 = vld [vmem:[%s0 + $0x180] sm:$0xff]
  %v63 = vld [vmem:[%s0 + $0x188] sm:$0xff]
  %v64 = vld [vmem:[%s0 + $0x190] sm:$0xff]
  %v65 = vld [vmem:[%s0 + $0x198] sm:$0xff]
  %v66 = vld [vmem:[%s0 + $0x1a0] sm:$0xff]
  %v67 = vld [vmem:[%s0 + $0x1a8] sm:$0xff]
  %v68 = vld [vmem:[%s0 + $0x1b0] sm:$0xff]
  %v69 = vld [vmem:[%s0 + $0x1b8] sm:$0xff]
  %v70 = vld [vmem:[%s0 + $0x1c0] sm:$0xff]
  %v71 = vld [vmem:[%s0 + $0x1c8] sm:$0xff]
  %v72 = vld [vmem:[%s0 + $0x1d0] sm:$0xff]
  %v73 = vld [vmem:[%s0 + $0x1d8] sm:$0xff]
  %v74 = vld [vmem:[%s0 + $0x1e0] sm:$0xff]
  %v75 = vld [vmem:[%s0 + $0x1e8] sm:$0xff]
  %v76 = vld [vmem:[%s0 + $0x1f0] sm:$0xff]
  %v77 = vld [vmem:[%s0 + $0x1f8] sm:$0xff]
  %v78 = vld [vmem:[%s1] sm:$0x1]
  %v80 = vlaneseq
  %v81 = vshrl.u32 %v80, 7
  %v82 = vsub.s32 0, %v81
  %v83 = vrot.slane %v78, %v82
  %v85 = vmul.f32 %v14, %v83
  %v86 = vmul.f32 %v15, %v83
  %v87 = vmul.f32 %v16, %v83
  %v88 = vmul.f32 %v17, %v83
  %v89 = vmul.f32 %v18, %v83
  %v90 = vmul.f32 %v19, %v83
  %v91 = vmul.f32 %v20, %v83
  %v92 = vmul.f32 %v21, %v83
  %v93 = vmul.f32 %v22, %v83
  %v94 = vmul.f32 %v23, %v83
  %v95 = vmul.f32 %v24, %v83
  %v96 = vmul.f32 %v25, %v83
  %v97 = vmul.f32 %v26, %v83
  %v98 = vmul.f32 %v27, %v83
  %v99 = vmul.f32 %v28, %v83
  %v100 = vmul.f32 %v29, %v83
  %v101 = vmul.f32 %v30, %v83
  %v102 = vmul.f32 %v31, %v83
  %v103 = vmul.f32 %v32, %v83
  %v104 = vmul.f32 %v33, %v83
  %v105 = vmul.f32 %v34, %v83
  %v106 = vmul.f32 %v35, %v83
  %v107 = vmul.f32 %v36, %v83
  %v108 = vmul.f32 %v37, %v83
  %v109 = vmul.f32 %v38, %v83
  %v110 = vmul.f32 %v39, %v83
  %v111 = vmul.f32 %v40, %v83
  %v112 = vmul.f32 %v41, %v83
  %v113 = vmul.f32 %v42, %v83
  %v114 = vmul.f32 %v43, %v83
  %v115 = vmul.f32 %v44, %v83
  %v116 = vmul.f32 %v45, %v83
  %v117 = vmul.f32 %v46, %v83
  %v118 = vmul.f32 %v47, %v83
  %v119 = vmul.f32 %v48, %v83
  %v120 = vmul.f32 %v49, %v83
  %v121 = vmul.f32 %v50, %v83
  %v122 = vmul.f32 %v51, %v83
  %v123 = vmul.f32 %v52, %v83
  %v124 = vmul.f32 %v53, %v83
  %v125 = vmul.f32 %v54, %v83
  %v126 = vmul.f32 %v55, %v83
  %v127 = vmul.f32 %v56, %v83
  %v128 = vmul.f32 %v57, %v83
  %v129 = vmul.f32 %v58, %v83
  %v130 = vmul.f32 %v59, %v83
  %v131 = vmul.f32 %v60, %v83
  %v132 = vmul.f32 %v61, %v83
  %v133 = vmul.f32 %v62, %v83
  %v134 = vmul.f32 %v63, %v83
  %v135 = vmul.f32 %v64, %v83
  %v136 = vmul.f32 %v65, %v83
  %v137 = vmul.f32 %v66, %v83
  %v138 = vmul.f32 %v67, %v83
  %v139 = vmul.f32 %v68, %v83
  %v140 = vmul.f32 %v69, %v83
  %v141 = vmul.f32 %v70, %v83
  %v142 = vmul.f32 %v71, %v83
  %v143 = vmul.f32 %v72, %v83
  %v144 = vmul.f32 %v73, %v83
  %v145 = vmul.f32 %v74, %v83
  %v146 = vmul.f32 %v75, %v83
  %v147 = vmul.f32 %v76, %v83
  %v148 = vmul.f32 %v77, %v83
  %v149 = vld [vmem:[%s2] sm:$0x1]
  %v151 = vlaneseq
  %v152 = vshrl.u32 %v151, 7
  %v153 = vsub.s32 0, %v152
  %v154 = vrot.slane %v149, %v153
  %v156 = vadd.f32 %v85, %v154
  %v157 = vadd.f32 %v86, %v154
  %v158 = vadd.f32 %v87, %v154
  %v159 = vadd.f32 %v88, %v154
  %v160 = vadd.f32 %v89, %v154
  %v161 = vadd.f32 %v90, %v154
  %v162 = vadd.f32 %v91, %v154
  %v163 = vadd.f32 %v92, %v154
  %v164 = vadd.f32 %v93, %v154
  %v165 = vadd.f32 %v94, %v154
  %v166 = vadd.f32 %v95, %v154
  %v167 = vadd.f32 %v96, %v154
  %v168 = vadd.f32 %v97, %v154
  %v169 = vadd.f32 %v98, %v154
  %v170 = vadd.f32 %v99, %v154
  %v171 = vadd.f32 %v100, %v154
  %v172 = vadd.f32 %v101, %v154
  %v173 = vadd.f32 %v102, %v154
  %v174 = vadd.f32 %v103, %v154
  %v175 = vadd.f32 %v104, %v154
  %v176 = vadd.f32 %v105, %v154
  %v177 = vadd.f32 %v106, %v154
  %v178 = vadd.f32 %v107, %v154
  %v179 = vadd.f32 %v108, %v154
  %v180 = vadd.f32 %v109, %v154
  %v181 = vadd.f32 %v110, %v154
  %v182 = vadd.f32 %v111, %v154
  %v183 = vadd.f32 %v112, %v154
  %v184 = vadd.f32 %v113, %v154
  %v185 = vadd.f32 %v114, %v154
  %v186 = vadd.f32 %v115, %v154
  %v187 = vadd.f32 %v116, %v154
  %v188 = vadd.f32 %v117, %v154
  %v189 = vadd.f32 %v118, %v154
  %v190 = vadd.f32 %v119, %v154
  %v191 = vadd.f32 %v120, %v154
  %v192 = vadd.f32 %v121, %v154
  %v193 = vadd.f32 %v122, %v154
  %v194 = vadd.f32 %v123, %v154
  %v195 = vadd.f32 %v124, %v154
  %v196 = vadd.f32 %v125, %v154
  %v197 = vadd.f32 %v126, %v154
  %v198 = vadd.f32 %v127, %v154
  %v199 = vadd.f32 %v128, %v154
  %v200 = vadd.f32 %v129, %v154
  %v201 = vadd.f32 %v130, %v154
  %v202 = vadd.f32 %v131, %v154
  %v203 = vadd.f32 %v132, %v154
  %v204 = vadd.f32 %v133, %v154
  %v205 = vadd.f32 %v134, %v154
  %v206 = vadd.f32 %v135, %v154
  %v207 = vadd.f32 %v136, %v154
  %v208 = vadd.f32 %v137, %v154
  %v209 = vadd.f32 %v138, %v154
  %v210 = vadd.f32 %v139, %v154
  %v211 = vadd.f32 %v140, %v154
  %v212 = vadd.f32 %v141, %v154
  %v213 = vadd.f32 %v142, %v154
  %v214 = vadd.f32 %v143, %v154
  %v215 = vadd.f32 %v144, %v154
  %v216 = vadd.f32 %v145, %v154
  %v217 = vadd.f32 %v146, %v154
  %v218 = vadd.f32 %v147, %v154
  %v219 = vadd.f32 %v148, %v154
  %v220 = vmax.f32 %v156, 0.0
  %v221 = vmax.f32 %v157, 0.0
  %v222 = vmax.f32 %v158, 0.0
  %v223 = vmax.f32 %v159, 0.0
  %v224 = vmax.f32 %v160, 0.0
  %v225 = vmax.f32 %v161, 0.0
  %v226 = vmax.f32 %v162, 0.0
  %v227 = vmax.f32 %v163, 0.0
  %v228 = vmax.f32 %v164, 0.0
  %v229 = vmax.f32 %v165, 0.0
  %v230 = vmax.f32 %v166, 0.0
  %v231 = vmax.f32 %v167, 0.0
  %v232 = vmax.f32 %v168, 0.0
  %v233 = vmax.f32 %v169, 0.0
  %v234 = vmax.f32 %v170, 0.0
  %v235 = vmax.f32 %v171, 0.0
  %v236 = vmax.f32 %v172, 0.0
  %v237 = vmax.f32 %v173, 0.0
  %v238 = vmax.f32 %v174, 0.0
  %v239 = vmax.f32 %v175, 0.0
  %v240 = vmax.f32 %v176, 0.0
  %v241 = vmax.f32 %v177, 0.0
  %v242 = vmax.f32 %v178, 0.0
  %v243 = vmax.f32 %v179, 0.0
  %v244 = vmax.f32 %v180, 0.0
  %v245 = vmax.f32 %v181, 0.0
  %v246 = vmax.f32 %v182, 0.0
  %v247 = vmax.f32 %v183, 0.0
  %v248 = vmax.f32 %v184, 0.0
  %v249 = vmax.f32 %v185, 0.0
  %v250 = vmax.f32 %v186, 0.0
  %v251 = vmax.f32 %v187, 0.0
  %v252 = vmax.f32 %v188, 0.0
  %v253 = vmax.f32 %v189, 0.0
  %v254 = vmax.f32 %v190, 0.0
  %v255 = vmax.f32 %v191, 0.0
  %v256 = vmax.f32 %v192, 0.0
  %v257 = vmax.f32 %v193, 0.0
  %v258 = vmax.f32 %v194, 0.0
  %v259 = vmax.f32 %v195, 0.0
  %v260 = vmax.f32 %v196, 0.0
  %v261 = vmax.f32 %v197, 0.0
  %v262 = vmax.f32 %v198, 0.0
  %v263 = vmax.f32 %v199, 0.0
  %v264 = vmax.f32 %v200, 0.0
  %v265 = vmax.f32 %v201, 0.0
  %v266 = vmax.f32 %v202, 0.0
  %v267 = vmax.f32 %v203, 0.0
  %v268 = vmax.f32 %v204, 0.0
  %v269 = vmax.f32 %v205, 0.0
  %v270 = vmax.f32 %v206, 0.0
  %v271 = vmax.f32 %v207, 0.0
  %v272 = vmax.f32 %v208, 0.0
  %v273 = vmax.f32 %v209, 0.0
  %v274 = vmax.f32 %v210, 0.0
  %v275 = vmax.f32 %v211, 0.0
  %v276 = vmax.f32 %v212, 0.0
  %v277 = vmax.f32 %v213, 0.0
  %v278 = vmax.f32 %v214, 0.0
  %v279 = vmax.f32 %v215, 0.0
  %v280 = vmax.f32 %v216, 0.0
  %v281 = vmax.f32 %v217, 0.0
  %v282 = vmax.f32 %v218, 0.0
  %v283 = vmax.f32 %v219, 0.0
  %v284 = vpack.c.bf16 %v221, %v220
  %v285 = vpack.c.bf16 %v223, %v222
  %v286 = vpack.c.bf16 %v225, %v224
  %v287 = vpack.c.bf16 %v227, %v226
  %v288 = vpack.c.bf16 %v229, %v228
  %v289 = vpack.c.bf16 %v231, %v230
  %v290 = vpack.c.bf16 %v233, %v232
  %v291 = vpack.c.bf16 %v235, %v234
  %v292 = vpack.c.bf16 %v237, %v236
  %v293 = vpack.c.bf16 %v239, %v238
  %v294 = vpack.c.bf16 %v241, %v240
  %v295 = vpack.c.bf16 %v243, %v242
  %v296 = vpack.c.bf16 %v245, %v244
  %v297 = vpack.c.bf16 %v247, %v246
  %v298 = vpack.c.bf16 %v249, %v248
  %v299 = vpack.c.bf16 %v251, %v250
  %v300 = vpack.c.bf16 %v253, %v252
  %v301 = vpack.c.bf16 %v255, %v254
  %v302 = vpack.c.bf16 %v257, %v256
  %v303 = vpack.c.bf16 %v259, %v258
  %v304 = vpack.c.bf16 %v261, %v260
  %v305 = vpack.c.bf16 %v263, %v262
  %v306 = vpack.c.bf16 %v265, %v264
  %v307 = vpack.c.bf16 %v267, %v266
  %v308 = vpack.c.bf16 %v269, %v268
  %v309 = vpack.c.bf16 %v271, %v270
  %v310 = vpack.c.bf16 %v273, %v272
  %v311 = vpack.c.bf16 %v275, %v274
  %v312 = vpack.c.bf16 %v277, %v276
  %v313 = vpack.c.bf16 %v279, %v278
  %v314 = vpack.c.bf16 %v281, %v280
  %v315 = vpack.c.bf16 %v283, %v282
  %v348 = vunpack.c.l.b16 %v284
  %v349 = vunpack.c.h.b16 %v284
  %v350 = vunpack.c.l.b16 %v285
  %v351 = vunpack.c.h.b16 %v285
  %v352 = vunpack.c.l.b16 %v286
  %v353 = vunpack.c.h.b16 %v286
  %v354 = vunpack.c.l.b16 %v287
  %v355 = vunpack.c.h.b16 %v287
  %v356 = vunpack.c.l.b16 %v288
  %v357 = vunpack.c.h.b16 %v288
  %v358 = vunpack.c.l.b16 %v289
  %v359 = vunpack.c.h.b16 %v289
  %v360 = vunpack.c.l.b16 %v290
  %v361 = vunpack.c.h.b16 %v290
  %v362 = vunpack.c.l.b16 %v291
  %v363 = vunpack.c.h.b16 %v291
  %v364 = vunpack.c.l.b16 %v292
  %v365 = vunpack.c.h.b16 %v292
  %v366 = vunpack.c.l.b16 %v293
  %v367 = vunpack.c.h.b16 %v293
  %v368 = vunpack.c.l.b16 %v294
  %v369 = vunpack.c.h.b16 %v294
  %v370 = vunpack.c.l.b16 %v295
  %v371 = vunpack.c.h.b16 %v295
  %v372 = vunpack.c.l.b16 %v296
  %v373 = vunpack.c.h.b16 %v296
  %v374 = vunpack.c.l.b16 %v297
  %v375 = vunpack.c.h.b16 %v297
  %v376 = vunpack.c.l.b16 %v298
  %v377 = vunpack.c.h.b16 %v298
  %v378 = vunpack.c.l.b16 %v299
  %v379 = vunpack.c.h.b16 %v299
  %v380 = vunpack.c.l.b16 %v300
  %v381 = vunpack.c.h.b16 %v300
  %v382 = vunpack.c.l.b16 %v301
  %v383 = vunpack.c.h.b16 %v301
  %v384 = vunpack.c.l.b16 %v302
  %v385 = vunpack.c.h.b16 %v302
  %v386 = vunpack.c.l.b16 %v303
  %v387 = vunpack.c.h.b16 %v303
  %v388 = vunpack.c.l.b16 %v304
  %v389 = vunpack.c.h.b16 %v304
  %v390 = vunpack.c.l.b16 %v305
  %v391 = vunpack.c.h.b16 %v305
  %v392 = vunpack.c.l.b16 %v306
  %v393 = vunpack.c.h.b16 %v306
  %v394 = vunpack.c.l.b16 %v307
  %v395 = vunpack.c.h.b16 %v307
  %v396 = vunpack.c.l.b16 %v308
  %v397 = vunpack.c.h.b16 %v308
  %v398 = vunpack.c.l.b16 %v309
  %v399 = vunpack.c.h.b16 %v309
  %v400 = vunpack.c.l.b16 %v310
  %v401 = vunpack.c.h.b16 %v310
  %v402 = vunpack.c.l.b16 %v311
  %v403 = vunpack.c.h.b16 %v311
  %v404 = vunpack.c.l.b16 %v312
  %v405 = vunpack.c.h.b16 %v312
  %v406 = vunpack.c.l.b16 %v313
  %v407 = vunpack.c.h.b16 %v313
  %v408 = vunpack.c.l.b16 %v314
  %v409 = vunpack.c.h.b16 %v314
  %v410 = vunpack.c.l.b16 %v315
  %v411 = vunpack.c.h.b16 %v315
  %v412 = vpack.c.b16 %v348, %v348
  %v413 = vpack.c.b16 %v349, %v349
  %v414 = vpack.c.b16 %v350, %v350
  %v415 = vpack.c.b16 %v351, %v351
  %v416 = vpack.c.b16 %v352, %v352
  %v417 = vpack.c.b16 %v353, %v353
  %v418 = vpack.c.b16 %v354, %v354
  %v419 = vpack.c.b16 %v355, %v355
  %v420 = vpack.c.b16 %v356, %v356
  %v421 = vpack.c.b16 %v357, %v357
  %v422 = vpack.c.b16 %v358, %v358
  %v423 = vpack.c.b16 %v359, %v359
  %v424 = vpack.c.b16 %v360, %v360
  %v425 = vpack.c.b16 %v361, %v361
  %v426 = vpack.c.b16 %v362, %v362
  %v427 = vpack.c.b16 %v363, %v363
  %v428 = vpack.c.b16 %v364, %v364
  %v429 = vpack.c.b16 %v365, %v365
  %v430 = vpack.c.b16 %v366, %v366
  %v431 = vpack.c.b16 %v367, %v367
  %v432 = vpack.c.b16 %v368, %v368
  %v433 = vpack.c.b16 %v369, %v369
  %v434 = vpack.c.b16 %v370, %v370
  %v435 = vpack.c.b16 %v371, %v371
  %v436 = vpack.c.b16 %v372, %v372
  %v437 = vpack.c.b16 %v373, %v373
  %v438 = vpack.c.b16 %v374, %v374
  %v439 = vpack.c.b16 %v375, %v375
  %v440 = vpack.c.b16 %v376, %v376
  %v441 = vpack.c.b16 %v377, %v377
  %v442 = vpack.c.b16 %v378, %v378
  %v443 = vpack.c.b16 %v379, %v379
  %v444 = vpack.c.b16 %v380, %v380
  %v445 = vpack.c.b16 %v381, %v381
  %v446 = vpack.c.b16 %v382, %v382
  %v447 = vpack.c.b16 %v383, %v383
  %v448 = vpack.c.b16 %v384, %v384
  %v449 = vpack.c.b16 %v385, %v385
  %v450 = vpack.c.b16 %v386, %v386
  %v451 = vpack.c.b16 %v387, %v387
  %v452 = vpack.c.b16 %v388, %v388
  %v453 = vpack.c.b16 %v389, %v389
  %v454 = vpack.c.b16 %v390, %v390
  %v455 = vpack.c.b16 %v391, %v391
  %v456 = vpack.c.b16 %v392, %v392
  %v457 = vpack.c.b16 %v393, %v393
  %v458 = vpack.c.b16 %v394, %v394
  %v459 = vpack.c.b16 %v395, %v395
  %v460 = vpack.c.b16 %v396, %v396
  %v461 = vpack.c.b16 %v397, %v397
  %v462 = vpack.c.b16 %v398, %v398
  %v463 = vpack.c.b16 %v399, %v399
  %v464 = vpack.c.b16 %v400, %v400
  %v465 = vpack.c.b16 %v401, %v401
  %v466 = vpack.c.b16 %v402, %v402
  %v467 = vpack.c.b16 %v403, %v403
  %v468 = vpack.c.b16 %v404, %v404
  %v469 = vpack.c.b16 %v405, %v405
  %v470 = vpack.c.b16 %v406, %v406
  %v471 = vpack.c.b16 %v407, %v407
  %v472 = vpack.c.b16 %v408, %v408
  %v473 = vpack.c.b16 %v409, %v409
  %v474 = vpack.c.b16 %v410, %v410
  %v475 = vpack.c.b16 %v411, %v411
  %540 = vst [vmem:[%s3] sm:$0xf] %v412
  %541 = vst [vmem:[%s3 + $0x4] sm:$0xf] %v413
  %542 = vst [vmem:[%s3 + $0x8] sm:$0xf] %v414
  %543 = vst [vmem:[%s3 + $0xc] sm:$0xf] %v415
  %544 = vst [vmem:[%s3 + $0x10] sm:$0xf] %v416
  %545 = vst [vmem:[%s3 + $0x14] sm:$0xf] %v417
  %546 = vst [vmem:[%s3 + $0x18] sm:$0xf] %v418
  %547 = vst [vmem:[%s3 + $0x1c] sm:$0xf] %v419
  %548 = vst [vmem:[%s3 + $0x20] sm:$0xf] %v420
  %549 = vst [vmem:[%s3 + $0x24] sm:$0xf] %v421
  %550 = vst [vmem:[%s3 + $0x28] sm:$0xf] %v422
  %551 = vst [vmem:[%s3 + $0x2c] sm:$0xf] %v423
  %552 = vst [vmem:[%s3 + $0x30] sm:$0xf] %v424
  %553 = vst [vmem:[%s3 + $0x34] sm:$0xf] %v425
  %554 = vst [vmem:[%s3 + $0x38] sm:$0xf] %v426
  %555 = vst [vmem:[%s3 + $0x3c] sm:$0xf] %v427
  %556 = vst [vmem:[%s3 + $0x40] sm:$0xf] %v428
  %557 = vst [vmem:[%s3 + $0x44] sm:$0xf] %v429
  %558 = vst [vmem:[%s3 + $0x48] sm:$0xf] %v430
  %559 = vst [vmem:[%s3 + $0x4c] sm:$0xf] %v431
  %560 = vst [vmem:[%s3 + $0x50] sm:$0xf] %v432
  %561 = vst [vmem:[%s3 + $0x54] sm:$0xf] %v433
  %562 = vst [vmem:[%s3 + $0x58] sm:$0xf] %v434
  %563 = vst [vmem:[%s3 + $0x5c] sm:$0xf] %v435
  %564 = vst [vmem:[%s3 + $0x60] sm:$0xf] %v436
  %565 = vst [vmem:[%s3 + $0x64] sm:$0xf] %v437
  %566 = vst [vmem:[%s3 + $0x68] sm:$0xf] %v438
  %567 = vst [vmem:[%s3 + $0x6c] sm:$0xf] %v439
  %568 = vst [vmem:[%s3 + $0x70] sm:$0xf] %v440
  %569 = vst [vmem:[%s3 + $0x74] sm:$0xf] %v441
  %570 = vst [vmem:[%s3 + $0x78] sm:$0xf] %v442
  %571 = vst [vmem:[%s3 + $0x7c] sm:$0xf] %v443
  %572 = vst [vmem:[%s3 + $0x80] sm:$0xf] %v444
  %573 = vst [vmem:[%s3 + $0x84] sm:$0xf] %v445
  %574 = vst [vmem:[%s3 + $0x88] sm:$0xf] %v446
  %575 = vst [vmem:[%s3 + $0x8c] sm:$0xf] %v447
  %576 = vst [vmem:[%s3 + $0x90] sm:$0xf] %v448
  %577 = vst [vmem:[%s3 + $0x94] sm:$0xf] %v449
  %578 = vst [vmem:[%s3 + $0x98] sm:$0xf] %v450
  %579 = vst [vmem:[%s3 + $0x9c] sm:$0xf] %v451
  %580 = vst [vmem:[%s3 + $0xa0] sm:$0xf] %v452
  %581 = vst [vmem:[%s3 + $0xa4] sm:$0xf] %v453
  %582 = vst [vmem:[%s3 + $0xa8] sm:$0xf] %v454
  %583 = vst [vmem:[%s3 + $0xac] sm:$0xf] %v455
  %584 = vst [vmem:[%s3 + $0xb0] sm:$0xf] %v456
  %585 = vst [vmem:[%s3 + $0xb4] sm:$0xf] %v457
  %586 = vst [vmem:[%s3 + $0xb8] sm:$0xf] %v458
  %587 = vst [vmem:[%s3 + $0xbc] sm:$0xf] %v459
  %588 = vst [vmem:[%s3 + $0xc0] sm:$0xf] %v460
  %589 = vst [vmem:[%s3 + $0xc4] sm:$0xf] %v461
  %590 = vst [vmem:[%s3 + $0xc8] sm:$0xf] %v462
  %591 = vst [vmem:[%s3 + $0xcc] sm:$0xf] %v463
  %592 = vst [vmem:[%s3 + $0xd0] sm:$0xf] %v464
  %593 = vst [vmem:[%s3 + $0xd4] sm:$0xf] %v465
  %594 = vst [vmem:[%s3 + $0xd8] sm:$0xf] %v466
  %595 = vst [vmem:[%s3 + $0xdc] sm:$0xf] %v467
  %596 = vst [vmem:[%s3 + $0xe0] sm:$0xf] %v468
  %597 = vst [vmem:[%s3 + $0xe4] sm:$0xf] %v469
  %598 = vst [vmem:[%s3 + $0xe8] sm:$0xf] %v470
  %599 = vst [vmem:[%s3 + $0xec] sm:$0xf] %v471
  %600 = vst [vmem:[%s3 + $0xf0] sm:$0xf] %v472
  %601 = vst [vmem:[%s3 + $0xf4] sm:$0xf] %v473
  %602 = vst [vmem:[%s3 + $0xf8] sm:$0xf] %v474
  %603 = vst [vmem:[%s3 + $0xfc] sm:$0xf] %v475
  // Predicated region
  $region14: #{_lambda_.32} parent=0 // pred_check
    _
  $region15: #{_lambda_.32} parent=0 // pred_check_branch
    %605 = sbr.rel (0) target = $region17
  $region16: #{_lambda_.32} parent=0 // pred_region
    _
  $region17: #{_lambda_.32} parent=0 // pred_fallthru
    _
  // Predicated region
  $region18: #{_lambda_.32} parent=0 // pred_check
    _
  $region19: #{_lambda_.32} parent=0 // pred_check_branch
    %607 = sbr.rel (0) target = $region21
  $region20: #{_lambda_.32} parent=0 // pred_region
    _
  $region21: #{_lambda_.32} parent=0 // pred_fallthru
    _

// kernel: _lambda_.36
$region0: #{_lambda_.36}
  #allocation0 [shape = 'u32[]', space=smem, size = 0x4, offset = 0x4, fixed_abs, tag = 'smem constant byte address 0x4 - core index']
  #allocation1 [shape = 'u32[144,128]{1,0:T(1,128)}', space=vmem, size = 0x12000, scoped, tag = 'internal scratch']
  %s0 = inlined_call_operand.vmem [shape: bf16[2048,64], index: 0, kind: input, shape index: {}]
  %s1 = inlined_call_operand.vmem [shape: bf16[64,128], index: 1, kind: input, shape index: {}]
  %s2 = inlined_call_operand.vmem [shape: f32[1,128], index: 2, kind: input, shape index: {}]
  %s3 = inlined_call_operand.vmem [shape: f32[2048,128], index: 3, kind: output, shape index: {}]
  %s4 = sld [smem:[#allocation0]]
  $region45: #{_lambda_.36} parent=0
    _
  %s6 = ssub.s32 1, %s4
  %s7 = scalar_select 0, %s6, %s4
  loop: start=0, step=1, limit=4
  $region2: #{_lambda_.36} parent=0 // loop_pre_header
    _
  $region3: #{_lambda_.36} parent=0 // loop_header
    %s9 = sphi 0, %s13
    %p10 = scmp.ge.s32.totalorder %s9, 4
    %s19 = sphi 0, %s21
    %s22 = sphi 0, %s19
    %s23 = sphi 0, %s22
    %s39 = sphi 0, %s23
    %s43 = sphi 0, %s43
    %s45 = sphi 0, %s43
    %s46 = sphi 0, %s45
    %s60 = sphi 0, %s46
    %s64 = sphi 0, %s64
    %s66 = sphi 0, %s64
    %s67 = sphi 0, %s66
    %s81 = sphi 0, %s67
    %s87 = sphi 0, %s89
    %s90 = sphi 0, %s87
    %s91 = sphi 0, %s90
    %s107 = sphi 0, %s91
  $region4: #{_lambda_.36} parent=0 // loop_header_branch
    %12 = sbr.rel (%p10) target = $region8
  $region5: #{_lambda_.36} parent=0 // loop_body
    %s14 = ssub.s32 %s9, 1
    %s15 = ssub.s32 %s9, 2
    %s16 = sadd.s32 %s9, 1
    %s17 = ssub.s32 %s9, %s16
    %p18 = scmp.eq.s32.totalorder %s17, 0
    %s20 = sadd.s32 %s19, 1
    %s21 = scalar_select %p18, %s19, %s20
    %p24 = pneg %p18
    %p25 = scmp.eq.s32.totalorder %s9, 1
    %p26 = por %p24, %p25
    %p27 = scmp.ne.s32.totalorder %s19, %s22
    %p28 = scmp.eq.s32.totalorder %s9, 0
    %p29 = por %p27, %p28
    %p30 = scmp.ne.s32.totalorder %s19, %s22
    %p31 = scmp.eq.s32.totalorder %s14, 1
    %p32 = por %p30, %p31
    %p33 = scmp.ne.s32.totalorder %s22, %s23
    %p34 = scmp.eq.s32.totalorder %s14, 0
    %p35 = por %p33, %p34
    %p36 = scmp.ne.s32.totalorder %s22, %s23
    %p37 = scmp.eq.s32.totalorder %s15, 1
    %p38 = por %p36, %p37
    %p40 = scmp.ne.s32.totalorder %s23, %s39
    %p41 = scmp.eq.s32.totalorder %s15, 0
    %p42 = por %p40, %p41
    %s44 = sadd.s32 %s43, 1
    %p47 = scmp.eq.s32.totalorder %s9, 1
    %p48 = scmp.ne.s32.totalorder %s43, %s45
    %p49 = scmp.eq.s32.totalorder %s9, 0
    %p50 = por %p48, %p49
    %p51 = scmp.ne.s32.totalorder %s43, %s45
    %p52 = scmp.eq.s32.totalorder %s14, 1
    %p53 = por %p51, %p52
    %p54 = scmp.ne.s32.totalorder %s45, %s46
    %p55 = scmp.eq.s32.totalorder %s14, 0
    %p56 = por %p54, %p55
    %p57 = scmp.ne.s32.totalorder %s45, %s46
    %p58 = scmp.eq.s32.totalorder %s15, 1
    %p59 = por %p57, %p58
    %p61 = scmp.ne.s32.totalorder %s46, %s60
    %p62 = scmp.eq.s32.totalorder %s15, 0
    %p63 = por %p61, %p62
    %s65 = sadd.s32 %s64, 1
    %p68 = scmp.eq.s32.totalorder %s9, 1
    %p69 = scmp.ne.s32.totalorder %s64, %s66
    %p70 = scmp.eq.s32.totalorder %s9, 0
    %p71 = por %p69, %p70
    %p72 = scmp.ne.s32.totalorder %s64, %s66
    %p73 = scmp.eq.s32.totalorder %s14, 1
    %p74 = por %p72, %p73
    %p75 = scmp.ne.s32.totalorder %s66, %s67
    %p76 = scmp.eq.s32.totalorder %s14, 0
    %p77 = por %p75, %p76
    %p78 = scmp.ne.s32.totalorder %s66, %s67
    %p79 = scmp.eq.s32.totalorder %s15, 1
    %p80 = por %p78, %p79
    %p82 = scmp.ne.s32.totalorder %s67, %s81
    %p83 = scmp.eq.s32.totalorder %s15, 0
    %p84 = por %p82, %p83
    %s85 = ssub.s32 %s9, %s16
    %p86 = scmp.eq.s32.totalorder %s85, 0
    %s88 = sadd.s32 %s87, 1
    %s89 = scalar_select %p86, %s87, %s88
    %p92 = pneg %p86
    %p93 = scmp.eq.s32.totalorder %s9, 1
    %p94 = por %p92, %p93
    %p95 = scmp.ne.s32.totalorder %s87, %s90
    %p96 = scmp.eq.s32.totalorder %s9, 0
    %p97 = por %p95, %p96
    %p98 = scmp.ne.s32.totalorder %s87, %s90
    %p99 = scmp.eq.s32.totalorder %s14, 1
    %p100 = por %p98, %p99
    %p101 = scmp.ne.s32.totalorder %s90, %s91
    %p102 = scmp.eq.s32.totalorder %s14, 0
    %p103 = por %p101, %p102
    %p104 = scmp.ne.s32.totalorder %s90, %s91
    %p105 = scmp.eq.s32.totalorder %s15, 1
    %p106 = por %p104, %p105
    %p108 = scmp.ne.s32.totalorder %s91, %s107
    %p109 = scmp.eq.s32.totalorder %s15, 0
    %p110 = por %p108, %p109
    %p111 = scmp.le.s32.totalorder 1, %s9
    %p112 = scmp.lt.s32.totalorder %s9, 3
    %p113 = pnand %p111, %p112
    %p114 = pneg %p113
    // Predicated region
    $region9: #{_lambda_.36} parent=5 // pred_check
      _
    $region10: #{_lambda_.36} parent=5 // pred_check_branch
      %116 = sbr.rel (%p113) target = $region12
    $region11: #{_lambda_.36} parent=5 // pred_region
      %s117 = ssub.s32 %s9, 1
      // Predicated region
      $region13: #{_lambda_.36} parent=11 // pred_check
        %p118 = pneg %p56
      $region14: #{_lambda_.36} parent=11 // pred_check_branch
        %120 = sbr.rel (%p118) target = $region16
      $region15: #{_lambda_.36} parent=11 // pred_region
        _
      $region16: #{_lambda_.36} parent=11 // pred_fallthru
        _
      // Predicated region
      $region17: #{_lambda_.36} parent=11 // pred_check
        %p121 = pneg %p77
      $region18: #{_lambda_.36} parent=11 // pred_check_branch
        %123 = sbr.rel (%p121) target = $region20
      $region19: #{_lambda_.36} parent=11 // pred_region
        _
      $region20: #{_lambda_.36} parent=11 // pred_fallthru
        _
    $region12: #{_lambda_.36} parent=5 // pred_fallthru
      _
    %p124 = scmp.lt.s32.totalorder %s9, 2
    // Predicated region
    $region21: #{_lambda_.36} parent=5 // pred_check
      %p125 = pneg %p124
    $region22: #{_lambda_.36} parent=5 // pred_check_branch
      %127 = sbr.rel (%p125) target = $region24
    $region23: #{_lambda_.36} parent=5 // pred_region
      // Predicated region
      $region25: #{_lambda_.36} parent=23 // pred_check
        %p128 = pneg %p29
      $region26: #{_lambda_.36} parent=23 // pred_check_branch
        %130 = sbr.rel (%p128) target = $region28
      $region27: #{_lambda_.36} parent=23 // pred_region
        %s131 = smul.u32 128, %s9
        %p132 = scmp.lt.s32.totalorder %s131, 255
        %s133 = scalar_select %p132, %s131, 255
        %s134 = smul.addr %s133, 4
        %s135 = scalar_lea.vmem %s0, %s134
        %s136 = smul.u32 128, %s9
      $region28: #{_lambda_.36} parent=23 // pred_fallthru
        _
    $region24: #{_lambda_.36} parent=5 // pred_fallthru
      _
    %p137 = scmp.le.s32.totalorder 1, %s9
    %p138 = scmp.lt.s32.totalorder %s9, 3
    %p139 = pnand %p137, %p138
    %p140 = pneg %p139
    // Predicated region
    $region29: #{_lambda_.36} parent=5 // pred_check
      _
    $region30: #{_lambda_.36} parent=5 // pred_check_branch
      %142 = sbr.rel (%p139) target = $region32
    $region31: #{_lambda_.36} parent=5 // pred_region
      %s143 = ssub.s32 %s9, 1
      %s144 = smul.u32 128, %s14
      %p145 = scmp.lt.s32.totalorder %s144, 255
      %s146 = scalar_select %p145, %s144, 255
      %s147 = smul.addr %s146, 4
      %s148 = scalar_lea.vmem %s0, %s147
      %p149 = pneg %p35
      %p150 = pneg %p32
      %p151 = pneg %p56
      %p152 = pneg %p53
      %p153 = pneg %p77
      %p154 = pneg %p74
      %p155 = pneg %p103
      %p156 = pneg %p100
      %s157 = smul.u32 128, %s14
      %p158 = scmp.lt.s32.totalorder %s157, 255
      %s159 = scalar_select %p158, %s157, 255
      %s160 = smul.addr %s159, 8
      %s161 = scalar_lea.vmem %s3, %s160
      %s162 = smul.u32 128, %s14
      %p163 = scmp.lt.s32.totalorder %s162, 255
      %s164 = scalar_select %p163, %s162, 255
      %s165 = smul.addr %s164, 4
      %s166 = scalar_lea.vmem %s0, %s165
      %s167 = smul.u32 128, %s14
      %s168 = smul.u32 128, %s14
      %p169 = scmp.lt.s32.totalorder %s168, 255
      %s170 = scalar_select %p169, %s168, 255
      %s171 = smul.addr %s170, 8
      %s172 = scalar_lea.vmem %s3, %s171
      %s173 = smul.u32 128, %s14
      %v175 = vld [vmem:[%s166] sm:$0xf]
      %v176 = vld [vmem:[%s166 + $0x4] sm:$0xf]
      %v177 = vld [vmem:[%s166 + $0x8] sm:$0xf]
      %v178 = vld [vmem:[%s166 + $0xc] sm:$0xf]
      %v179 = vld [vmem:[%s166 + $0x10] sm:$0xf]
      %v180 = vld [vmem:[%s166 + $0x14] sm:$0xf]
      %v181 = vld [vmem:[%s166 + $0x18] sm:$0xf]
      %v182 = vld [vmem:[%s166 + $0x1c] sm:$0xf]
      %v183 = vld [vmem:[%s166 + $0x20] sm:$0xf]
      %v184 = vld [vmem:[%s166 + $0x24] sm:$0xf]
      %v185 = vld [vmem:[%s166 + $0x28] sm:$0xf]
      %v186 = vld [vmem:[%s166 + $0x2c] sm:$0xf]
      %v187 = vld [vmem:[%s166 + $0x30] sm:$0xf]
      %v188 = vld [vmem:[%s166 + $0x34] sm:$0xf]
      %v189 = vld [vmem:[%s166 + $0x38] sm:$0xf]
      %v190 = vld [vmem:[%s166 + $0x3c] sm:$0xf]
      %v191 = vld [vmem:[%s166 + $0x40] sm:$0xf]
      %v192 = vld [vmem:[%s166 + $0x44] sm:$0xf]
      %v193 = vld [vmem:[%s166 + $0x48] sm:$0xf]
      %v194 = vld [vmem:[%s166 + $0x4c] sm:$0xf]
      %v195 = vld [vmem:[%s166 + $0x50] sm:$0xf]
      %v196 = vld [vmem:[%s166 + $0x54] sm:$0xf]
      %v197 = vld [vmem:[%s166 + $0x58] sm:$0xf]
      %v198 = vld [vmem:[%s166 + $0x5c] sm:$0xf]
      %v199 = vld [vmem:[%s166 + $0x60] sm:$0xf]
      %v200 = vld [vmem:[%s166 + $0x64] sm:$0xf]
      %v201 = vld [vmem:[%s166 + $0x68] sm:$0xf]
      %v202 = vld [vmem:[%s166 + $0x6c] sm:$0xf]
      %v203 = vld [vmem:[%s166 + $0x70] sm:$0xf]
      %v204 = vld [vmem:[%s166 + $0x74] sm:$0xf]
      %v205 = vld [vmem:[%s166 + $0x78] sm:$0xf]
      %v206 = vld [vmem:[%s166 + $0x7c] sm:$0xf]
      %v207 = vld [vmem:[%s166 + $0x80] sm:$0xf]
      %v208 = vld [vmem:[%s166 + $0x84] sm:$0xf]
      %v209 = vld [vmem:[%s166 + $0x88] sm:$0xf]
      %v210 = vld [vmem:[%s166 + $0x8c] sm:$0xf]
      %v211 = vld [vmem:[%s166 + $0x90] sm:$0xf]
      %v212 = vld [vmem:[%s166 + $0x94] sm:$0xf]
      %v213 = vld [vmem:[%s166 + $0x98] sm:$0xf]
      %v214 = vld [vmem:[%s166 + $0x9c] sm:$0xf]
      %v215 = vld [vmem:[%s166 + $0xa0] sm:$0xf]
      %v216 = vld [vmem:[%s166 + $0xa4] sm:$0xf]
      %v217 = vld [vmem:[%s166 + $0xa8] sm:$0xf]
      %v218 = vld [vmem:[%s166 + $0xac] sm:$0xf]
      %v219 = vld [vmem:[%s166 + $0xb0] sm:$0xf]
      %v220 = vld [vmem:[%s166 + $0xb4] sm:$0xf]
      %v221 = vld [vmem:[%s166 + $0xb8] sm:$0xf]
      %v222 = vld [vmem:[%s166 + $0xbc] sm:$0xf]
      %v223 = vld [vmem:[%s166 + $0xc0] sm:$0xf]
      %v224 = vld [vmem:[%s166 + $0xc4] sm:$0xf]
      %v225 = vld [vmem:[%s166 + $0xc8] sm:$0xf]
      %v226 = vld [vmem:[%s166 + $0xcc] sm:$0xf]
      %v227 = vld [vmem:[%s166 + $0xd0] sm:$0xf]
      %v228 = vld [vmem:[%s166 + $0xd4] sm:$0xf]
      %v229 = vld [vmem:[%s166 + $0xd8] sm:$0xf]
      %v230 = vld [vmem:[%s166 + $0xdc] sm:$0xf]
      %v231 = vld [vmem:[%s166 + $0xe0] sm:$0xf]
      %v232 = vld [vmem:[%s166 + $0xe4] sm:$0xf]
      %v233 = vld [vmem:[%s166 + $0xe8] sm:$0xf]
      %v234 = vld [vmem:[%s166 + $0xec] sm:$0xf]
      %v235 = vld [vmem:[%s166 + $0xf0] sm:$0xf]
      %v236 = vld [vmem:[%s166 + $0xf4] sm:$0xf]
      %v237 = vld [vmem:[%s166 + $0xf8] sm:$0xf]
      %v238 = vld [vmem:[%s166 + $0xfc] sm:$0xf]
      %v239 = vld [vmem:[%s166 + $0x100] sm:$0xf]
      %v240 = vld [vmem:[%s166 + $0x104] sm:$0xf]
      %v241 = vld [vmem:[%s166 + $0x108] sm:$0xf]
      %v242 = vld [vmem:[%s166 + $0x10c] sm:$0xf]
      %v243 = vld [vmem:[%s166 + $0x110] sm:$0xf]
      %v244 = vld [vmem:[%s166 + $0x114] sm:$0xf]
      %v245 = vld [vmem:[%s166 + $0x118] sm:$0xf]
      %v246 = vld [vmem:[%s166 + $0x11c] sm:$0xf]
      %v247 = vld [vmem:[%s166 + $0x120] sm:$0xf]
      %v248 = vld [vmem:[%s166 + $0x124] sm:$0xf]
      %v249 = vld [vmem:[%s166 + $0x128] sm:$0xf]
      %v250 = vld [vmem:[%s166 + $0x12c] sm:$0xf]
      %v251 = vld [vmem:[%s166 + $0x130] sm:$0xf]
      %v252 = vld [vmem:[%s166 + $0x134] sm:$0xf]
      %v253 = vld [vmem:[%s166 + $0x138] sm:$0xf]
      %v254 = vld [vmem:[%s166 + $0x13c] sm:$0xf]
      %v255 = vld [vmem:[%s166 + $0x140] sm:$0xf]
      %v256 = vld [vmem:[%s166 + $0x144] sm:$0xf]
      %v257 = vld [vmem:[%s166 + $0x148] sm:$0xf]
      %v258 = vld [vmem:[%s166 + $0x14c] sm:$0xf]
      %v259 = vld [vmem:[%s166 + $0x150] sm:$0xf]
      %v260 = vld [vmem:[%s166 + $0x154] sm:$0xf]
      %v261 = vld [vmem:[%s166 + $0x158] sm:$0xf]
      %v262 = vld [vmem:[%s166 + $0x15c] sm:$0xf]
      %v263 = vld [vmem:[%s166 + $0x160] sm:$0xf]
      %v264 = vld [vmem:[%s166 + $0x164] sm:$0xf]
      %v265 = vld [vmem:[%s166 + $0x168] sm:$0xf]
      %v266 = vld [vmem:[%s166 + $0x16c] sm:$0xf]
      %v267 = vld [vmem:[%s166 + $0x170] sm:$0xf]
      %v268 = vld [vmem:[%s166 + $0x174] sm:$0xf]
      %v269 = vld [vmem:[%s166 + $0x178] sm:$0xf]
      %v270 = vld [vmem:[%s166 + $0x17c] sm:$0xf]
      %v271 = vld [vmem:[%s166 + $0x180] sm:$0xf]
      %v272 = vld [vmem:[%s166 + $0x184] sm:$0xf]
      %v273 = vld [vmem:[%s166 + $0x188] sm:$0xf]
      %v274 = vld [vmem:[%s166 + $0x18c] sm:$0xf]
      %v275 = vld [vmem:[%s166 + $0x190] sm:$0xf]
      %v276 = vld [vmem:[%s166 + $0x194] sm:$0xf]
      %v277 = vld [vmem:[%s166 + $0x198] sm:$0xf]
      %v278 = vld [vmem:[%s166 + $0x19c] sm:$0xf]
      %v279 = vld [vmem:[%s166 + $0x1a0] sm:$0xf]
      %v280 = vld [vmem:[%s166 + $0x1a4] sm:$0xf]
      %v281 = vld [vmem:[%s166 + $0x1a8] sm:$0xf]
      %v282 = vld [vmem:[%s166 + $0x1ac] sm:$0xf]
      %v283 = vld [vmem:[%s166 + $0x1b0] sm:$0xf]
      %v284 = vld [vmem:[%s166 + $0x1b4] sm:$0xf]
      %v285 = vld [vmem:[%s166 + $0x1b8] sm:$0xf]
      %v286 = vld [vmem:[%s166 + $0x1bc] sm:$0xf]
      %v287 = vld [vmem:[%s166 + $0x1c0] sm:$0xf]
      %v288 = vld [vmem:[%s166 + $0x1c4] sm:$0xf]
      %v289 = vld [vmem:[%s166 + $0x1c8] sm:$0xf]
      %v290 = vld [vmem:[%s166 + $0x1cc] sm:$0xf]
      %v291 = vld [vmem:[%s166 + $0x1d0] sm:$0xf]
      %v292 = vld [vmem:[%s166 + $0x1d4] sm:$0xf]
      %v293 = vld [vmem:[%s166 + $0x1d8] sm:$0xf]
      %v294 = vld [vmem:[%s166 + $0x1dc] sm:$0xf]
      %v295 = vld [vmem:[%s166 + $0x1e0] sm:$0xf]
      %v296 = vld [vmem:[%s166 + $0x1e4] sm:$0xf]
      %v297 = vld [vmem:[%s166 + $0x1e8] sm:$0xf]
      %v298 = vld [vmem:[%s166 + $0x1ec] sm:$0xf]
      %v299 = vld [vmem:[%s166 + $0x1f0] sm:$0xf]
      %v300 = vld [vmem:[%s166 + $0x1f4] sm:$0xf]
      %v301 = vld [vmem:[%s166 + $0x1f8] sm:$0xf]
      %v302 = vld [vmem:[%s166 + $0x1fc] sm:$0xf]
      %v303 = vld [vmem:[%s1] sm:$0xf]
      %v304 = vld [vmem:[%s1 + $0x4] sm:$0xf]
      %v305 = vld [vmem:[%s1 + $0x8] sm:$0xf]
      %v306 = vld [vmem:[%s1 + $0xc] sm:$0xf]
      %v307 = vld [vmem:[%s1 + $0x10] sm:$0xf]
      %v308 = vld [vmem:[%s1 + $0x14] sm:$0xf]
      %v309 = vld [vmem:[%s1 + $0x18] sm:$0xf]
      %v310 = vld [vmem:[%s1 + $0x1c] sm:$0xf]
      %v311 = vld [vmem:[%s2] sm:$0x1]
      %v313 = vlaneseq
      %v314 = vshrl.u32 %v313, 7
      %v315 = vsub.s32 0, %v314
      %v316 = vrot.slane %v311, %v315
      %v446 = vunpack.c.l.b16 %v175
      %v447 = vunpack.c.l.b16 %v176
      %v448 = vunpack.c.l.b16 %v177
      %v449 = vunpack.c.l.b16 %v178
      %v450 = vunpack.c.l.b16 %v179
      %v451 = vunpack.c.l.b16 %v180
      %v452 = vunpack.c.l.b16 %v181
      %v453 = vunpack.c.l.b16 %v182
      %v454 = vunpack.c.l.b16 %v183
      %v455 = vunpack.c.l.b16 %v184
      %v456 = vunpack.c.l.b16 %v185
      %v457 = vunpack.c.l.b16 %v186
      %v458 = vunpack.c.l.b16 %v187
      %v459 = vunpack.c.l.b16 %v188
      %v460 = vunpack.c.l.b16 %v189
      %v461 = vunpack.c.l.b16 %v190
      %v462 = vunpack.c.l.b16 %v191
      %v463 = vunpack.c.l.b16 %v192
      %v464 = vunpack.c.l.b16 %v193
      %v465 = vunpack.c.l.b16 %v194
      %v466 = vunpack.c.l.b16 %v195
      %v467 = vunpack.c.l.b16 %v196
      %v468 = vunpack.c.l.b16 %v197
      %v469 = vunpack.c.l.b16 %v198
      %v470 = vunpack.c.l.b16 %v199
      %v471 = vunpack.c.l.b16 %v200
      %v472 = vunpack.c.l.b16 %v201
      %v473 = vunpack.c.l.b16 %v202
      %v474 = vunpack.c.l.b16 %v203
      %v475 = vunpack.c.l.b16 %v204
      %v476 = vunpack.c.l.b16 %v205
      %v477 = vunpack.c.l.b16 %v206
      %v478 = vunpack.c.l.b16 %v207
      %v479 = vunpack.c.l.b16 %v208
      %v480 = vunpack.c.l.b16 %v209
      %v481 = vunpack.c.l.b16 %v210
      %v482 = vunpack.c.l.b16 %v211
      %v483 = vunpack.c.l.b16 %v212
      %v484 = vunpack.c.l.b16 %v213
      %v485 = vunpack.c.l.b16 %v214
      %v486 = vunpack.c.l.b16 %v215
      %v487 = vunpack.c.l.b16 %v216
      %v488 = vunpack.c.l.b16 %v217
      %v489 = vunpack.c.l.b16 %v218
      %v490 = vunpack.c.l.b16 %v219
      %v491 = vunpack.c.l.b16 %v220
      %v492 = vunpack.c.l.b16 %v221
      %v493 = vunpack.c.l.b16 %v222
      %v494 = vunpack.c.l.b16 %v223
      %v495 = vunpack.c.l.b16 %v224
      %v496 = vunpack.c.l.b16 %v225
      %v497 = vunpack.c.l.b16 %v226
      %v498 = vunpack.c.l.b16 %v227
      %v499 = vunpack.c.l.b16 %v228
      %v500 = vunpack.c.l.b16 %v229
      %v501 = vunpack.c.l.b16 %v230
      %v502 = vunpack.c.l.b16 %v231
      %v503 = vunpack.c.l.b16 %v232
      %v504 = vunpack.c.l.b16 %v233
      %v505 = vunpack.c.l.b16 %v234
      %v506 = vunpack.c.l.b16 %v235
      %v507 = vunpack.c.l.b16 %v236
      %v508 = vunpack.c.l.b16 %v237
      %v509 = vunpack.c.l.b16 %v238
      %v510 = vunpack.c.l.b16 %v239
      %v511 = vunpack.c.l.b16 %v240
      %v512 = vunpack.c.l.b16 %v241
      %v513 = vunpack.c.l.b16 %v242
      %v514 = vunpack.c.l.b16 %v243
      %v515 = vunpack.c.l.b16 %v244
      %v516 = vunpack.c.l.b16 %v245
      %v517 = vunpack.c.l.b16 %v246
      %v518 = vunpack.c.l.b16 %v247
      %v519 = vunpack.c.l.b16 %v248
      %v520 = vunpack.c.l.b16 %v249
      %v521 = vunpack.c.l.b16 %v250
      %v522 = vunpack.c.l.b16 %v251
      %v523 = vunpack.c.l.b16 %v252
      %v524 = vunpack.c.l.b16 %v253
      %v525 = vunpack.c.l.b16 %v254
      %v526 = vunpack.c.l.b16 %v255
      %v527 = vunpack.c.l.b16 %v256
      %v528 = vunpack.c.l.b16 %v257
      %v529 = vunpack.c.l.b16 %v258
      %v530 = vunpack.c.l.b16 %v259
      %v531 = vunpack.c.l.b16 %v260
      %v532 = vunpack.c.l.b16 %v261
      %v533 = vunpack.c.l.b16 %v262
      %v534 = vunpack.c.l.b16 %v263
      %v535 = vunpack.c.l.b16 %v264
      %v536 = vunpack.c.l.b16 %v265
      %v537 = vunpack.c.l.b16 %v266
      %v538 = vunpack.c.l.b16 %v267
      %v539 = vunpack.c.l.b16 %v268
      %v540 = vunpack.c.l.b16 %v269
      %v541 = vunpack.c.l.b16 %v270
      %v542 = vunpack.c.l.b16 %v271
      %v543 = vunpack.c.l.b16 %v272
      %v544 = vunpack.c.l.b16 %v273
      %v545 = vunpack.c.l.b16 %v274
      %v546 = vunpack.c.l.b16 %v275
      %v547 = vunpack.c.l.b16 %v276
      %v548 = vunpack.c.l.b16 %v277
      %v549 = vunpack.c.l.b16 %v278
      %v550 = vunpack.c.l.b16 %v279
      %v551 = vunpack.c.l.b16 %v280
      %v552 = vunpack.c.l.b16 %v281
      %v553 = vunpack.c.l.b16 %v282
      %v554 = vunpack.c.l.b16 %v283
      %v555 = vunpack.c.l.b16 %v284
      %v556 = vunpack.c.l.b16 %v285
      %v557 = vunpack.c.l.b16 %v286
      %v558 = vunpack.c.l.b16 %v287
      %v559 = vunpack.c.l.b16 %v288
      %v560 = vunpack.c.l.b16 %v289
      %v561 = vunpack.c.l.b16 %v290
      %v562 = vunpack.c.l.b16 %v291
      %v563 = vunpack.c.l.b16 %v292
      %v564 = vunpack.c.l.b16 %v293
      %v565 = vunpack.c.l.b16 %v294
      %v566 = vunpack.c.l.b16 %v295
      %v567 = vunpack.c.l.b16 %v296
      %v568 = vunpack.c.l.b16 %v297
      %v569 = vunpack.c.l.b16 %v298
      %v570 = vunpack.c.l.b16 %v299
      %v571 = vunpack.c.l.b16 %v300
      %v572 = vunpack.c.l.b16 %v301
      %v573 = vunpack.c.l.b16 %v302
      %v574 = vpack.c.b16 %v447, %v446
      %v575 = vpack.c.b16 %v449, %v448
      %v576 = vpack.c.b16 %v451, %v450
      %v577 = vpack.c.b16 %v453, %v452
      %v578 = vpack.c.b16 %v455, %v454
      %v579 = vpack.c.b16 %v457, %v456
      %v580 = vpack.c.b16 %v459, %v458
      %v581 = vpack.c.b16 %v461, %v460
      %v582 = vpack.c.b16 %v463, %v462
      %v583 = vpack.c.b16 %v465, %v464
      %v584 = vpack.c.b16 %v467, %v466
      %v585 = vpack.c.b16 %v469, %v468
      %v586 = vpack.c.b16 %v471, %v470
      %v587 = vpack.c.b16 %v473, %v472
      %v588 = vpack.c.b16 %v475, %v474
      %v589 = vpack.c.b16 %v477, %v476
      %v590 = vpack.c.b16 %v479, %v478
      %v591 = vpack.c.b16 %v481, %v480
      %v592 = vpack.c.b16 %v483, %v482
      %v593 = vpack.c.b16 %v485, %v484
      %v594 = vpack.c.b16 %v487, %v486
      %v595 = vpack.c.b16 %v489, %v488
      %v596 = vpack.c.b16 %v491, %v490
      %v597 = vpack.c.b16 %v493, %v492
      %v598 = vpack.c.b16 %v495, %v494
      %v599 = vpack.c.b16 %v497, %v496
      %v600 = vpack.c.b16 %v499, %v498
      %v601 = vpack.c.b16 %v501, %v500
      %v602 = vpack.c.b16 %v503, %v502
      %v603 = vpack.c.b16 %v505, %v504
      %v604 = vpack.c.b16 %v507, %v506
      %v605 = vpack.c.b16 %v509, %v508
      %v606 = vpack.c.b16 %v511, %v510
      %v607 = vpack.c.b16 %v513, %v512
      %v608 = vpack.c.b16 %v515, %v514
      %v609 = vpack.c.b16 %v517, %v516
      %v610 = vpack.c.b16 %v519, %v518
      %v611 = vpack.c.b16 %v521, %v520
      %v612 = vpack.c.b16 %v523, %v522
      %v613 = vpack.c.b16 %v525, %v524
      %v614 = vpack.c.b16 %v527, %v526
      %v615 = vpack.c.b16 %v529, %v528
      %v616 = vpack.c.b16 %v531, %v530
      %v617 = vpack.c.b16 %v533, %v532
      %v618 = vpack.c.b16 %v535, %v534
      %v619 = vpack.c.b16 %v537, %v536
      %v620 = vpack.c.b16 %v539, %v538
      %v621 = vpack.c.b16 %v541, %v540
      %v622 = vpack.c.b16 %v543, %v542
      %v623 = vpack.c.b16 %v545, %v544
      %v624 = vpack.c.b16 %v547, %v546
      %v625 = vpack.c.b16 %v549, %v548
      %v626 = vpack.c.b16 %v551, %v550
      %v627 = vpack.c.b16 %v553, %v552
      %v628 = vpack.c.b16 %v555, %v554
      %v629 = vpack.c.b16 %v557, %v556
      %v630 = vpack.c.b16 %v559, %v558
      %v631 = vpack.c.b16 %v561, %v560
      %v632 = vpack.c.b16 %v563, %v562
      %v633 = vpack.c.b16 %v565, %v564
      %v634 = vpack.c.b16 %v567, %v566
      %v635 = vpack.c.b16 %v569, %v568
      %v636 = vpack.c.b16 %v571, %v570
      %v637 = vpack.c.b16 %v573, %v572
      %v646 = vunpack.c.l.b16 %v303
      %v647 = vunpack.c.l.b16 %v304
      %v648 = vunpack.c.l.b16 %v305
      %v649 = vunpack.c.l.b16 %v306
      %v650 = vunpack.c.l.b16 %v307
      %v651 = vunpack.c.l.b16 %v308
      %v652 = vunpack.c.l.b16 %v309
      %v653 = vunpack.c.l.b16 %v310
      %v654 = vpack.c.b16 %v647, %v646
      %v655 = vpack.c.b16 %v649, %v648
      %v656 = vpack.c.b16 %v651, %v650
      %v657 = vpack.c.b16 %v653, %v652
      %vm662 = vcmask 523264
      %v664 = vsel %vm662, %v574, 0
      %v667 = vsel %vm662, %v575, 0
      %v670 = vsel %vm662, %v576, 0
      %v673 = vsel %vm662, %v577, 0
      %v676 = vsel %vm662, %v578, 0
      %v679 = vsel %vm662, %v579, 0
      %v682 = vsel %vm662, %v580, 0
      %v685 = vsel %vm662, %v581, 0
      %v688 = vsel %vm662, %v582, 0
      %v691 = vsel %vm662, %v583, 0
      %v694 = vsel %vm662, %v584, 0
      %v697 = vsel %vm662, %v585, 0
      %v700 = vsel %vm662, %v586, 0
      %v703 = vsel %vm662, %v587, 0
      %v706 = vsel %vm662, %v588, 0
      %v709 = vsel %vm662, %v589, 0
      %v712 = vsel %vm662, %v590, 0
      %v715 = vsel %vm662, %v591, 0
      %v718 = vsel %vm662, %v592, 0
      %v721 = vsel %vm662, %v593, 0
      %v724 = vsel %vm662, %v594, 0
      %v727 = vsel %vm662, %v595, 0
      %v730 = vsel %vm662, %v596, 0
      %v733 = vsel %vm662, %v597, 0
      %v736 = vsel %vm662, %v598, 0
      %v739 = vsel %vm662, %v599, 0
      %v742 = vsel %vm662, %v600, 0
      %v745 = vsel %vm662, %v601, 0
      %v748 = vsel %vm662, %v602, 0
      %v751 = vsel %vm662, %v603, 0
      %v754 = vsel %vm662, %v604, 0
      %v757 = vsel %vm662, %v605, 0
      %v760 = vsel %vm662, %v606, 0
      %v763 = vsel %vm662, %v607, 0
      %v766 = vsel %vm662, %v608, 0
      %v769 = vsel %vm662, %v609, 0
      %v772 = vsel %vm662, %v610, 0
      %v775 = vsel %vm662, %v611, 0
      %v778 = vsel %vm662, %v612, 0
      %v781 = vsel %vm662, %v613, 0
      %v784 = vsel %vm662, %v614, 0
      %v787 = vsel %vm662, %v615, 0
      %v790 = vsel %vm662, %v616, 0
      %v793 = vsel %vm662, %v617, 0
      %v796 = vsel %vm662, %v618, 0
      %v799 = vsel %vm662, %v619, 0
      %v802 = vsel %vm662, %v620, 0
      %v805 = vsel %vm662, %v621, 0
      %v808 = vsel %vm662, %v622, 0
      %v811 = vsel %vm662, %v623, 0
      %v814 = vsel %vm662, %v624, 0
      %v817 = vsel %vm662, %v625, 0
      %v820 = vsel %vm662, %v626, 0
      %v823 = vsel %vm662, %v627, 0
      %v826 = vsel %vm662, %v628, 0
      %v829 = vsel %vm662, %v629, 0
      %v832 = vsel %vm662, %v630, 0
      %v835 = vsel %vm662, %v631, 0
      %v838 = vsel %vm662, %v632, 0
      %v841 = vsel %vm662, %v633, 0
      %v844 = vsel %vm662, %v634, 0
      %v847 = vsel %vm662, %v635, 0
      %v850 = vsel %vm662, %v636, 0
      %v853 = vsel %vm662, %v637, 0
      %855 = vmatprep.subr.bf16.mxu0 0
      %856 = vmatpush1.bf16.msra.mxu0 %v654
      %857 = vmatprep.subr.bf16.mxu0 0
      %858 = vmatpush1.bf16.msra.mxu0 %v655
      %859 = vmatprep.subr.bf16.mxu0 0
      %860 = vmatpush1.bf16.msra.mxu0 %v656
      %861 = vmatprep.subr.bf16.mxu0 0
      %862 = vmatpush1.bf16.msra.mxu0 %v657
      %863 = vmatprep.subr.bf16.mxu0 0
      %864 = vmatpush1.bf16.msra.mxu0 0
      %865 = vmatprep.subr.bf16.mxu0 0
      %866 = vmatpush1.bf16.msra.mxu0 0
      %867 = vmatprep.subr.bf16.mxu0 0
      %868 = vmatpush1.bf16.msra.mxu0 0
      %869 = vmatprep.subr.bf16.mxu0 0
      %870 = vmatpush1.bf16.msra.mxu0 0
      %871 = vmatprep.subr.bf16.mxu0 0
      %872 = vmatpush1.bf16.msra.mxu0 0
      %873 = vmatprep.subr.bf16.mxu0 0
      %874 = vmatpush1.bf16.msra.mxu0 0
      %875 = vmatprep.subr.bf16.mxu0 0
      %876 = vmatpush1.bf16.msra.mxu0 0
      %877 = vmatprep.subr.bf16.mxu0 0
      %878 = vmatpush1.bf16.msra.mxu0 0
      %879 = vmatprep.subr.bf16.mxu0 0
      %880 = vmatpush1.bf16.msra.mxu0 0
      %881 = vmatprep.subr.bf16.mxu0 0
      %882 = vmatpush1.bf16.msra.mxu0 0
      %883 = vmatprep.subr.bf16.mxu0 0
      %884 = vmatpush1.bf16.msra.mxu0 0
      %885 = vmatprep.subr.bf16.mxu0 0
      %886 = vmatpush1.bf16.msra.mxu0 0
      %887 = vmatprep.mubr.bf16.mxu0 0
      %888 = vmatmul.mubr.bf16.gmra.mrb[0].mxu0 %v664
      %v889 = vpop.f32.mrb[0].mxu0
      %v890 = vadd.f32 %v316, %v889
      %v891 = vpop.f32.mrb[0].mxu0
      %v892 = vpop.f32.mrb[0].mxu0
      %v893 = vadd.f32 %v316, %v892
      %v894 = vpop.f32.mrb[0].mxu0
      %895 = vmatprep.mubr.bf16.mxu0 0
      %896 = vmatmul.mubr.bf16.gmra.mrb[0].mxu0 %v667
      %v897 = vpop.f32.mrb[0].mxu0
      %v898 = vadd.f32 %v316, %v897
      %v899 = vpop.f32.mrb[0].mxu0
      %v900 = vpop.f32.mrb[0].mxu0
      %v901 = vadd.f32 %v316, %v900
      %v902 = vpop.f32.mrb[0].mxu0
      %903 = vmatprep.mubr.bf16.mxu0 0
      %904 = vmatmul.mubr.bf16.gmra.mrb[0].mxu0 %v670
      %v905 = vpop.f32.mrb[0].mxu0
      %v906 = vadd.f32 %v316, %v905
      %v907 = vpop.f32.mrb[0].mxu0
      %v908 = vpop.f32.mrb[0].mxu0
      %v909 = vadd.f32 %v316, %v908
      %v910 = vpop.f32.mrb[0].mxu0
      %911 = vmatprep.mubr.bf16.mxu0 0
      %912 = vmatmul.mubr.bf16.gmra.mrb[0].mxu0 %v673
      %v913 = vpop.f32.mrb[0].mxu0
      %v914 = vadd.f32 %v316, %v913
      %v915 = vpop.f32.mrb[0].mxu0
      %v916 = vpop.f32.mrb[0].mxu0
      %v917 = vadd.f32 %v316, %v916
      %v918 = vpop.f32.mrb[0].mxu0
      %919 = vmatprep.mubr.bf16.mxu0 0
      %920 = vmatmul.mubr.bf16.gmra.mrb[0].mxu0 %v676
      %v921 = vpop.f32.mrb[0].mxu0
      %v922 = vadd.f32 %v316, %v921
      %v923 = vpop.f32.mrb[0].mxu0
      %v924 = vpop.f32.mrb[0].mxu0
      %v925 = vadd.f32 %v316, %v924
      %v926 = vpop.f32.mrb[0].mxu0
      %927 = vmatprep.mubr.bf16.mxu0 0
      %928 = vmatmul.mubr.bf16.gmra.mrb[0].mxu0 %v679
      %v929 = vpop.f32.mrb[0].mxu0
      %v930 = vadd.f32 %v316, %v929
      %v931 = vpop.f32.mrb[0].mxu0
      %v932 = vpop.f32.mrb[0].mxu0
      %v933 = vadd.f32 %v316, %v932
      %v934 = vpop.f32.mrb[0].mxu0
      %935 = vmatprep.mubr.bf16.mxu0 0
      %936 = vmatmul.mubr.bf16.gmra.mrb[0].mxu0 %v682
      %v937 = vpop.f32.mrb[0].mxu0
      %v938 = vadd.f32 %v316, %v937
      %v939 = vpop.f32.mrb[0].mxu0
      %v940 = vpop.f32.mrb[0].mxu0
      %v941 = vadd.f32 %v316, %v940
      %v942 = vpop.f32.mrb[0].mxu0
      %943 = vmatprep.mubr.bf16.mxu0 0
      %944 = vmatmul.mubr.bf16.gmra.mrb[0].mxu0 %v685
      %v945 = vpop.f32.mrb[0].mxu0
      %v946 = vadd.f32 %v316, %v945
      %v947 = vpop.f32.mrb[0].mxu0
      %v948 = vpop.f32.mrb[0].mxu0
      %v949 = vadd.f32 %v316, %v948
      %v950 = vpop.f32.mrb[0].mxu0
      %951 = vmatprep.mubr.bf16.mxu0 0
      %952 = vmatmul.mubr.bf16.gmra.mrb[0].mxu0 %v688
      %v953 = vpop.f32.mrb[0].mxu0
      %v954 = vadd.f32 %v316, %v953
      %v955 = vpop.f32.mrb[0].mxu0
      %v956 = vpop.f32.mrb[0].mxu0
      %v957 = vadd.f32 %v316, %v956
      %v958 = vpop.f32.mrb[0].mxu0
      %959 = vmatprep.mubr.bf16.mxu0 0
      %960 = vmatmul.mubr.bf16.gmra.mrb[0].mxu0 %v691
      %v961 = vpop.f32.mrb[0].mxu0
      %v962 = vadd.f32 %v316, %v961
      %v963 = vpop.f32.mrb[0].mxu0
      %v964 = vpop.f32.mrb[0].mxu0
      %v965 = vadd.f32 %v316, %v964
      %v966 = vpop.f32.mrb[0].mxu0
      %967 = vmatprep.mubr.bf16.mxu0 0
      %968 = vmatmul.mubr.bf16.gmra.mrb[0].mxu0 %v694
      %v969 = vpop.f32.mrb[0].mxu0
      %v970 = vadd.f32 %v316, %v969
      %v971 = vpop.f32.mrb[0].mxu0
      %v972 = vpop.f32.mrb[0].mxu0
      %v973 = vadd.f32 %v316, %v972
      %v974 = vpop.f32.mrb[0].mxu0
      %975 = vmatprep.mubr.bf16.mxu0 0
      %976 = vmatmul.mubr.bf16.gmra.mrb[0].mxu0 %v697
      %v977 = vpop.f32.mrb[0].mxu0
      %v978 = vadd.f32 %v316, %v977
      %v979 = vpop.f32.mrb[0].mxu0
      %v980 = vpop.f32.mrb[0].mxu0
      %v981 = vadd.f32 %v316, %v980
      %v982 = vpop.f32.mrb[0].mxu0
      %983 = vmatprep.mubr.bf16.mxu0 0
      %984 = vmatmul.mubr.bf16.gmra.mrb[0].mxu0 %v700
      %v985 = vpop.f32.mrb[0].mxu0
      %v986 = vadd.f32 %v316, %v985
      %v987 = vpop.f32.mrb[0].mxu0
      %v988 = vpop.f32.mrb[0].mxu0
      %v989 = vadd.f32 %v316, %v988
      %v990 = vpop.f32.mrb[0].mxu0
      %991 = vmatprep.mubr.bf16.mxu0 0
      %992 = vmatmul.mubr.bf16.gmra.mrb[0].mxu0 %v703
      %v993 = vpop.f32.mrb[0].mxu0
      %v994 = vadd.f32 %v316, %v993
      %v995 = vpop.f32.mrb[0].mxu0
      %v996 = vpop.f32.mrb[0].mxu0
      %v997 = vadd.f32 %v316, %v996
      %v998 = vpop.f32.mrb[0].mxu0
      %999 = vmatprep.mubr.bf16.mxu0 0
      %1000 = vmatmul.mubr.bf16.gmra.mrb[0].mxu0 %v706
      %v1001 = vpop.f32.mrb[0].mxu0
      %v1002 = vadd.f32 %v316, %v1001
      %v1003 = vpop.f32.mrb[0].mxu0
      %v1004 = vpop.f32.mrb[0].mxu0
      %v1005 = vadd.f32 %v316, %v1004
      %v1006 = vpop.f32.mrb[0].mxu0
      %1007 = vmatprep.mubr.bf16.mxu0 0
      %1008 = vmatmul.mubr.bf16.gmra.mrb[0].mxu0 %v709
      %v1009 = vpop.f32.mrb[0].mxu0
      %v1010 = vadd.f32 %v316, %v1009
      %v1011 = vpop.f32.mrb[0].mxu0
      %v1012 = vpop.f32.mrb[0].mxu0
      %v1013 = vadd.f32 %v316, %v1012
      %v1014 = vpop.f32.mrb[0].mxu0
      %1015 = vmatprep.mubr.bf16.mxu0 0
      %1016 = vmatmul.mubr.bf16.gmra.mrb[0].mxu0 %v712
      %v1017 = vpop.f32.mrb[0].mxu0
      %v1018 = vadd.f32 %v316, %v1017
      %v1019 = vpop.f32.mrb[0].mxu0
      %v1020 = vpop.f32.mrb[0].mxu0
      %v1021 = vadd.f32 %v316, %v1020
      %v1022 = vpop.f32.mrb[0].mxu0
      %1023 = vmatprep.mubr.bf16.mxu0 0
      %1024 = vmatmul.mubr.bf16.gmra.mrb[0].mxu0 %v715
      %v1025 = vpop.f32.mrb[0].mxu0
      %v1026 = vadd.f32 %v316, %v1025
      %v1027 = vpop.f32.mrb[0].mxu0
      %v1028 = vpop.f32.mrb[0].mxu0
      %v1029 = vadd.f32 %v316, %v1028
      %v1030 = vpop.f32.mrb[0].mxu0
      %1031 = vmatprep.mubr.bf16.mxu0 0
      %1032 = vmatmul.mubr.bf16.gmra.mrb[0].mxu0 %v718
      %v1033 = vpop.f32.mrb[0].mxu0
      %v1034 = vadd.f32 %v316, %v1033
      %v1035 = vpop.f32.mrb[0].mxu0
      %v1036 = vpop.f32.mrb[0].mxu0
      %v1037 = vadd.f32 %v316, %v1036
      %v1038 = vpop.f32.mrb[0].mxu0
      %1039 = vmatprep.mubr.bf16.mxu0 0
      %1040 = vmatmul.mubr.bf16.gmra.mrb[0].mxu0 %v721
      %v1041 = vpop.f32.mrb[0].mxu0
      %v1042 = vadd.f32 %v316, %v1041
      %v1043 = vpop.f32.mrb[0].mxu0
      %v1044 = vpop.f32.mrb[0].mxu0
      %v1045 = vadd.f32 %v316, %v1044
      %v1046 = vpop.f32.mrb[0].mxu0
      %1047 = vmatprep.mubr.bf16.mxu0 0
      %1048 = vmatmul.mubr.bf16.gmra.mrb[0].mxu0 %v724
      %v1049 = vpop.f32.mrb[0].mxu0
      %v1050 = vadd.f32 %v316, %v1049
      %v1051 = vpop.f32.mrb[0].mxu0
      %v1052 = vpop.f32.mrb[0].mxu0
      %v1053 = vadd.f32 %v316, %v1052
      %v1054 = vpop.f32.mrb[0].mxu0
      %1055 = vmatprep.mubr.bf16.mxu0 0
      %1056 = vmatmul.mubr.bf16.gmra.mrb[0].mxu0 %v727
      %v1057 = vpop.f32.mrb[0].mxu0
      %v1058 = vadd.f32 %v316, %v1057
      %v1059 = vpop.f32.mrb[0].mxu0
      %v1060 = vpop.f32.mrb[0].mxu0
      %v1061 = vadd.f32 %v316, %v1060
      %v1062 = vpop.f32.mrb[0].mxu0
      %1063 = vmatprep.mubr.bf16.mxu0 0
      %1064 = vmatmul.mubr.bf16.gmra.mrb[0].mxu0 %v730
      %v1065 = vpop.f32.mrb[0].mxu0
      %v1066 = vadd.f32 %v316, %v1065
      %v1067 = vpop.f32.mrb[0].mxu0
      %v1068 = vpop.f32.mrb[0].mxu0
      %v1069 = vadd.f32 %v316, %v1068
      %v1070 = vpop.f32.mrb[0].mxu0
      %1071 = vmatprep.mubr.bf16.mxu0 0
      %1072 = vmatmul.mubr.bf16.gmra.mrb[0].mxu0 %v733
      %v1073 = vpop.f32.mrb[0].mxu0
      %v1074 = vadd.f32 %v316, %v1073
      %v1075 = vpop.f32.mrb[0].mxu0
      %v1076 = vpop.f32.mrb[0].mxu0
      %v1077 = vadd.f32 %v316, %v1076
      %v1078 = vpop.f32.mrb[0].mxu0
      %1079 = vmatprep.mubr.bf16.mxu0 0
      %1080 = vmatmul.mubr.bf16.gmra.mrb[0].mxu0 %v736
      %v1081 = vpop.f32.mrb[0].mxu0
      %v1082 = vadd.f32 %v316, %v1081
      %v1083 = vpop.f32.mrb[0].mxu0
      %v1084 = vpop.f32.mrb[0].mxu0
      %v1085 = vadd.f32 %v316, %v1084
      %v1086 = vpop.f32.mrb[0].mxu0
      %1087 = vmatprep.mubr.bf16.mxu0 0
      %1088 = vmatmul.mubr.bf16.gmra.mrb[0].mxu0 %v739
      %v1089 = vpop.f32.mrb[0].mxu0
      %v1090 = vadd.f32 %v316, %v1089
      %v1091 = vpop.f32.mrb[0].mxu0
      %v1092 = vpop.f32.mrb[0].mxu0
      %v1093 = vadd.f32 %v316, %v1092
      %v1094 = vpop.f32.mrb[0].mxu0
      %1095 = vmatprep.mubr.bf16.mxu0 0
      %1096 = vmatmul.mubr.bf16.gmra.mrb[0].mxu0 %v742
      %v1097 = vpop.f32.mrb[0].mxu0
      %v1098 = vadd.f32 %v316, %v1097
      %v1099 = vpop.f32.mrb[0].mxu0
      %v1100 = vpop.f32.mrb[0].mxu0
      %v1101 = vadd.f32 %v316, %v1100
      %v1102 = vpop.f32.mrb[0].mxu0
      %1103 = vmatprep.mubr.bf16.mxu0 0
      %1104 = vmatmul.mubr.bf16.gmra.mrb[0].mxu0 %v745
      %v1105 = vpop.f32.mrb[0].mxu0
      %v1106 = vadd.f32 %v316, %v1105
      %v1107 = vpop.f32.mrb[0].mxu0
      %v1108 = vpop.f32.mrb[0].mxu0
      %v1109 = vadd.f32 %v316, %v1108
      %v1110 = vpop.f32.mrb[0].mxu0
      %1111 = vmatprep.mubr.bf16.mxu0 0
      %1112 = vmatmul.mubr.bf16.gmra.mrb[0].mxu0 %v748
      %v1113 = vpop.f32.mrb[0].mxu0
      %v1114 = vadd.f32 %v316, %v1113
      %v1115 = vpop.f32.mrb[0].mxu0
      %v1116 = vpop.f32.mrb[0].mxu0
      %v1117 = vadd.f32 %v316, %v1116
      %v1118 = vpop.f32.mrb[0].mxu0
      %1119 = vmatprep.mubr.bf16.mxu0 0
      %1120 = vmatmul.mubr.bf16.gmra.mrb[0].mxu0 %v751
      %v1121 = vpop.f32.mrb[0].mxu0
      %v1122 = vadd.f32 %v316, %v1121
      %v1123 = vpop.f32.mrb[0].mxu0
      %v1124 = vpop.f32.mrb[0].mxu0
      %v1125 = vadd.f32 %v316, %v1124
      %v1126 = vpop.f32.mrb[0].mxu0
      %1127 = vmatprep.mubr.bf16.mxu0 0
      %1128 = vmatmul.mubr.bf16.gmra.mrb[0].mxu0 %v754
      %v1129 = vpop.f32.mrb[0].mxu0
      %v1130 = vadd.f32 %v316, %v1129
      %v1131 = vpop.f32.mrb[0].mxu0
      %v1132 = vpop.f32.mrb[0].mxu0
      %v1133 = vadd.f32 %v316, %v1132
      %v1134 = vpop.f32.mrb[0].mxu0
      %1135 = vmatprep.mubr.bf16.mxu0 0
      %1136 = vmatmul.mubr.bf16.gmra.mrb[0].mxu0 %v757
      %v1137 = vpop.f32.mrb[0].mxu0
      %v1138 = vadd.f32 %v316, %v1137
      %v1139 = vpop.f32.mrb[0].mxu0
      %v1140 = vpop.f32.mrb[0].mxu0
      %v1141 = vadd.f32 %v316, %v1140
      %v1142 = vpop.f32.mrb[0].mxu0
      %1143 = vmatprep.mubr.bf16.mxu0 0
      %1144 = vmatmul.mubr.bf16.gmra.mrb[0].mxu0 %v760
      %v1145 = vpop.f32.mrb[0].mxu0
      %v1146 = vadd.f32 %v316, %v1145
      %v1147 = vpop.f32.mrb[0].mxu0
      %v1148 = vpop.f32.mrb[0].mxu0
      %v1149 = vadd.f32 %v316, %v1148
      %v1150 = vpop.f32.mrb[0].mxu0
      %1151 = vmatprep.mubr.bf16.mxu0 0
      %1152 = vmatmul.mubr.bf16.gmra.mrb[0].mxu0 %v763
      %v1153 = vpop.f32.mrb[0].mxu0
      %v1154 = vadd.f32 %v316, %v1153
      %v1155 = vpop.f32.mrb[0].mxu0
      %v1156 = vpop.f32.mrb[0].mxu0
      %v1157 = vadd.f32 %v316, %v1156
      %v1158 = vpop.f32.mrb[0].mxu0
      %1159 = vmatprep.mubr.bf16.mxu0 0
      %1160 = vmatmul.mubr.bf16.gmra.mrb[0].mxu0 %v766
      %v1161 = vpop.f32.mrb[0].mxu0
      %v1162 = vadd.f32 %v316, %v1161
      %v1163 = vpop.f32.mrb[0].mxu0
      %v1164 = vpop.f32.mrb[0].mxu0
      %v1165 = vadd.f32 %v316, %v1164
      %v1166 = vpop.f32.mrb[0].mxu0
      %1167 = vmatprep.mubr.bf16.mxu0 0
      %1168 = vmatmul.mubr.bf16.gmra.mrb[0].mxu0 %v769
      %v1169 = vpop.f32.mrb[0].mxu0
      %v1170 = vadd.f32 %v316, %v1169
      %v1171 = vpop.f32.mrb[0].mxu0
      %v1172 = vpop.f32.mrb[0].mxu0
      %v1173 = vadd.f32 %v316, %v1172
      %v1174 = vpop.f32.mrb[0].mxu0
      %1175 = vmatprep.mubr.bf16.mxu0 0
      %1176 = vmatmul.mubr.bf16.gmra.mrb[0].mxu0 %v772
      %v1177 = vpop.f32.mrb[0].mxu0
      %v1178 = vadd.f32 %v316, %v1177
      %v1179 = vpop.f32.mrb[0].mxu0
      %v1180 = vpop.f32.mrb[0].mxu0
      %v1181 = vadd.f32 %v316, %v1180
      %v1182 = vpop.f32.mrb[0].mxu0
      %1183 = vmatprep.mubr.bf16.mxu0 0
      %1184 = vmatmul.mubr.bf16.gmra.mrb[0].mxu0 %v775
      %v1185 = vpop.f32.mrb[0].mxu0
      %v1186 = vadd.f32 %v316, %v1185
      %v1187 = vpop.f32.mrb[0].mxu0
      %v1188 = vpop.f32.mrb[0].mxu0
      %v1189 = vadd.f32 %v316, %v1188
      %v1190 = vpop.f32.mrb[0].mxu0
      %1191 = vmatprep.mubr.bf16.mxu0 0
      %1192 = vmatmul.mubr.bf16.gmra.mrb[0].mxu0 %v778
      %v1193 = vpop.f32.mrb[0].mxu0
      %v1194 = vadd.f32 %v316, %v1193
      %v1195 = vpop.f32.mrb[0].mxu0
      %v1196 = vpop.f32.mrb[0].mxu0
      %v1197 = vadd.f32 %v316, %v1196
      %v1198 = vpop.f32.mrb[0].mxu0
      %1199 = vmatprep.mubr.bf16.mxu0 0
      %1200 = vmatmul.mubr.bf16.gmra.mrb[0].mxu0 %v781
      %v1201 = vpop.f32.mrb[0].mxu0
      %v1202 = vadd.f32 %v316, %v1201
      %v1203 = vpop.f32.mrb[0].mxu0
      %v1204 = vpop.f32.mrb[0].mxu0
      %v1205 = vadd.f32 %v316, %v1204
      %v1206 = vpop.f32.mrb[0].mxu0
      %1207 = vmatprep.mubr.bf16.mxu0 0
      %1208 = vmatmul.mubr.bf16.gmra.mrb[0].mxu0 %v784
      %v1209 = vpop.f32.mrb[0].mxu0
      %v1210 = vadd.f32 %v316, %v1209
      %v1211 = vpop.f32.mrb[0].mxu0
      %v1212 = vpop.f32.mrb[0].mxu0
      %v1213 = vadd.f32 %v316, %v1212
      %v1214 = vpop.f32.mrb[0].mxu0
      %1215 = vmatprep.mubr.bf16.mxu0 0
      %1216 = vmatmul.mubr.bf16.gmra.mrb[0].mxu0 %v787
      %v1217 = vpop.f32.mrb[0].mxu0
      %v1218 = vadd.f32 %v316, %v1217
      %v1219 = vpop.f32.mrb[0].mxu0
      %v1220 = vpop.f32.mrb[0].mxu0
      %v1221 = vadd.f32 %v316, %v1220
      %v1222 = vpop.f32.mrb[0].mxu0
      %1223 = vmatprep.mubr.bf16.mxu0 0
      %1224 = vmatmul.mubr.bf16.gmra.mrb[0].mxu0 %v790
      %v1225 = vpop.f32.mrb[0].mxu0
      %v1226 = vadd.f32 %v316, %v1225
      %v1227 = vpop.f32.mrb[0].mxu0
      %v1228 = vpop.f32.mrb[0].mxu0
      %v1229 = vadd.f32 %v316, %v1228
      %v1230 = vpop.f32.mrb[0].mxu0
      %1231 = vmatprep.mubr.bf16.mxu0 0
      %1232 = vmatmul.mubr.bf16.gmra.mrb[0].mxu0 %v793
      %v1233 = vpop.f32.mrb[0].mxu0
      %v1234 = vadd.f32 %v316, %v1233
      %v1235 = vpop.f32.mrb[0].mxu0
      %v1236 = vpop.f32.mrb[0].mxu0
      %v1237 = vadd.f32 %v316, %v1236
      %v1238 = vpop.f32.mrb[0].mxu0
      %1239 = vmatprep.mubr.bf16.mxu0 0
      %1240 = vmatmul.mubr.bf16.gmra.mrb[0].mxu0 %v796
      %v1241 = vpop.f32.mrb[0].mxu0
      %v1242 = vadd.f32 %v316, %v1241
      %v1243 = vpop.f32.mrb[0].mxu0
      %v1244 = vpop.f32.mrb[0].mxu0
      %v1245 = vadd.f32 %v316, %v1244
      %v1246 = vpop.f32.mrb[0].mxu0
      %1247 = vmatprep.mubr.bf16.mxu0 0
      %1248 = vmatmul.mubr.bf16.gmra.mrb[0].mxu0 %v799
      %v1249 = vpop.f32.mrb[0].mxu0
      %v1250 = vadd.f32 %v316, %v1249
      %v1251 = vpop.f32.mrb[0].mxu0
      %v1252 = vpop.f32.mrb[0].mxu0
      %v1253 = vadd.f32 %v316, %v1252
      %v1254 = vpop.f32.mrb[0].mxu0
      %1255 = vmatprep.mubr.bf16.mxu0 0
      %1256 = vmatmul.mubr.bf16.gmra.mrb[0].mxu0 %v802
      %v1257 = vpop.f32.mrb[0].mxu0
      %v1258 = vadd.f32 %v316, %v1257
      %v1259 = vpop.f32.mrb[0].mxu0
      %v1260 = vpop.f32.mrb[0].mxu0
      %v1261 = vadd.f32 %v316, %v1260
      %v1262 = vpop.f32.mrb[0].mxu0
      %1263 = vmatprep.mubr.bf16.mxu0 0
      %1264 = vmatmul.mubr.bf16.gmra.mrb[0].mxu0 %v805
      %v1265 = vpop.f32.mrb[0].mxu0
      %v1266 = vadd.f32 %v316, %v1265
      %v1267 = vpop.f32.mrb[0].mxu0
      %v1268 = vpop.f32.mrb[0].mxu0
      %v1269 = vadd.f32 %v316, %v1268
      %v1270 = vpop.f32.mrb[0].mxu0
      %1271 = vmatprep.mubr.bf16.mxu0 0
      %1272 = vmatmul.mubr.bf16.gmra.mrb[0].mxu0 %v808
      %v1273 = vpop.f32.mrb[0].mxu0
      %v1274 = vadd.f32 %v316, %v1273
      %v1275 = vpop.f32.mrb[0].mxu0
      %v1276 = vpop.f32.mrb[0].mxu0
      %v1277 = vadd.f32 %v316, %v1276
      %v1278 = vpop.f32.mrb[0].mxu0
      %1279 = vmatprep.mubr.bf16.mxu0 0
      %1280 = vmatmul.mubr.bf16.gmra.mrb[0].mxu0 %v811
      %v1281 = vpop.f32.mrb[0].mxu0
      %v1282 = vadd.f32 %v316, %v1281
      %v1283 = vpop.f32.mrb[0].mxu0
      %v1284 = vpop.f32.mrb[0].mxu0
      %v1285 = vadd.f32 %v316, %v1284
      %v1286 = vpop.f32.mrb[0].mxu0
      %1287 = vmatprep.mubr.bf16.mxu0 0
      %1288 = vmatmul.mubr.bf16.gmra.mrb[0].mxu0 %v814
      %v1289 = vpop.f32.mrb[0].mxu0
      %v1290 = vadd.f32 %v316, %v1289
      %v1291 = vpop.f32.mrb[0].mxu0
      %v1292 = vpop.f32.mrb[0].mxu0
      %v1293 = vadd.f32 %v316, %v1292
      %v1294 = vpop.f32.mrb[0].mxu0
      %1295 = vmatprep.mubr.bf16.mxu0 0
      %1296 = vmatmul.mubr.bf16.gmra.mrb[0].mxu0 %v817
      %v1297 = vpop.f32.mrb[0].mxu0
      %v1298 = vadd.f32 %v316, %v1297
      %v1299 = vpop.f32.mrb[0].mxu0
      %v1300 = vpop.f32.mrb[0].mxu0
      %v1301 = vadd.f32 %v316, %v1300
      %v1302 = vpop.f32.mrb[0].mxu0
      %1303 = vmatprep.mubr.bf16.mxu0 0
      %1304 = vmatmul.mubr.bf16.gmra.mrb[0].mxu0 %v820
      %v1305 = vpop.f32.mrb[0].mxu0
      %v1306 = vadd.f32 %v316, %v1305
      %v1307 = vpop.f32.mrb[0].mxu0
      %v1308 = vpop.f32.mrb[0].mxu0
      %v1309 = vadd.f32 %v316, %v1308
      %v1310 = vpop.f32.mrb[0].mxu0
      %1311 = vmatprep.mubr.bf16.mxu0 0
      %1312 = vmatmul.mubr.bf16.gmra.mrb[0].mxu0 %v823
      %v1313 = vpop.f32.mrb[0].mxu0
      %v1314 = vadd.f32 %v316, %v1313
      %v1315 = vpop.f32.mrb[0].mxu0
      %v1316 = vpop.f32.mrb[0].mxu0
      %v1317 = vadd.f32 %v316, %v1316
      %v1318 = vpop.f32.mrb[0].mxu0
      %1319 = vmatprep.mubr.bf16.mxu0 0
      %1320 = vmatmul.mubr.bf16.gmra.mrb[0].mxu0 %v826
      %v1321 = vpop.f32.mrb[0].mxu0
      %v1322 = vadd.f32 %v316, %v1321
      %v1323 = vpop.f32.mrb[0].mxu0
      %v1324 = vpop.f32.mrb[0].mxu0
      %v1325 = vadd.f32 %v316, %v1324
      %v1326 = vpop.f32.mrb[0].mxu0
      %1327 = vmatprep.mubr.bf16.mxu0 0
      %1328 = vmatmul.mubr.bf16.gmra.mrb[0].mxu0 %v829
      %v1329 = vpop.f32.mrb[0].mxu0
      %v1330 = vadd.f32 %v316, %v1329
      %v1331 = vpop.f32.mrb[0].mxu0
      %v1332 = vpop.f32.mrb[0].mxu0
      %v1333 = vadd.f32 %v316, %v1332
      %v1334 = vpop.f32.mrb[0].mxu0
      %1335 = vmatprep.mubr.bf16.mxu0 0
      %1336 = vmatmul.mubr.bf16.gmra.mrb[0].mxu0 %v832
      %v1337 = vpop.f32.mrb[0].mxu0
      %v1338 = vadd.f32 %v316, %v1337
      %v1339 = vpop.f32.mrb[0].mxu0
      %v1340 = vpop.f32.mrb[0].mxu0
      %v1341 = vadd.f32 %v316, %v1340
      %v1342 = vpop.f32.mrb[0].mxu0
      %1343 = vmatprep.mubr.bf16.mxu0 0
      %1344 = vmatmul.mubr.bf16.gmra.mrb[0].mxu0 %v835
      %v1345 = vpop.f32.mrb[0].mxu0
      %v1346 = vadd.f32 %v316, %v1345
      %v1347 = vpop.f32.mrb[0].mxu0
      %v1348 = vpop.f32.mrb[0].mxu0
      %v1349 = vadd.f32 %v316, %v1348
      %v1350 = vpop.f32.mrb[0].mxu0
      %1351 = vmatprep.mubr.bf16.mxu0 0
      %1352 = vmatmul.mubr.bf16.gmra.mrb[0].mxu0 %v838
      %v1353 = vpop.f32.mrb[0].mxu0
      %v1354 = vadd.f32 %v316, %v1353
      %v1355 = vpop.f32.mrb[0].mxu0
      %v1356 = vpop.f32.mrb[0].mxu0
      %v1357 = vadd.f32 %v316, %v1356
      %v1358 = vpop.f32.mrb[0].mxu0
      %1359 = vmatprep.mubr.bf16.mxu0 0
      %1360 = vmatmul.mubr.bf16.gmra.mrb[0].mxu0 %v841
      %v1361 = vpop.f32.mrb[0].mxu0
      %v1362 = vadd.f32 %v316, %v1361
      %v1363 = vpop.f32.mrb[0].mxu0
      %v1364 = vpop.f32.mrb[0].mxu0
      %v1365 = vadd.f32 %v316, %v1364
      %v1366 = vpop.f32.mrb[0].mxu0
      %1367 = vmatprep.mubr.bf16.mxu0 0
      %1368 = vmatmul.mubr.bf16.gmra.mrb[0].mxu0 %v844
      %v1369 = vpop.f32.mrb[0].mxu0
      %v1370 = vadd.f32 %v316, %v1369
      %v1371 = vpop.f32.mrb[0].mxu0
      %v1372 = vpop.f32.mrb[0].mxu0
      %v1373 = vadd.f32 %v316, %v1372
      %v1374 = vpop.f32.mrb[0].mxu0
      %1375 = vmatprep.mubr.bf16.mxu0 0
      %1376 = vmatmul.mubr.bf16.gmra.mrb[0].mxu0 %v847
      %v1377 = vpop.f32.mrb[0].mxu0
      %v1378 = vadd.f32 %v316, %v1377
      %v1379 = vpop.f32.mrb[0].mxu0
      %v1380 = vpop.f32.mrb[0].mxu0
      %v1381 = vadd.f32 %v316, %v1380
      %v1382 = vpop.f32.mrb[0].mxu0
      %1383 = vmatprep.mubr.bf16.mxu0 0
      %1384 = vmatmul.mubr.bf16.gmra.mrb[0].mxu0 %v850
      %v1385 = vpop.f32.mrb[0].mxu0
      %v1386 = vadd.f32 %v316, %v1385
      %v1387 = vpop.f32.mrb[0].mxu0
      %v1388 = vpop.f32.mrb[0].mxu0
      %v1389 = vadd.f32 %v316, %v1388
      %v1390 = vpop.f32.mrb[0].mxu0
      %1391 = vmatprep.mubr.bf16.mxu0 0
      %1392 = vmatmul.mubr.bf16.gmra.mrb[0].mxu0 %v853
      %v1393 = vpop.f32.mrb[0].mxu0
      %v1394 = vadd.f32 %v316, %v1393
      %v1395 = vpop.f32.mrb[0].mxu0
      %v1396 = vpop.f32.mrb[0].mxu0
      %v1397 = vadd.f32 %v316, %v1396
      %v1398 = vpop.f32.mrb[0].mxu0
      %1399 = vdwg.mxu0
      %v1400 = vtanh.pop %v890
      %v1401 = vtanh.pop %v893
      %v1402 = vtanh.pop %v898
      %v1403 = vtanh.pop %v901
      %v1404 = vtanh.pop %v906
      %v1405 = vtanh.pop %v909
      %v1406 = vtanh.pop %v914
      %v1407 = vtanh.pop %v917
      %v1408 = vtanh.pop %v922
      %v1409 = vtanh.pop %v925
      %v1410 = vtanh.pop %v930
      %v1411 = vtanh.pop %v933
      %v1412 = vtanh.pop %v938
      %v1413 = vtanh.pop %v941
      %v1414 = vtanh.pop %v946
      %v1415 = vtanh.pop %v949
      %v1416 = vtanh.pop %v954
      %v1417 = vtanh.pop %v957
      %v1418 = vtanh.pop %v962
      %v1419 = vtanh.pop %v965
      %v1420 = vtanh.pop %v970
      %v1421 = vtanh.pop %v973
      %v1422 = vtanh.pop %v978
      %v1423 = vtanh.pop %v981
      %v1424 = vtanh.pop %v986
      %v1425 = vtanh.pop %v989
      %v1426 = vtanh.pop %v994
      %v1427 = vtanh.pop %v997
      %v1428 = vtanh.pop %v1002
      %v1429 = vtanh.pop %v1005
      %v1430 = vtanh.pop %v1010
      %v1431 = vtanh.pop %v1013
      %v1432 = vtanh.pop %v1018
      %v1433 = vtanh.pop %v1021
      %v1434 = vtanh.pop %v1026
      %v1435 = vtanh.pop %v1029
      %v1436 = vtanh.pop %v1034
      %v1437 = vtanh.pop %v1037
      %v1438 = vtanh.pop %v1042
      %v1439 = vtanh.pop %v1045
      %v1440 = vtanh.pop %v1050
      %v1441 = vtanh.pop %v1053
      %v1442 = vtanh.pop %v1058
      %v1443 = vtanh.pop %v1061
      %v1444 = vtanh.pop %v1066
      %v1445 = vtanh.pop %v1069
      %v1446 = vtanh.pop %v1074
      %v1447 = vtanh.pop %v1077
      %v1448 = vtanh.pop %v1082
      %v1449 = vtanh.pop %v1085
      %v1450 = vtanh.pop %v1090
      %v1451 = vtanh.pop %v1093
      %v1452 = vtanh.pop %v1098
      %v1453 = vtanh.pop %v1101
      %v1454 = vtanh.pop %v1106
      %v1455 = vtanh.pop %v1109
      %v1456 = vtanh.pop %v1114
      %v1457 = vtanh.pop %v1117
      %v1458 = vtanh.pop %v1122
      %v1459 = vtanh.pop %v1125
      %v1460 = vtanh.pop %v1130
      %v1461 = vtanh.pop %v1133
      %v1462 = vtanh.pop %v1138
      %v1463 = vtanh.pop %v1141
      %v1464 = vtanh.pop %v1146
      %v1465 = vtanh.pop %v1149
      %v1466 = vtanh.pop %v1154
      %v1467 = vtanh.pop %v1157
      %v1468 = vtanh.pop %v1162
      %v1469 = vtanh.pop %v1165
      %v1470 = vtanh.pop %v1170
      %v1471 = vtanh.pop %v1173
      %v1472 = vtanh.pop %v1178
      %v1473 = vtanh.pop %v1181
      %v1474 = vtanh.pop %v1186
      %v1475 = vtanh.pop %v1189
      %v1476 = vtanh.pop %v1194
      %v1477 = vtanh.pop %v1197
      %v1478 = vtanh.pop %v1202
      %v1479 = vtanh.pop %v1205
      %v1480 = vtanh.pop %v1210
      %v1481 = vtanh.pop %v1213
      %v1482 = vtanh.pop %v1218
      %v1483 = vtanh.pop %v1221
      %v1484 = vtanh.pop %v1226
      %v1485 = vtanh.pop %v1229
      %v1486 = vtanh.pop %v1234
      %v1487 = vtanh.pop %v1237
      %v1488 = vtanh.pop %v1242
      %v1489 = vtanh.pop %v1245
      %v1490 = vtanh.pop %v1250
      %v1491 = vtanh.pop %v1253
      %v1492 = vtanh.pop %v1258
      %v1493 = vtanh.pop %v1261
      %v1494 = vtanh.pop %v1266
      %v1495 = vtanh.pop %v1269
      %v1496 = vtanh.pop %v1274
      %v1497 = vtanh.pop %v1277
      %v1498 = vtanh.pop %v1282
      %v1499 = vtanh.pop %v1285
      %v1500 = vtanh.pop %v1290
      %v1501 = vtanh.pop %v1293
      %v1502 = vtanh.pop %v1298
      %v1503 = vtanh.pop %v1301
      %v1504 = vtanh.pop %v1306
      %v1505 = vtanh.pop %v1309
      %v1506 = vtanh.pop %v1314
      %v1507 = vtanh.pop %v1317
      %v1508 = vtanh.pop %v1322
      %v1509 = vtanh.pop %v1325
      %v1510 = vtanh.pop %v1330
      %v1511 = vtanh.pop %v1333
      %v1512 = vtanh.pop %v1338
      %v1513 = vtanh.pop %v1341
      %v1514 = vtanh.pop %v1346
      %v1515 = vtanh.pop %v1349
      %v1516 = vtanh.pop %v1354
      %v1517 = vtanh.pop %v1357
      %v1518 = vtanh.pop %v1362
      %v1519 = vtanh.pop %v1365
      %v1520 = vtanh.pop %v1370
      %v1521 = vtanh.pop %v1373
      %v1522 = vtanh.pop %v1378
      %v1523 = vtanh.pop %v1381
      %v1524 = vtanh.pop %v1386
      %v1525 = vtanh.pop %v1389
      %v1526 = vtanh.pop %v1394
      %v1527 = vtanh.pop %v1397
      %1528 = vst [vmem:[%s172] sm:$0xff] %v1400
      %1529 = vst [vmem:[%s172 + $0x8] sm:$0xff] %v1401
      %1530 = vst [vmem:[%s172 + $0x10] sm:$0xff] %v1402
      %1531 = vst [vmem:[%s172 + $0x18] sm:$0xff] %v1403
      %1532 = vst [vmem:[%s172 + $0x20] sm:$0xff] %v1404
      %1533 = vst [vmem:[%s172 + $0x28] sm:$0xff] %v1405
      %1534 = vst [vmem:[%s172 + $0x30] sm:$0xff] %v1406
      %1535 = vst [vmem:[%s172 + $0x38] sm:$0xff] %v1407
      %1536 = vst [vmem:[%s172 + $0x40] sm:$0xff] %v1408
      %1537 = vst [vmem:[%s172 + $0x48] sm:$0xff] %v1409
      %1538 = vst [vmem:[%s172 + $0x50] sm:$0xff] %v1410
      %1539 = vst [vmem:[%s172 + $0x58] sm:$0xff] %v1411
      %1540 = vst [vmem:[%s172 + $0x60] sm:$0xff] %v1412
      %1541 = vst [vmem:[%s172 + $0x68] sm:$0xff] %v1413
      %1542 = vst [vmem:[%s172 + $0x70] sm:$0xff] %v1414
      %1543 = vst [vmem:[%s172 + $0x78] sm:$0xff] %v1415
      %1544 = vst [vmem:[%s172 + $0x80] sm:$0xff] %v1416
      %1545 = vst [vmem:[%s172 + $0x88] sm:$0xff] %v1417
      %1546 = vst [vmem:[%s172 + $0x90] sm:$0xff] %v1418
      %1547 = vst [vmem:[%s172 + $0x98] sm:$0xff] %v1419
      %1548 = vst [vmem:[%s172 + $0xa0] sm:$0xff] %v1420
      %1549 = vst [vmem:[%s172 + $0xa8] sm:$0xff] %v1421
      %1550 = vst [vmem:[%s172 + $0xb0] sm:$0xff] %v1422
      %1551 = vst [vmem:[%s172 + $0xb8] sm:$0xff] %v1423
      %1552 = vst [vmem:[%s172 + $0xc0] sm:$0xff] %v1424
      %1553 = vst [vmem:[%s172 + $0xc8] sm:$0xff] %v1425
      %1554 = vst [vmem:[%s172 + $0xd0] sm:$0xff] %v1426
      %1555 = vst [vmem:[%s172 + $0xd8] sm:$0xff] %v1427
      %1556 = vst [vmem:[%s172 + $0xe0] sm:$0xff] %v1428
      %1557 = vst [vmem:[%s172 + $0xe8] sm:$0xff] %v1429
      %1558 = vst [vmem:[%s172 + $0xf0] sm:$0xff] %v1430
      %1559 = vst [vmem:[%s172 + $0xf8] sm:$0xff] %v1431
      %1560 = vst [vmem:[%s172 + $0x100] sm:$0xff] %v1432
      %1561 = vst [vmem:[%s172 + $0x108] sm:$0xff] %v1433
      %1562 = vst [vmem:[%s172 + $0x110] sm:$0xff] %v1434
      %1563 = vst [vmem:[%s172 + $0x118] sm:$0xff] %v1435
      %1564 = vst [vmem:[%s172 + $0x120] sm:$0xff] %v1436
      %1565 = vst [vmem:[%s172 + $0x128] sm:$0xff] %v1437
      %1566 = vst [vmem:[%s172 + $0x130] sm:$0xff] %v1438
      %1567 = vst [vmem:[%s172 + $0x138] sm:$0xff] %v1439
      %1568 = vst [vmem:[%s172 + $0x140] sm:$0xff] %v1440
      %1569 = vst [vmem:[%s172 + $0x148] sm:$0xff] %v1441
      %1570 = vst [vmem:[%s172 + $0x150] sm:$0xff] %v1442
      %1571 = vst [vmem:[%s172 + $0x158] sm:$0xff] %v1443
      %1572 = vst [vmem:[%s172 + $0x160] sm:$0xff] %v1444
      %1573 = vst [vmem:[%s172 + $0x168] sm:$0xff] %v1445
      %1574 = vst [vmem:[%s172 + $0x170] sm:$0xff] %v1446
      %1575 = vst [vmem:[%s172 + $0x178] sm:$0xff] %v1447
      %1576 = vst [vmem:[%s172 + $0x180] sm:$0xff] %v1448
      %1577 = vst [vmem:[%s172 + $0x188] sm:$0xff] %v1449
      %1578 = vst [vmem:[%s172 + $0x190] sm:$0xff] %v1450
      %1579 = vst [vmem:[%s172 + $0x198] sm:$0xff] %v1451
      %1580 = vst [vmem:[%s172 + $0x1a0] sm:$0xff] %v1452
      %1581 = vst [vmem:[%s172 + $0x1a8] sm:$0xff] %v1453
      %1582 = vst [vmem:[%s172 + $0x1b0] sm:$0xff] %v1454
      %1583 = vst [vmem:[%s172 + $0x1b8] sm:$0xff] %v1455
      %1584 = vst [vmem:[%s172 + $0x1c0] sm:$0xff] %v1456
      %1585 = vst [vmem:[%s172 + $0x1c8] sm:$0xff] %v1457
      %1586 = vst [vmem:[%s172 + $0x1d0] sm:$0xff] %v1458
      %1587 = vst [vmem:[%s172 + $0x1d8] sm:$0xff] %v1459
      %1588 = vst [vmem:[%s172 + $0x1e0] sm:$0xff] %v1460
      %1589 = vst [vmem:[%s172 + $0x1e8] sm:$0xff] %v1461
      %1590 = vst [vmem:[%s172 + $0x1f0] sm:$0xff] %v1462
      %1591 = vst [vmem:[%s172 + $0x1f8] sm:$0xff] %v1463
      %1592 = vst [vmem:[%s172 + $0x200] sm:$0xff] %v1464
      %1593 = vst [vmem:[%s172 + $0x208] sm:$0xff] %v1465
      %1594 = vst [vmem:[%s172 + $0x210] sm:$0xff] %v1466
      %1595 = vst [vmem:[%s172 + $0x218] sm:$0xff] %v1467
      %1596 = vst [vmem:[%s172 + $0x220] sm:$0xff] %v1468
      %1597 = vst [vmem:[%s172 + $0x228] sm:$0xff] %v1469
      %1598 = vst [vmem:[%s172 + $0x230] sm:$0xff] %v1470
      %1599 = vst [vmem:[%s172 + $0x238] sm:$0xff] %v1471
      %1600 = vst [vmem:[%s172 + $0x240] sm:$0xff] %v1472
      %1601 = vst [vmem:[%s172 + $0x248] sm:$0xff] %v1473
      %1602 = vst [vmem:[%s172 + $0x250] sm:$0xff] %v1474
      %1603 = vst [vmem:[%s172 + $0x258] sm:$0xff] %v1475
      %1604 = vst [vmem:[%s172 + $0x260] sm:$0xff] %v1476
      %1605 = vst [vmem:[%s172 + $0x268] sm:$0xff] %v1477
      %1606 = vst [vmem:[%s172 + $0x270] sm:$0xff] %v1478
      %1607 = vst [vmem:[%s172 + $0x278] sm:$0xff] %v1479
      %1608 = vst [vmem:[%s172 + $0x280] sm:$0xff] %v1480
      %1609 = vst [vmem:[%s172 + $0x288] sm:$0xff] %v1481
      %1610 = vst [vmem:[%s172 + $0x290] sm:$0xff] %v1482
      %1611 = vst [vmem:[%s172 + $0x298] sm:$0xff] %v1483
      %1612 = vst [vmem:[%s172 + $0x2a0] sm:$0xff] %v1484
      %1613 = vst [vmem:[%s172 + $0x2a8] sm:$0xff] %v1485
      %1614 = vst [vmem:[%s172 + $0x2b0] sm:$0xff] %v1486
      %1615 = vst [vmem:[%s172 + $0x2b8] sm:$0xff] %v1487
      %1616 = vst [vmem:[%s172 + $0x2c0] sm:$0xff] %v1488
      %1617 = vst [vmem:[%s172 + $0x2c8] sm:$0xff] %v1489
      %1618 = vst [vmem:[%s172 + $0x2d0] sm:$0xff] %v1490
      %1619 = vst [vmem:[%s172 + $0x2d8] sm:$0xff] %v1491
      %1620 = vst [vmem:[%s172 + $0x2e0] sm:$0xff] %v1492
      %1621 = vst [vmem:[%s172 + $0x2e8] sm:$0xff] %v1493
      %1622 = vst [vmem:[%s172 + $0x2f0] sm:$0xff] %v1494
      %1623 = vst [vmem:[%s172 + $0x2f8] sm:$0xff] %v1495
      %1624 = vst [vmem:[%s172 + $0x300] sm:$0xff] %v1496
      %1625 = vst [vmem:[%s172 + $0x308] sm:$0xff] %v1497
      %1626 = vst [vmem:[%s172 + $0x310] sm:$0xff] %v1498
      %1627 = vst [vmem:[%s172 + $0x318] sm:$0xff] %v1499
      %1628 = vst [vmem:[%s172 + $0x320] sm:$0xff] %v1500
      %1629 = vst [vmem:[%s172 + $0x328] sm:$0xff] %v1501
      %1630 = vst [vmem:[%s172 + $0x330] sm:$0xff] %v1502
      %1631 = vst [vmem:[%s172 + $0x338] sm:$0xff] %v1503
      %1632 = vst [vmem:[%s172 + $0x340] sm:$0xff] %v1504
      %1633 = vst [vmem:[%s172 + $0x348] sm:$0xff] %v1505
      %1634 = vst [vmem:[%s172 + $0x350] sm:$0xff] %v1506
      %1635 = vst [vmem:[%s172 + $0x358] sm:$0xff] %v1507
      %1636 = vst [vmem:[%s172 + $0x360] sm:$0xff] %v1508
      %1637 = vst [vmem:[%s172 + $0x368] sm:$0xff] %v1509
      %1638 = vst [vmem:[%s172 + $0x370] sm:$0xff] %v1510
      %1639 = vst [vmem:[%s172 + $0x378] sm:$0xff] %v1511
      %1640 = vst [vmem:[%s172 + $0x380] sm:$0xff] %v1512
      %1641 = vst [vmem:[%s172 + $0x388] sm:$0xff] %v1513
      %1642 = vst [vmem:[%s172 + $0x390] sm:$0xff] %v1514
      %1643 = vst [vmem:[%s172 + $0x398] sm:$0xff] %v1515
      %1644 = vst [vmem:[%s172 + $0x3a0] sm:$0xff] %v1516
      %1645 = vst [vmem:[%s172 + $0x3a8] sm:$0xff] %v1517
      %1646 = vst [vmem:[%s172 + $0x3b0] sm:$0xff] %v1518
      %1647 = vst [vmem:[%s172 + $0x3b8] sm:$0xff] %v1519
      %1648 = vst [vmem:[%s172 + $0x3c0] sm:$0xff] %v1520
      %1649 = vst [vmem:[%s172 + $0x3c8] sm:$0xff] %v1521
      %1650 = vst [vmem:[%s172 + $0x3d0] sm:$0xff] %v1522
      %1651 = vst [vmem:[%s172 + $0x3d8] sm:$0xff] %v1523
      %1652 = vst [vmem:[%s172 + $0x3e0] sm:$0xff] %v1524
      %1653 = vst [vmem:[%s172 + $0x3e8] sm:$0xff] %v1525
      %1654 = vst [vmem:[%s172 + $0x3f0] sm:$0xff] %v1526
      %1655 = vst [vmem:[%s172 + $0x3f8] sm:$0xff] %v1527
      %s1656 = smul.u32 128, %s14
      %p1657 = scmp.lt.s32.totalorder %s1656, 255
      %s1658 = scalar_select %p1657, %s1656, 255
      %s1659 = smul.addr %s1658, 8
      %s1660 = scalar_lea.vmem %s3, %s1659
      // Predicated region
      $region33: #{_lambda_.36} parent=31 // pred_check
        %p1661 = pneg %p100
      $region34: #{_lambda_.36} parent=31 // pred_check_branch
        %1663 = sbr.rel (%p1661) target = $region36
      $region35: #{_lambda_.36} parent=31 // pred_region
        %s1664 = smul.u32 128, %s14
      $region36: #{_lambda_.36} parent=31 // pred_fallthru
        _
    $region32: #{_lambda_.36} parent=5 // pred_fallthru
      _
    %p1665 = scmp.le.s32.totalorder 2, %s9
    // Predicated region
    $region37: #{_lambda_.36} parent=5 // pred_check
      %p1666 = pneg %p1665
    $region38: #{_lambda_.36} parent=5 // pred_check_branch
      %1668 = sbr.rel (%p1666) target = $region40
    $region39: #{_lambda_.36} parent=5 // pred_region
      %s1669 = ssub.s32 %s9, 2
      // Predicated region
      $region41: #{_lambda_.36} parent=39 // pred_check
        %p1670 = pneg %p106
      $region42: #{_lambda_.36} parent=39 // pred_check_branch
        %1672 = sbr.rel (%p1670) target = $region44
      $region43: #{_lambda_.36} parent=39 // pred_region
        %s1673 = smul.u32 128, %s15
        %p1674 = scmp.lt.s32.totalorder %s1673, 255
        %s1675 = scalar_select %p1674, %s1673, 255
        %s1676 = smul.addr %s1675, 8
        %s1677 = scalar_lea.vmem %s3, %s1676
      $region44: #{_lambda_.36} parent=39 // pred_fallthru
        _
    $region40: #{_lambda_.36} parent=5 // pred_fallthru
      _
  $region6: #{_lambda_.36} parent=0 // loop_footer
    %s13 = sadd.s32 1, %s9
  $region7: #{_lambda_.36} parent=0 // loop_footer_branch
    %8 = sbr.rel target = $region3
  $region8: #{_lambda_.36} parent=0 // loop_exit
    _

</llo_original>
